<compile_context>
chip_gen: v7x
topology: tpu7x:2x2x1
jax: 0.10.0
libtpu: 0.0.40
codegen_flags: <defaults>
</compile_context>

<pallas_src>
import jax
import jax.numpy as jnp
import numpy as np
from jax import lax
from jax.experimental import pallas as pl
from jax.experimental.pallas import tpu as pltpu


def _pair_score_kernel(embs_ref, attens_ref, seq_ref,
                       wh_ent_ref, wh_ctx_ref, wt_ent_ref, wt_ctx_ref,
                       ph_ref, pt_ref, out_ref):
    NQ, E, H = embs_ref.shape
    HE, L = attens_ref.shape[1], attens_ref.shape[2]
    HEADS = HE // E
    CP = ph_ref.shape[1]
    C = out_ref.shape[1]
    Pp = CP // C
    M = NQ * E * E

    # ---- entity projections, computed once on (NQ*E, H) and broadcast into the pair
    # grid afterwards (E x fewer MXU MACs than projecting the broadcast (M, H) tensors).
    embs_flat = embs_ref[...].reshape(NQ * E, H)
    eh = jnp.dot(embs_flat, wh_ent_ref[...], preferred_element_type=jnp.float32)   # (NQ*E, H)
    et = jnp.dot(embs_flat, wt_ent_ref[...], preferred_element_type=jnp.float32)   # (NQ*E, H)

    ctx_parts = []
    hadd_parts = []
    tadd_parts = []
    for q in range(NQ):
        # --- pairwise attention fusion, accumulated per head (no (E,E,HEADS,L) temp) ---
        acc = None
        for h in range(HEADS):
            ah = attens_ref[q, h * E:(h + 1) * E, :]              # (E, L), head-major layout
            prod = ah[:, None, :] * ah[None, :, :]                # (E, E, L)
            acc = prod if acc is None else acc + prod
        acc2 = acc.reshape(E * E, L)                              # row = e_head * E + e_tail
        row_sum = jnp.maximum(jnp.sum(acc2, axis=-1, keepdims=True), 1e-20)   # (E*E, 1)

        # context embedding per pair; the 1/HEADS factor cancels in the normalization,
        # and the normalization is applied to the (E*E, H) result instead of (E*E, L)
        ctx_q = jnp.dot(acc2, seq_ref[q], preferred_element_type=jnp.float32)  # (E*E, H)
        ctx_q = ctx_q * pl.reciprocal(row_sum, approx=True)
        ctx_parts.append(ctx_q)

        # projected entity embeddings broadcast into the pair grid
        #   h_add[i*E+j] = (embs @ W_h_ent)[i],  t_add[i*E+j] = (embs @ W_t_ent)[j]
        eh_q = eh[q * E:(q + 1) * E, :]                           # (E, H), 8-aligned slice
        et_q = et[q * E:(q + 1) * E, :]
        hadd_parts.append(jnp.broadcast_to(eh_q[:, None, :], (E, E, H)).reshape(E * E, H))
        tadd_parts.append(jnp.broadcast_to(et_q[None, :, :], (E, E, H)).reshape(E * E, H))

    ctx = jnp.concatenate(ctx_parts, axis=0)        # (M, H)
    h_add = jnp.concatenate(hadd_parts, axis=0)     # (M, H)
    t_add = jnp.concatenate(tadd_parts, axis=0)     # (M, H)

    # head / tail extractors (bias-free Linear, weights pre-split -> no lane concat) + tanh.
    # dropout_layer is identity at inference. TODO(synk): training-mode dropout not implemented.
    h_all = jnp.tanh(jnp.dot(ctx, wh_ctx_ref[...], preferred_element_type=jnp.float32) + h_add)
    t_all = jnp.tanh(jnp.dot(ctx, wt_ctx_ref[...], preferred_element_type=jnp.float32) + t_add)

    # prototype scoring, transposed: cs_T = P_head @ h_all^T + P_tail @ t_all^T  -> (C*Pp, M)
    # so the per-class max over prototypes is a sublane reduce and the store is lane-dense.
    dn = (((1,), (1,)), ((), ()))
    cs_t = (lax.dot_general(ph_ref[0], h_all, dn, preferred_element_type=jnp.float32)
            + lax.dot_general(pt_ref[0], t_all, dn, preferred_element_type=jnp.float32))
    cs_t = cs_t.reshape(C, Pp, M)
    out_ref[0] = jnp.max(cs_t, axis=1)              # (C, M)


def pair_scores(embs, attens, seq, w_head, w_tail, protos, num_queries_per_batch):
    Q, E, H = embs.shape
    HEADS, L = attens.shape[2], attens.shape[3]
    B, C, P, H2 = protos.shape
    NQ = num_queries_per_batch
    assert Q == B * NQ and H2 == 2 * H
    M = NQ * E * E

    # head-major attention layout: (Q, HEADS*E, L) -> per-head slices are dense 8-aligned tiles
    attens_hm = jnp.transpose(attens, (0, 2, 1, 3)).reshape(Q, HEADS * E, L)

    # split extractor weights (stored (in, out) = Linear.weight.T): entity half / context half
    wh_ent, wh_ctx = w_head[:H], w_head[H:]
    wt_ent, wt_ctx = w_tail[:H], w_tail[H:]

    # pad prototypes-per-class up to a sublane multiple (duplicates leave the max unchanged),
    # then split into head / tail halves flattened to (B, C*Pp, H)
    Pp = ((P + 7) // 8) * 8
    if Pp != P:
        pad = jnp.broadcast_to(protos[:, :, -1:, :], (B, C, Pp - P, H2))
        protos_p = jnp.concatenate([protos, pad], axis=2)
    else:
        protos_p = protos
    protos_h = protos_p[..., :H].reshape(B, C * Pp, H)
    protos_t = protos_p[..., H:].reshape(B, C * Pp, H)

    scores_t = pl.pallas_call(
        _pair_score_kernel,
        out_shape=jax.ShapeDtypeStruct((B, C, M), jnp.float32),
        grid_spec=pltpu.PrefetchScalarGridSpec(
            num_scalar_prefetch=0,
            grid=(B,),                                   # one episode (NQ queries) per step
            in_specs=[
                pl.BlockSpec((NQ, E, H), lambda b: (b, 0, 0)),
                pl.BlockSpec((NQ, HEADS * E, L), lambda b: (b, 0, 0)),
                pl.BlockSpec((NQ, L, H), lambda b: (b, 0, 0)),
                pl.BlockSpec((H, H), lambda b: (0, 0)),
                pl.BlockSpec((H, H), lambda b: (0, 0)),
                pl.BlockSpec((H, H), lambda b: (0, 0)),
                pl.BlockSpec((H, H), lambda b: (0, 0)),
                pl.BlockSpec((1, C * Pp, H), lambda b: (b, 0, 0)),
                pl.BlockSpec((1, C * Pp, H), lambda b: (b, 0, 0)),
            ],
            out_specs=pl.BlockSpec((1, C, M), lambda b: (b, 0, 0)),
        ),
        compiler_params=pltpu.CompilerParams(dimension_semantics=("parallel",)),
    )(embs, attens_hm, seq, wh_ent, wh_ctx, wt_ent, wt_ctx, protos_h, protos_t)

    # (B, C, NQ*E*E) -> (Q, E*E, C)
    return jnp.transpose(scores_t.reshape(B, C, NQ, E * E), (0, 2, 3, 1)).reshape(Q, E * E, C)


def pair_scores_reference(embs, attens, seq, w_head, w_tail, protos, NQ):
    """Pure-JAX reference mirroring the PyTorch loop body."""
    Q, E, H = embs.shape
    B, C, P, H2 = protos.shape
    outs = []
    for q in range(Q):
        a = attens[q]
        mul = jnp.mean(a[:, None] * a[None, :], axis=2)
        mul = mul / jnp.sum(mul, axis=-1, keepdims=True)
        atten_emb = (mul.reshape(E * E, -1) @ seq[q])
        h_ent = jnp.broadcast_to(embs[q][:, None, :], (E, E, H)).reshape(E * E, H)
        t_ent = jnp.broadcast_to(embs[q][None, :, :], (E, E, H)).reshape(E * E, H)
        h_all = jnp.tanh(jnp.concatenate([h_ent, atten_emb], -1) @ w_head)
        t_all = jnp.tanh(jnp.concatenate([t_ent, atten_emb], -1) @ w_tail)
        cand = jnp.concatenate([h_all, t_all], -1)
        pr = protos[q // NQ].reshape(C * P, H2)
        cs = (cand @ pr.T).reshape(E * E, C, P)
        outs.append(jnp.max(cs, axis=-1))
    return jnp.stack(outs)


if __name__ == "__main__":
    # small, module-consistent shapes
    H = 32          # config.hidden_size
    HEADS = 12      # attention.view(..., 12, ...) hard-codes 12 heads
    L = 128         # sequence length
    E = 8           # entities per query
    B = 2           # batch (episodes)
    NQ = 2          # queries per episode
    Q = B * NQ
    C = 5           # relation types per episode (incl. NOTA)
    P = 10          # prototypes per class (support_proto_counts)

    key = jax.random.PRNGKey(0)
    k = jax.random.split(key, 8)

    embs = jax.random.normal(k[0], (Q, E, H), jnp.float32)
    # attention rows are softmax outputs -> strictly positive
    attens = jax.random.uniform(k[1], (Q, E, HEADS, L), jnp.float32, 0.01, 1.0)
    attens = attens / jnp.sum(attens, axis=-1, keepdims=True)
    seq = jax.random.normal(k[2], (Q, L, H), jnp.float32)

    bound = 1.0 / np.sqrt(2 * H)  # nn.Linear default uniform init, stored transposed (in, out)
    w_head = jax.random.uniform(k[3], (2 * H, H), jnp.float32, -bound, bound)
    w_tail = jax.random.uniform(k[4], (2 * H, H), jnp.float32, -bound, bound)
    protos = jax.random.normal(k[5], (B, C, P, 2 * H), jnp.float32) * 0.1

    # TODO(synk): encode() (transformer), set_exemplars prototype construction,
    # ATLoss and the python-loop label/match extraction are host-side and not kernelized.

    scores = pair_scores(embs, attens, seq, w_head, w_tail, protos, NQ)
    scores = jax.block_until_ready(scores)

    ref = pair_scores_reference(embs, attens, seq, w_head, w_tail, protos, NQ)
    np.testing.assert_allclose(np.asarray(scores), np.asarray(ref), rtol=1e-2, atol=1e-2)

    print("KERNEL_OK")
</pallas_src>

<mosaic_0001>
module attributes {stable_mosaic.version = 11 : i64} {
  func.func @_pair_score_kernel(%arg0: i32, %arg1: memref<2x8x32xf32, #tpu.memory_space<vmem>>, %arg2: memref<2x96x128xf32, #tpu.memory_space<vmem>>, %arg3: memref<2x128x32xf32, #tpu.memory_space<vmem>>, %arg4: memref<32x32xf32, #tpu.memory_space<vmem>>, %arg5: memref<32x32xf32, #tpu.memory_space<vmem>>, %arg6: memref<32x32xf32, #tpu.memory_space<vmem>>, %arg7: memref<32x32xf32, #tpu.memory_space<vmem>>, %arg8: memref<1x80x32xf32, #tpu.memory_space<vmem>>, %arg9: memref<1x80x32xf32, #tpu.memory_space<vmem>>, %arg10: memref<1x5x128xf32, #tpu.memory_space<vmem>>) attributes {dimension_semantics = [#tpu.dimension_semantics<parallel>], iteration_bounds = array<i64: 2>, scalar_prefetch = 0 : i64, scratch_operands = 0 : i64, tpu.core_type = #tpu.core_type<tc>, window_params = [{transform_indices = @transform_0, window_bounds = array<i64: 2, 8, 32>}, {transform_indices = @transform_1, window_bounds = array<i64: 2, 96, 128>}, {transform_indices = @transform_2, window_bounds = array<i64: 2, 128, 32>}, {pipeline_mode = #tpu.pipeline_mode<synchronous>, transform_indices = @transform_3, window_bounds = array<i64: 32, 32>}, {pipeline_mode = #tpu.pipeline_mode<synchronous>, transform_indices = @transform_4, window_bounds = array<i64: 32, 32>}, {pipeline_mode = #tpu.pipeline_mode<synchronous>, transform_indices = @transform_5, window_bounds = array<i64: 32, 32>}, {pipeline_mode = #tpu.pipeline_mode<synchronous>, transform_indices = @transform_6, window_bounds = array<i64: 32, 32>}, {transform_indices = @transform_7, window_bounds = array<i64: 1, 80, 32>}, {transform_indices = @transform_8, window_bounds = array<i64: 1, 80, 32>}, {transform_indices = @transform_9, window_bounds = array<i64: 1, 5, 128>}]} {
    %c0 = arith.constant 0 : index
    %c0_0 = arith.constant 0 : index
    %c0_1 = arith.constant 0 : index
    %0 = vector.load %arg1[%c0, %c0_0, %c0_1] : memref<2x8x32xf32, #tpu.memory_space<vmem>>, vector<2x8x32xf32>
    %1 = vector.shape_cast %0 : vector<2x8x32xf32> to vector<16x32xf32>
    %c0_2 = arith.constant 0 : index
    %c0_3 = arith.constant 0 : index
    %2 = vector.load %arg4[%c0_2, %c0_3] : memref<32x32xf32, #tpu.memory_space<vmem>>, vector<32x32xf32>
    %cst = arith.constant dense<0.000000e+00> : vector<16x32xf32>
    %3 = tpu.matmul %1, %2, %cst {dimension_numbers = #tpu.dot_dimension_numbers<[1], [0], [0], [1], [0, 0, 1, 1], [], []>} : vector<16x32xf32>, vector<32x32xf32>, vector<16x32xf32> -> vector<16x32xf32>
    %c0_4 = arith.constant 0 : index
    %c0_5 = arith.constant 0 : index
    %4 = vector.load %arg6[%c0_4, %c0_5] : memref<32x32xf32, #tpu.memory_space<vmem>>, vector<32x32xf32>
    %cst_6 = arith.constant dense<0.000000e+00> : vector<16x32xf32>
    %5 = tpu.matmul %1, %4, %cst_6 {dimension_numbers = #tpu.dot_dimension_numbers<[1], [0], [0], [1], [0, 0, 1, 1], [], []>} : vector<16x32xf32>, vector<32x32xf32>, vector<16x32xf32> -> vector<16x32xf32>
    %c0_7 = arith.constant 0 : index
    %c0_8 = arith.constant 0 : index
    %c0_9 = arith.constant 0 : index
    %6 = vector.load %arg2[%c0_7, %c0_8, %c0_9] : memref<2x96x128xf32, #tpu.memory_space<vmem>>, vector<1x8x128xf32>
    %7 = vector.shape_cast %6 : vector<1x8x128xf32> to vector<8x128xf32>
    %8 = vector.shape_cast %7 : vector<8x128xf32> to vector<8x1x128xf32>
    %9 = vector.shape_cast %7 : vector<8x128xf32> to vector<1x8x128xf32>
    %10 = vector.broadcast %8 : vector<8x1x128xf32> to vector<8x8x128xf32>
    %11 = vector.broadcast %9 : vector<1x8x128xf32> to vector<8x8x128xf32>
    %12 = arith.mulf %10, %11 : vector<8x8x128xf32>
    %c0_10 = arith.constant 0 : index
    %c8 = arith.constant 8 : index
    %c0_11 = arith.constant 0 : index
    %13 = vector.load %arg2[%c0_10, %c8, %c0_11] : memref<2x96x128xf32, #tpu.memory_space<vmem>>, vector<1x8x128xf32>
    %14 = vector.shape_cast %13 : vector<1x8x128xf32> to vector<8x128xf32>
    %15 = vector.shape_cast %14 : vector<8x128xf32> to vector<8x1x128xf32>
    %16 = vector.shape_cast %14 : vector<8x128xf32> to vector<1x8x128xf32>
    %17 = vector.broadcast %15 : vector<8x1x128xf32> to vector<8x8x128xf32>
    %18 = vector.broadcast %16 : vector<1x8x128xf32> to vector<8x8x128xf32>
    %19 = arith.mulf %17, %18 : vector<8x8x128xf32>
    %20 = arith.addf %12, %19 : vector<8x8x128xf32>
    %c0_12 = arith.constant 0 : index
    %c16 = arith.constant 16 : index
    %c0_13 = arith.constant 0 : index
    %21 = vector.load %arg2[%c0_12, %c16, %c0_13] : memref<2x96x128xf32, #tpu.memory_space<vmem>>, vector<1x8x128xf32>
    %22 = vector.shape_cast %21 : vector<1x8x128xf32> to vector<8x128xf32>
    %23 = vector.shape_cast %22 : vector<8x128xf32> to vector<8x1x128xf32>
    %24 = vector.shape_cast %22 : vector<8x128xf32> to vector<1x8x128xf32>
    %25 = vector.broadcast %23 : vector<8x1x128xf32> to vector<8x8x128xf32>
    %26 = vector.broadcast %24 : vector<1x8x128xf32> to vector<8x8x128xf32>
    %27 = arith.mulf %25, %26 : vector<8x8x128xf32>
    %28 = arith.addf %20, %27 : vector<8x8x128xf32>
    %c0_14 = arith.constant 0 : index
    %c24 = arith.constant 24 : index
    %c0_15 = arith.constant 0 : index
    %29 = vector.load %arg2[%c0_14, %c24, %c0_15] : memref<2x96x128xf32, #tpu.memory_space<vmem>>, vector<1x8x128xf32>
    %30 = vector.shape_cast %29 : vector<1x8x128xf32> to vector<8x128xf32>
    %31 = vector.shape_cast %30 : vector<8x128xf32> to vector<8x1x128xf32>
    %32 = vector.shape_cast %30 : vector<8x128xf32> to vector<1x8x128xf32>
    %33 = vector.broadcast %31 : vector<8x1x128xf32> to vector<8x8x128xf32>
    %34 = vector.broadcast %32 : vector<1x8x128xf32> to vector<8x8x128xf32>
    %35 = arith.mulf %33, %34 : vector<8x8x128xf32>
    %36 = arith.addf %28, %35 : vector<8x8x128xf32>
    %c0_16 = arith.constant 0 : index
    %c32 = arith.constant 32 : index
    %c0_17 = arith.constant 0 : index
    %37 = vector.load %arg2[%c0_16, %c32, %c0_17] : memref<2x96x128xf32, #tpu.memory_space<vmem>>, vector<1x8x128xf32>
    %38 = vector.shape_cast %37 : vector<1x8x128xf32> to vector<8x128xf32>
    %39 = vector.shape_cast %38 : vector<8x128xf32> to vector<8x1x128xf32>
    %40 = vector.shape_cast %38 : vector<8x128xf32> to vector<1x8x128xf32>
    %41 = vector.broadcast %39 : vector<8x1x128xf32> to vector<8x8x128xf32>
    %42 = vector.broadcast %40 : vector<1x8x128xf32> to vector<8x8x128xf32>
    %43 = arith.mulf %41, %42 : vector<8x8x128xf32>
    %44 = arith.addf %36, %43 : vector<8x8x128xf32>
    %c0_18 = arith.constant 0 : index
    %c40 = arith.constant 40 : index
    %c0_19 = arith.constant 0 : index
    %45 = vector.load %arg2[%c0_18, %c40, %c0_19] : memref<2x96x128xf32, #tpu.memory_space<vmem>>, vector<1x8x128xf32>
    %46 = vector.shape_cast %45 : vector<1x8x128xf32> to vector<8x128xf32>
    %47 = vector.shape_cast %46 : vector<8x128xf32> to vector<8x1x128xf32>
    %48 = vector.shape_cast %46 : vector<8x128xf32> to vector<1x8x128xf32>
    %49 = vector.broadcast %47 : vector<8x1x128xf32> to vector<8x8x128xf32>
    %50 = vector.broadcast %48 : vector<1x8x128xf32> to vector<8x8x128xf32>
    %51 = arith.mulf %49, %50 : vector<8x8x128xf32>
    %52 = arith.addf %44, %51 : vector<8x8x128xf32>
    %c0_20 = arith.constant 0 : index
    %c48 = arith.constant 48 : index
    %c0_21 = arith.constant 0 : index
    %53 = vector.load %arg2[%c0_20, %c48, %c0_21] : memref<2x96x128xf32, #tpu.memory_space<vmem>>, vector<1x8x128xf32>
    %54 = vector.shape_cast %53 : vector<1x8x128xf32> to vector<8x128xf32>
    %55 = vector.shape_cast %54 : vector<8x128xf32> to vector<8x1x128xf32>
    %56 = vector.shape_cast %54 : vector<8x128xf32> to vector<1x8x128xf32>
    %57 = vector.broadcast %55 : vector<8x1x128xf32> to vector<8x8x128xf32>
    %58 = vector.broadcast %56 : vector<1x8x128xf32> to vector<8x8x128xf32>
    %59 = arith.mulf %57, %58 : vector<8x8x128xf32>
    %60 = arith.addf %52, %59 : vector<8x8x128xf32>
    %c0_22 = arith.constant 0 : index
    %c56 = arith.constant 56 : index
    %c0_23 = arith.constant 0 : index
    %61 = vector.load %arg2[%c0_22, %c56, %c0_23] : memref<2x96x128xf32, #tpu.memory_space<vmem>>, vector<1x8x128xf32>
    %62 = vector.shape_cast %61 : vector<1x8x128xf32> to vector<8x128xf32>
    %63 = vector.shape_cast %62 : vector<8x128xf32> to vector<8x1x128xf32>
    %64 = vector.shape_cast %62 : vector<8x128xf32> to vector<1x8x128xf32>
    %65 = vector.broadcast %63 : vector<8x1x128xf32> to vector<8x8x128xf32>
    %66 = vector.broadcast %64 : vector<1x8x128xf32> to vector<8x8x128xf32>
    %67 = arith.mulf %65, %66 : vector<8x8x128xf32>
    %68 = arith.addf %60, %67 : vector<8x8x128xf32>
    %c0_24 = arith.constant 0 : index
    %c64 = arith.constant 64 : index
    %c0_25 = arith.constant 0 : index
    %69 = vector.load %arg2[%c0_24, %c64, %c0_25] : memref<2x96x128xf32, #tpu.memory_space<vmem>>, vector<1x8x128xf32>
    %70 = vector.shape_cast %69 : vector<1x8x128xf32> to vector<8x128xf32>
    %71 = vector.shape_cast %70 : vector<8x128xf32> to vector<8x1x128xf32>
    %72 = vector.shape_cast %70 : vector<8x128xf32> to vector<1x8x128xf32>
    %73 = vector.broadcast %71 : vector<8x1x128xf32> to vector<8x8x128xf32>
    %74 = vector.broadcast %72 : vector<1x8x128xf32> to vector<8x8x128xf32>
    %75 = arith.mulf %73, %74 : vector<8x8x128xf32>
    %76 = arith.addf %68, %75 : vector<8x8x128xf32>
    %c0_26 = arith.constant 0 : index
    %c72 = arith.constant 72 : index
    %c0_27 = arith.constant 0 : index
    %77 = vector.load %arg2[%c0_26, %c72, %c0_27] : memref<2x96x128xf32, #tpu.memory_space<vmem>>, vector<1x8x128xf32>
    %78 = vector.shape_cast %77 : vector<1x8x128xf32> to vector<8x128xf32>
    %79 = vector.shape_cast %78 : vector<8x128xf32> to vector<8x1x128xf32>
    %80 = vector.shape_cast %78 : vector<8x128xf32> to vector<1x8x128xf32>
    %81 = vector.broadcast %79 : vector<8x1x128xf32> to vector<8x8x128xf32>
    %82 = vector.broadcast %80 : vector<1x8x128xf32> to vector<8x8x128xf32>
    %83 = arith.mulf %81, %82 : vector<8x8x128xf32>
    %84 = arith.addf %76, %83 : vector<8x8x128xf32>
    %c0_28 = arith.constant 0 : index
    %c80 = arith.constant 80 : index
    %c0_29 = arith.constant 0 : index
    %85 = vector.load %arg2[%c0_28, %c80, %c0_29] : memref<2x96x128xf32, #tpu.memory_space<vmem>>, vector<1x8x128xf32>
    %86 = vector.shape_cast %85 : vector<1x8x128xf32> to vector<8x128xf32>
    %87 = vector.shape_cast %86 : vector<8x128xf32> to vector<8x1x128xf32>
    %88 = vector.shape_cast %86 : vector<8x128xf32> to vector<1x8x128xf32>
    %89 = vector.broadcast %87 : vector<8x1x128xf32> to vector<8x8x128xf32>
    %90 = vector.broadcast %88 : vector<1x8x128xf32> to vector<8x8x128xf32>
    %91 = arith.mulf %89, %90 : vector<8x8x128xf32>
    %92 = arith.addf %84, %91 : vector<8x8x128xf32>
    %c0_30 = arith.constant 0 : index
    %c88 = arith.constant 88 : index
    %c0_31 = arith.constant 0 : index
    %93 = vector.load %arg2[%c0_30, %c88, %c0_31] : memref<2x96x128xf32, #tpu.memory_space<vmem>>, vector<1x8x128xf32>
    %94 = vector.shape_cast %93 : vector<1x8x128xf32> to vector<8x128xf32>
    %95 = vector.shape_cast %94 : vector<8x128xf32> to vector<8x1x128xf32>
    %96 = vector.shape_cast %94 : vector<8x128xf32> to vector<1x8x128xf32>
    %97 = vector.broadcast %95 : vector<8x1x128xf32> to vector<8x8x128xf32>
    %98 = vector.broadcast %96 : vector<1x8x128xf32> to vector<8x8x128xf32>
    %99 = arith.mulf %97, %98 : vector<8x8x128xf32>
    %100 = arith.addf %92, %99 : vector<8x8x128xf32>
    %101 = vector.shape_cast %100 : vector<8x8x128xf32> to vector<64x128xf32>
    %cst_32 = arith.constant dense<0.000000e+00> : vector<64xf32>
    %102 = vector.multi_reduction <add>, %101, %cst_32 [1] : vector<64x128xf32> to vector<64xf32>
    %103 = vector.shape_cast %102 : vector<64xf32> to vector<64x1xf32>
    %cst_33 = arith.constant 9.99999968E-21 : f32
    %104 = vector.broadcast %cst_33 : f32 to vector<64x1xf32>
    %105 = arith.maximumf %103, %104 : vector<64x1xf32>
    %c0_34 = arith.constant 0 : index
    %c0_35 = arith.constant 0 : index
    %c0_36 = arith.constant 0 : index
    %106 = vector.load %arg3[%c0_34, %c0_35, %c0_36] : memref<2x128x32xf32, #tpu.memory_space<vmem>>, vector<1x128x32xf32>
    %107 = vector.shape_cast %106 : vector<1x128x32xf32> to vector<128x32xf32>
    %cst_37 = arith.constant dense<0.000000e+00> : vector<64x32xf32>
    %108 = tpu.matmul %101, %107, %cst_37 {dimension_numbers = #tpu.dot_dimension_numbers<[1], [0], [0], [1], [0, 0, 1, 1], [], []>} : vector<64x128xf32>, vector<128x32xf32>, vector<64x32xf32> -> vector<64x32xf32>
    %109 = tpu.reciprocal %105 {approx = true} : vector<64x1xf32> -> vector<64x1xf32>
    %110 = vector.broadcast %109 : vector<64x1xf32> to vector<64x32xf32>
    %111 = arith.mulf %108, %110 : vector<64x32xf32>
    %112 = vector.extract_strided_slice %3 {offsets = [0, 0], sizes = [8, 32], strides = [1, 1]} : vector<16x32xf32> to vector<8x32xf32>
    %113 = vector.extract_strided_slice %5 {offsets = [0, 0], sizes = [8, 32], strides = [1, 1]} : vector<16x32xf32> to vector<8x32xf32>
    %114 = vector.shape_cast %112 : vector<8x32xf32> to vector<8x1x32xf32>
    %115 = vector.shape_cast %114 : vector<8x1x32xf32> to vector<8x1x32xf32>
    %116 = vector.broadcast %115 : vector<8x1x32xf32> to vector<8x8x32xf32>
    %117 = vector.shape_cast %116 : vector<8x8x32xf32> to vector<64x32xf32>
    %118 = vector.shape_cast %113 : vector<8x32xf32> to vector<1x8x32xf32>
    %119 = vector.shape_cast %118 : vector<1x8x32xf32> to vector<1x8x32xf32>
    %120 = vector.broadcast %119 : vector<1x8x32xf32> to vector<8x8x32xf32>
    %121 = vector.shape_cast %120 : vector<8x8x32xf32> to vector<64x32xf32>
    %c1 = arith.constant 1 : index
    %c0_38 = arith.constant 0 : index
    %c0_39 = arith.constant 0 : index
    %122 = vector.load %arg2[%c1, %c0_38, %c0_39] : memref<2x96x128xf32, #tpu.memory_space<vmem>>, vector<1x8x128xf32>
    %123 = vector.shape_cast %122 : vector<1x8x128xf32> to vector<8x128xf32>
    %124 = vector.shape_cast %123 : vector<8x128xf32> to vector<8x1x128xf32>
    %125 = vector.shape_cast %123 : vector<8x128xf32> to vector<1x8x128xf32>
    %126 = vector.broadcast %124 : vector<8x1x128xf32> to vector<8x8x128xf32>
    %127 = vector.broadcast %125 : vector<1x8x128xf32> to vector<8x8x128xf32>
    %128 = arith.mulf %126, %127 : vector<8x8x128xf32>
    %c1_40 = arith.constant 1 : index
    %c8_41 = arith.constant 8 : index
    %c0_42 = arith.constant 0 : index
    %129 = vector.load %arg2[%c1_40, %c8_41, %c0_42] : memref<2x96x128xf32, #tpu.memory_space<vmem>>, vector<1x8x128xf32>
    %130 = vector.shape_cast %129 : vector<1x8x128xf32> to vector<8x128xf32>
    %131 = vector.shape_cast %130 : vector<8x128xf32> to vector<8x1x128xf32>
    %132 = vector.shape_cast %130 : vector<8x128xf32> to vector<1x8x128xf32>
    %133 = vector.broadcast %131 : vector<8x1x128xf32> to vector<8x8x128xf32>
    %134 = vector.broadcast %132 : vector<1x8x128xf32> to vector<8x8x128xf32>
    %135 = arith.mulf %133, %134 : vector<8x8x128xf32>
    %136 = arith.addf %128, %135 : vector<8x8x128xf32>
    %c1_43 = arith.constant 1 : index
    %c16_44 = arith.constant 16 : index
    %c0_45 = arith.constant 0 : index
    %137 = vector.load %arg2[%c1_43, %c16_44, %c0_45] : memref<2x96x128xf32, #tpu.memory_space<vmem>>, vector<1x8x128xf32>
    %138 = vector.shape_cast %137 : vector<1x8x128xf32> to vector<8x128xf32>
    %139 = vector.shape_cast %138 : vector<8x128xf32> to vector<8x1x128xf32>
    %140 = vector.shape_cast %138 : vector<8x128xf32> to vector<1x8x128xf32>
    %141 = vector.broadcast %139 : vector<8x1x128xf32> to vector<8x8x128xf32>
    %142 = vector.broadcast %140 : vector<1x8x128xf32> to vector<8x8x128xf32>
    %143 = arith.mulf %141, %142 : vector<8x8x128xf32>
    %144 = arith.addf %136, %143 : vector<8x8x128xf32>
    %c1_46 = arith.constant 1 : index
    %c24_47 = arith.constant 24 : index
    %c0_48 = arith.constant 0 : index
    %145 = vector.load %arg2[%c1_46, %c24_47, %c0_48] : memref<2x96x128xf32, #tpu.memory_space<vmem>>, vector<1x8x128xf32>
    %146 = vector.shape_cast %145 : vector<1x8x128xf32> to vector<8x128xf32>
    %147 = vector.shape_cast %146 : vector<8x128xf32> to vector<8x1x128xf32>
    %148 = vector.shape_cast %146 : vector<8x128xf32> to vector<1x8x128xf32>
    %149 = vector.broadcast %147 : vector<8x1x128xf32> to vector<8x8x128xf32>
    %150 = vector.broadcast %148 : vector<1x8x128xf32> to vector<8x8x128xf32>
    %151 = arith.mulf %149, %150 : vector<8x8x128xf32>
    %152 = arith.addf %144, %151 : vector<8x8x128xf32>
    %c1_49 = arith.constant 1 : index
    %c32_50 = arith.constant 32 : index
    %c0_51 = arith.constant 0 : index
    %153 = vector.load %arg2[%c1_49, %c32_50, %c0_51] : memref<2x96x128xf32, #tpu.memory_space<vmem>>, vector<1x8x128xf32>
    %154 = vector.shape_cast %153 : vector<1x8x128xf32> to vector<8x128xf32>
    %155 = vector.shape_cast %154 : vector<8x128xf32> to vector<8x1x128xf32>
    %156 = vector.shape_cast %154 : vector<8x128xf32> to vector<1x8x128xf32>
    %157 = vector.broadcast %155 : vector<8x1x128xf32> to vector<8x8x128xf32>
    %158 = vector.broadcast %156 : vector<1x8x128xf32> to vector<8x8x128xf32>
    %159 = arith.mulf %157, %158 : vector<8x8x128xf32>
    %160 = arith.addf %152, %159 : vector<8x8x128xf32>
    %c1_52 = arith.constant 1 : index
    %c40_53 = arith.constant 40 : index
    %c0_54 = arith.constant 0 : index
    %161 = vector.load %arg2[%c1_52, %c40_53, %c0_54] : memref<2x96x128xf32, #tpu.memory_space<vmem>>, vector<1x8x128xf32>
    %162 = vector.shape_cast %161 : vector<1x8x128xf32> to vector<8x128xf32>
    %163 = vector.shape_cast %162 : vector<8x128xf32> to vector<8x1x128xf32>
    %164 = vector.shape_cast %162 : vector<8x128xf32> to vector<1x8x128xf32>
    %165 = vector.broadcast %163 : vector<8x1x128xf32> to vector<8x8x128xf32>
    %166 = vector.broadcast %164 : vector<1x8x128xf32> to vector<8x8x128xf32>
    %167 = arith.mulf %165, %166 : vector<8x8x128xf32>
    %168 = arith.addf %160, %167 : vector<8x8x128xf32>
    %c1_55 = arith.constant 1 : index
    %c48_56 = arith.constant 48 : index
    %c0_57 = arith.constant 0 : index
    %169 = vector.load %arg2[%c1_55, %c48_56, %c0_57] : memref<2x96x128xf32, #tpu.memory_space<vmem>>, vector<1x8x128xf32>
    %170 = vector.shape_cast %169 : vector<1x8x128xf32> to vector<8x128xf32>
    %171 = vector.shape_cast %170 : vector<8x128xf32> to vector<8x1x128xf32>
    %172 = vector.shape_cast %170 : vector<8x128xf32> to vector<1x8x128xf32>
    %173 = vector.broadcast %171 : vector<8x1x128xf32> to vector<8x8x128xf32>
    %174 = vector.broadcast %172 : vector<1x8x128xf32> to vector<8x8x128xf32>
    %175 = arith.mulf %173, %174 : vector<8x8x128xf32>
    %176 = arith.addf %168, %175 : vector<8x8x128xf32>
    %c1_58 = arith.constant 1 : index
    %c56_59 = arith.constant 56 : index
    %c0_60 = arith.constant 0 : index
    %177 = vector.load %arg2[%c1_58, %c56_59, %c0_60] : memref<2x96x128xf32, #tpu.memory_space<vmem>>, vector<1x8x128xf32>
    %178 = vector.shape_cast %177 : vector<1x8x128xf32> to vector<8x128xf32>
    %179 = vector.shape_cast %178 : vector<8x128xf32> to vector<8x1x128xf32>
    %180 = vector.shape_cast %178 : vector<8x128xf32> to vector<1x8x128xf32>
    %181 = vector.broadcast %179 : vector<8x1x128xf32> to vector<8x8x128xf32>
    %182 = vector.broadcast %180 : vector<1x8x128xf32> to vector<8x8x128xf32>
    %183 = arith.mulf %181, %182 : vector<8x8x128xf32>
    %184 = arith.addf %176, %183 : vector<8x8x128xf32>
    %c1_61 = arith.constant 1 : index
    %c64_62 = arith.constant 64 : index
    %c0_63 = arith.constant 0 : index
    %185 = vector.load %arg2[%c1_61, %c64_62, %c0_63] : memref<2x96x128xf32, #tpu.memory_space<vmem>>, vector<1x8x128xf32>
    %186 = vector.shape_cast %185 : vector<1x8x128xf32> to vector<8x128xf32>
    %187 = vector.shape_cast %186 : vector<8x128xf32> to vector<8x1x128xf32>
    %188 = vector.shape_cast %186 : vector<8x128xf32> to vector<1x8x128xf32>
    %189 = vector.broadcast %187 : vector<8x1x128xf32> to vector<8x8x128xf32>
    %190 = vector.broadcast %188 : vector<1x8x128xf32> to vector<8x8x128xf32>
    %191 = arith.mulf %189, %190 : vector<8x8x128xf32>
    %192 = arith.addf %184, %191 : vector<8x8x128xf32>
    %c1_64 = arith.constant 1 : index
    %c72_65 = arith.constant 72 : index
    %c0_66 = arith.constant 0 : index
    %193 = vector.load %arg2[%c1_64, %c72_65, %c0_66] : memref<2x96x128xf32, #tpu.memory_space<vmem>>, vector<1x8x128xf32>
    %194 = vector.shape_cast %193 : vector<1x8x128xf32> to vector<8x128xf32>
    %195 = vector.shape_cast %194 : vector<8x128xf32> to vector<8x1x128xf32>
    %196 = vector.shape_cast %194 : vector<8x128xf32> to vector<1x8x128xf32>
    %197 = vector.broadcast %195 : vector<8x1x128xf32> to vector<8x8x128xf32>
    %198 = vector.broadcast %196 : vector<1x8x128xf32> to vector<8x8x128xf32>
    %199 = arith.mulf %197, %198 : vector<8x8x128xf32>
    %200 = arith.addf %192, %199 : vector<8x8x128xf32>
    %c1_67 = arith.constant 1 : index
    %c80_68 = arith.constant 80 : index
    %c0_69 = arith.constant 0 : index
    %201 = vector.load %arg2[%c1_67, %c80_68, %c0_69] : memref<2x96x128xf32, #tpu.memory_space<vmem>>, vector<1x8x128xf32>
    %202 = vector.shape_cast %201 : vector<1x8x128xf32> to vector<8x128xf32>
    %203 = vector.shape_cast %202 : vector<8x128xf32> to vector<8x1x128xf32>
    %204 = vector.shape_cast %202 : vector<8x128xf32> to vector<1x8x128xf32>
    %205 = vector.broadcast %203 : vector<8x1x128xf32> to vector<8x8x128xf32>
    %206 = vector.broadcast %204 : vector<1x8x128xf32> to vector<8x8x128xf32>
    %207 = arith.mulf %205, %206 : vector<8x8x128xf32>
    %208 = arith.addf %200, %207 : vector<8x8x128xf32>
    %c1_70 = arith.constant 1 : index
    %c88_71 = arith.constant 88 : index
    %c0_72 = arith.constant 0 : index
    %209 = vector.load %arg2[%c1_70, %c88_71, %c0_72] : memref<2x96x128xf32, #tpu.memory_space<vmem>>, vector<1x8x128xf32>
    %210 = vector.shape_cast %209 : vector<1x8x128xf32> to vector<8x128xf32>
    %211 = vector.shape_cast %210 : vector<8x128xf32> to vector<8x1x128xf32>
    %212 = vector.shape_cast %210 : vector<8x128xf32> to vector<1x8x128xf32>
    %213 = vector.broadcast %211 : vector<8x1x128xf32> to vector<8x8x128xf32>
    %214 = vector.broadcast %212 : vector<1x8x128xf32> to vector<8x8x128xf32>
    %215 = arith.mulf %213, %214 : vector<8x8x128xf32>
    %216 = arith.addf %208, %215 : vector<8x8x128xf32>
    %217 = vector.shape_cast %216 : vector<8x8x128xf32> to vector<64x128xf32>
    %cst_73 = arith.constant dense<0.000000e+00> : vector<64xf32>
    %218 = vector.multi_reduction <add>, %217, %cst_73 [1] : vector<64x128xf32> to vector<64xf32>
    %219 = vector.shape_cast %218 : vector<64xf32> to vector<64x1xf32>
    %cst_74 = arith.constant 9.99999968E-21 : f32
    %220 = vector.broadcast %cst_74 : f32 to vector<64x1xf32>
    %221 = arith.maximumf %219, %220 : vector<64x1xf32>
    %c1_75 = arith.constant 1 : index
    %c0_76 = arith.constant 0 : index
    %c0_77 = arith.constant 0 : index
    %222 = vector.load %arg3[%c1_75, %c0_76, %c0_77] : memref<2x128x32xf32, #tpu.memory_space<vmem>>, vector<1x128x32xf32>
    %223 = vector.shape_cast %222 : vector<1x128x32xf32> to vector<128x32xf32>
    %cst_78 = arith.constant dense<0.000000e+00> : vector<64x32xf32>
    %224 = tpu.matmul %217, %223, %cst_78 {dimension_numbers = #tpu.dot_dimension_numbers<[1], [0], [0], [1], [0, 0, 1, 1], [], []>} : vector<64x128xf32>, vector<128x32xf32>, vector<64x32xf32> -> vector<64x32xf32>
    %225 = tpu.reciprocal %221 {approx = true} : vector<64x1xf32> -> vector<64x1xf32>
    %226 = vector.broadcast %225 : vector<64x1xf32> to vector<64x32xf32>
    %227 = arith.mulf %224, %226 : vector<64x32xf32>
    %228 = vector.extract_strided_slice %3 {offsets = [8, 0], sizes = [8, 32], strides = [1, 1]} : vector<16x32xf32> to vector<8x32xf32>
    %229 = vector.extract_strided_slice %5 {offsets = [8, 0], sizes = [8, 32], strides = [1, 1]} : vector<16x32xf32> to vector<8x32xf32>
    %230 = vector.shape_cast %228 : vector<8x32xf32> to vector<8x1x32xf32>
    %231 = vector.shape_cast %230 : vector<8x1x32xf32> to vector<8x1x32xf32>
    %232 = vector.broadcast %231 : vector<8x1x32xf32> to vector<8x8x32xf32>
    %233 = vector.shape_cast %232 : vector<8x8x32xf32> to vector<64x32xf32>
    %234 = vector.shape_cast %229 : vector<8x32xf32> to vector<1x8x32xf32>
    %235 = vector.shape_cast %234 : vector<1x8x32xf32> to vector<1x8x32xf32>
    %236 = vector.broadcast %235 : vector<1x8x32xf32> to vector<8x8x32xf32>
    %237 = vector.shape_cast %236 : vector<8x8x32xf32> to vector<64x32xf32>
    %238 = tpu.concatenate %111, %227 in 0 : vector<64x32xf32>, vector<64x32xf32> -> vector<128x32xf32>
    %239 = tpu.concatenate %117, %233 in 0 : vector<64x32xf32>, vector<64x32xf32> -> vector<128x32xf32>
    %240 = tpu.concatenate %121, %237 in 0 : vector<64x32xf32>, vector<64x32xf32> -> vector<128x32xf32>
    %c0_79 = arith.constant 0 : index
    %c0_80 = arith.constant 0 : index
    %241 = vector.load %arg5[%c0_79, %c0_80] : memref<32x32xf32, #tpu.memory_space<vmem>>, vector<32x32xf32>
    %cst_81 = arith.constant dense<0.000000e+00> : vector<128x32xf32>
    %242 = tpu.matmul %238, %241, %cst_81 {dimension_numbers = #tpu.dot_dimension_numbers<[1], [0], [0], [1], [0, 0, 1, 1], [], []>} : vector<128x32xf32>, vector<32x32xf32>, vector<128x32xf32> -> vector<128x32xf32>
    %243 = arith.addf %242, %239 : vector<128x32xf32>
    %244 = math.tanh %243 : vector<128x32xf32>
    %c0_82 = arith.constant 0 : index
    %c0_83 = arith.constant 0 : index
    %245 = vector.load %arg7[%c0_82, %c0_83] : memref<32x32xf32, #tpu.memory_space<vmem>>, vector<32x32xf32>
    %cst_84 = arith.constant dense<0.000000e+00> : vector<128x32xf32>
    %246 = tpu.matmul %238, %245, %cst_84 {dimension_numbers = #tpu.dot_dimension_numbers<[1], [0], [0], [1], [0, 0, 1, 1], [], []>} : vector<128x32xf32>, vector<32x32xf32>, vector<128x32xf32> -> vector<128x32xf32>
    %247 = arith.addf %246, %240 : vector<128x32xf32>
    %248 = math.tanh %247 : vector<128x32xf32>
    %c0_85 = arith.constant 0 : index
    %c0_86 = arith.constant 0 : index
    %c0_87 = arith.constant 0 : index
    %249 = vector.load %arg8[%c0_85, %c0_86, %c0_87] : memref<1x80x32xf32, #tpu.memory_space<vmem>>, vector<1x80x32xf32>
    %250 = vector.shape_cast %249 : vector<1x80x32xf32> to vector<80x32xf32>
    %cst_88 = arith.constant dense<0.000000e+00> : vector<80x128xf32>
    %251 = tpu.matmul %250, %244, %cst_88 {dimension_numbers = #tpu.dot_dimension_numbers<[1], [1], [0], [0], [0, 0, 1, 0], [], []>} : vector<80x32xf32>, vector<128x32xf32>, vector<80x128xf32> -> vector<80x128xf32>
    %c0_89 = arith.constant 0 : index
    %c0_90 = arith.constant 0 : index
    %c0_91 = arith.constant 0 : index
    %252 = vector.load %arg9[%c0_89, %c0_90, %c0_91] : memref<1x80x32xf32, #tpu.memory_space<vmem>>, vector<1x80x32xf32>
    %253 = vector.shape_cast %252 : vector<1x80x32xf32> to vector<80x32xf32>
    %cst_92 = arith.constant dense<0.000000e+00> : vector<80x128xf32>
    %254 = tpu.matmul %253, %248, %cst_92 {dimension_numbers = #tpu.dot_dimension_numbers<[1], [1], [0], [0], [0, 0, 1, 0], [], []>} : vector<80x32xf32>, vector<128x32xf32>, vector<80x128xf32> -> vector<80x128xf32>
    %255 = arith.addf %251, %254 : vector<80x128xf32>
    %256 = vector.shape_cast %255 : vector<80x128xf32> to vector<5x16x128xf32>
    %cst_93 = arith.constant dense<0xFF800000> : vector<5x128xf32>
    %257 = vector.multi_reduction <maximumf>, %256, %cst_93 [1] : vector<5x16x128xf32> to vector<5x128xf32>
    %c0_94 = arith.constant 0 : index
    %c0_95 = arith.constant 0 : index
    %c0_96 = arith.constant 0 : index
    %258 = vector.load %arg10[%c0_94, %c0_95, %c0_96] : memref<1x5x128xf32, #tpu.memory_space<vmem>>, vector<1x5x128xf32>
    %259 = vector.shape_cast %258 : vector<1x5x128xf32> to vector<5x128xf32>
    %260 = vector.shape_cast %257 : vector<5x128xf32> to vector<1x5x128xf32>
    tpu.vector_store %arg10[%c0_94, %c0_95, %c0_96], %260 {strides = array<i32>} : memref<1x5x128xf32, #tpu.memory_space<vmem>>, vector<1x5x128xf32>,
    return
  }
  func.func @transform_0(%arg0: i32) -> (i32, i32, i32) {
    %c0_i32 = arith.constant 0 : i32
    %c0_i32_0 = arith.constant 0 : i32
    %c0_i32_1 = arith.constant 0 : i32
    return %arg0, %c0_i32, %c0_i32_0 : i32, i32, i32
  }
  func.func @transform_1(%arg0: i32) -> (i32, i32, i32) {
    %c0_i32 = arith.constant 0 : i32
    %c0_i32_0 = arith.constant 0 : i32
    %c0_i32_1 = arith.constant 0 : i32
    return %arg0, %c0_i32, %c0_i32_0 : i32, i32, i32
  }
  func.func @transform_2(%arg0: i32) -> (i32, i32, i32) {
    %c0_i32 = arith.constant 0 : i32
    %c0_i32_0 = arith.constant 0 : i32
    %c0_i32_1 = arith.constant 0 : i32
    return %arg0, %c0_i32, %c0_i32_0 : i32, i32, i32
  }
  func.func @transform_3(%arg0: i32) -> (i32, i32) {
    %c0_i32 = arith.constant 0 : i32
    %c0_i32_0 = arith.constant 0 : i32
    %c0_i32_1 = arith.constant 0 : i32
    return %c0_i32, %c0_i32_0 : i32, i32
  }
  func.func @transform_4(%arg0: i32) -> (i32, i32) {
    %c0_i32 = arith.constant 0 : i32
    %c0_i32_0 = arith.constant 0 : i32
    %c0_i32_1 = arith.constant 0 : i32
    return %c0_i32, %c0_i32_0 : i32, i32
  }
  func.func @transform_5(%arg0: i32) -> (i32, i32) {
    %c0_i32 = arith.constant 0 : i32
    %c0_i32_0 = arith.constant 0 : i32
    %c0_i32_1 = arith.constant 0 : i32
    return %c0_i32, %c0_i32_0 : i32, i32
  }
  func.func @transform_6(%arg0: i32) -> (i32, i32) {
    %c0_i32 = arith.constant 0 : i32
    %c0_i32_0 = arith.constant 0 : i32
    %c0_i32_1 = arith.constant 0 : i32
    return %c0_i32, %c0_i32_0 : i32, i32
  }
  func.func @transform_7(%arg0: i32) -> (i32, i32, i32) {
    %c0_i32 = arith.constant 0 : i32
    %c0_i32_0 = arith.constant 0 : i32
    %c0_i32_1 = arith.constant 0 : i32
    return %arg0, %c0_i32, %c0_i32_0 : i32, i32, i32
  }
  func.func @transform_8(%arg0: i32) -> (i32, i32, i32) {
    %c0_i32 = arith.constant 0 : i32
    %c0_i32_0 = arith.constant 0 : i32
    %c0_i32_1 = arith.constant 0 : i32
    return %arg0, %c0_i32, %c0_i32_0 : i32, i32, i32
  }
  func.func @transform_9(%arg0: i32) -> (i32, i32, i32) {
    %c0_i32 = arith.constant 0 : i32
    %c0_i32_0 = arith.constant 0 : i32
    %c0_i32_1 = arith.constant 0 : i32
    return %arg0, %c0_i32, %c0_i32_0 : i32, i32, i32
  }
}

</mosaic_0001>

<llo_original>
// kernel: tpu_custom_call.1
$region0: #{tpu_custom_call.1}
  #allocation0 [shape = 'u32[]', space=smem, size = 0x4, offset = 0x4, fixed_abs, tag = 'smem constant byte address 0x4 - core index']
  #allocation1 [shape = 'u32[144,128]{1,0:T(1,128)}', space=vmem, size = 0x12000, scoped, tag = 'internal scratch']
  %s0 = inlined_call_operand.vmem [shape: f32[4,8,32], index: 0, kind: input, shape index: {}]
  %s1 = inlined_call_operand.vmem [shape: f32[4,96,128], index: 1, kind: input, shape index: {}]
  %s2 = inlined_call_operand.vmem [shape: f32[4,128,32], index: 2, kind: input, shape index: {}]
  %s3 = inlined_call_operand.vmem [shape: f32[32,32], index: 3, kind: input, shape index: {}]
  %s4 = inlined_call_operand.vmem [shape: f32[32,32], index: 4, kind: input, shape index: {}]
  %s5 = inlined_call_operand.vmem [shape: f32[32,32], index: 5, kind: input, shape index: {}]
  %s6 = inlined_call_operand.vmem [shape: f32[32,32], index: 6, kind: input, shape index: {}]
  %s7 = inlined_call_operand.vmem [shape: f32[2,80,32], index: 7, kind: input, shape index: {}]
  %s8 = inlined_call_operand.vmem [shape: f32[2,80,32], index: 8, kind: input, shape index: {}]
  %s9 = inlined_call_operand.vmem [shape: f32[2,5,128], index: 9, kind: output, shape index: {}]
  %s10 = sld [smem:[#allocation0]]
  $region69: #{tpu_custom_call.1} parent=0
    _
  %s12 = ssub.s32 1, %s10
  %s13 = scalar_select 0, %s12, %s10
  loop: start=0, step=1, limit=4
  $region2: #{tpu_custom_call.1} parent=0 // loop_pre_header
    _
  $region3: #{tpu_custom_call.1} parent=0 // loop_header
    %s15 = sphi 0, %s19
    %p16 = scmp.ge.s32.totalorder %s15, 4
    %s25 = sphi 0, %s27
    %s28 = sphi 0, %s25
    %s29 = sphi 0, %s28
    %s45 = sphi 0, %s29
    %s51 = sphi 0, %s53
    %s54 = sphi 0, %s51
    %s55 = sphi 0, %s54
    %s71 = sphi 0, %s55
    %s77 = sphi 0, %s79
    %s80 = sphi 0, %s77
    %s81 = sphi 0, %s80
    %s97 = sphi 0, %s81
    %s101 = sphi 0, %s101
    %s103 = sphi 0, %s101
    %s104 = sphi 0, %s103
    %s118 = sphi 0, %s104
    %s122 = sphi 0, %s122
    %s124 = sphi 0, %s122
    %s125 = sphi 0, %s124
    %s139 = sphi 0, %s125
    %s143 = sphi 0, %s143
    %s145 = sphi 0, %s143
    %s146 = sphi 0, %s145
    %s160 = sphi 0, %s146
    %s164 = sphi 0, %s164
    %s166 = sphi 0, %s164
    %s167 = sphi 0, %s166
    %s181 = sphi 0, %s167
    %s187 = sphi 0, %s189
    %s190 = sphi 0, %s187
    %s191 = sphi 0, %s190
    %s207 = sphi 0, %s191
    %s213 = sphi 0, %s215
    %s216 = sphi 0, %s213
    %s217 = sphi 0, %s216
    %s233 = sphi 0, %s217
    %s239 = sphi 0, %s241
    %s242 = sphi 0, %s239
    %s243 = sphi 0, %s242
    %s259 = sphi 0, %s243
  $region4: #{tpu_custom_call.1} parent=0 // loop_header_branch
    %18 = sbr.rel (%p16) target = $region8
  $region5: #{tpu_custom_call.1} parent=0 // loop_body
    %s20 = ssub.s32 %s15, 1
    %s21 = ssub.s32 %s15, 2
    %s22 = sadd.s32 %s15, 1
    %s23 = ssub.s32 %s15, %s22
    %p24 = scmp.eq.s32.totalorder %s23, 0
    %s26 = sadd.s32 %s25, 1
    %s27 = scalar_select %p24, %s25, %s26
    %p30 = pneg %p24
    %p31 = scmp.eq.s32.totalorder %s15, 1
    %p32 = por %p30, %p31
    %p33 = scmp.ne.s32.totalorder %s25, %s28
    %p34 = scmp.eq.s32.totalorder %s15, 0
    %p35 = por %p33, %p34
    %p36 = scmp.ne.s32.totalorder %s25, %s28
    %p37 = scmp.eq.s32.totalorder %s20, 1
    %p38 = por %p36, %p37
    %p39 = scmp.ne.s32.totalorder %s28, %s29
    %p40 = scmp.eq.s32.totalorder %s20, 0
    %p41 = por %p39, %p40
    %p42 = scmp.ne.s32.totalorder %s28, %s29
    %p43 = scmp.eq.s32.totalorder %s21, 1
    %p44 = por %p42, %p43
    %p46 = scmp.ne.s32.totalorder %s29, %s45
    %p47 = scmp.eq.s32.totalorder %s21, 0
    %p48 = por %p46, %p47
    %s49 = ssub.s32 %s15, %s22
    %p50 = scmp.eq.s32.totalorder %s49, 0
    %s52 = sadd.s32 %s51, 1
    %s53 = scalar_select %p50, %s51, %s52
    %p56 = pneg %p50
    %p57 = scmp.eq.s32.totalorder %s15, 1
    %p58 = por %p56, %p57
    %p59 = scmp.ne.s32.totalorder %s51, %s54
    %p60 = scmp.eq.s32.totalorder %s15, 0
    %p61 = por %p59, %p60
    %p62 = scmp.ne.s32.totalorder %s51, %s54
    %p63 = scmp.eq.s32.totalorder %s20, 1
    %p64 = por %p62, %p63
    %p65 = scmp.ne.s32.totalorder %s54, %s55
    %p66 = scmp.eq.s32.totalorder %s20, 0
    %p67 = por %p65, %p66
    %p68 = scmp.ne.s32.totalorder %s54, %s55
    %p69 = scmp.eq.s32.totalorder %s21, 1
    %p70 = por %p68, %p69
    %p72 = scmp.ne.s32.totalorder %s55, %s71
    %p73 = scmp.eq.s32.totalorder %s21, 0
    %p74 = por %p72, %p73
    %s75 = ssub.s32 %s15, %s22
    %p76 = scmp.eq.s32.totalorder %s75, 0
    %s78 = sadd.s32 %s77, 1
    %s79 = scalar_select %p76, %s77, %s78
    %p82 = pneg %p76
    %p83 = scmp.eq.s32.totalorder %s15, 1
    %p84 = por %p82, %p83
    %p85 = scmp.ne.s32.totalorder %s77, %s80
    %p86 = scmp.eq.s32.totalorder %s15, 0
    %p87 = por %p85, %p86
    %p88 = scmp.ne.s32.totalorder %s77, %s80
    %p89 = scmp.eq.s32.totalorder %s20, 1
    %p90 = por %p88, %p89
    %p91 = scmp.ne.s32.totalorder %s80, %s81
    %p92 = scmp.eq.s32.totalorder %s20, 0
    %p93 = por %p91, %p92
    %p94 = scmp.ne.s32.totalorder %s80, %s81
    %p95 = scmp.eq.s32.totalorder %s21, 1
    %p96 = por %p94, %p95
    %p98 = scmp.ne.s32.totalorder %s81, %s97
    %p99 = scmp.eq.s32.totalorder %s21, 0
    %p100 = por %p98, %p99
    %s102 = sadd.s32 %s101, 1
    %p105 = scmp.eq.s32.totalorder %s15, 1
    %p106 = scmp.ne.s32.totalorder %s101, %s103
    %p107 = scmp.eq.s32.totalorder %s15, 0
    %p108 = por %p106, %p107
    %p109 = scmp.ne.s32.totalorder %s101, %s103
    %p110 = scmp.eq.s32.totalorder %s20, 1
    %p111 = por %p109, %p110
    %p112 = scmp.ne.s32.totalorder %s103, %s104
    %p113 = scmp.eq.s32.totalorder %s20, 0
    %p114 = por %p112, %p113
    %p115 = scmp.ne.s32.totalorder %s103, %s104
    %p116 = scmp.eq.s32.totalorder %s21, 1
    %p117 = por %p115, %p116
    %p119 = scmp.ne.s32.totalorder %s104, %s118
    %p120 = scmp.eq.s32.totalorder %s21, 0
    %p121 = por %p119, %p120
    %s123 = sadd.s32 %s122, 1
    %p126 = scmp.eq.s32.totalorder %s15, 1
    %p127 = scmp.ne.s32.totalorder %s122, %s124
    %p128 = scmp.eq.s32.totalorder %s15, 0
    %p129 = por %p127, %p128
    %p130 = scmp.ne.s32.totalorder %s122, %s124
    %p131 = scmp.eq.s32.totalorder %s20, 1
    %p132 = por %p130, %p131
    %p133 = scmp.ne.s32.totalorder %s124, %s125
    %p134 = scmp.eq.s32.totalorder %s20, 0
    %p135 = por %p133, %p134
    %p136 = scmp.ne.s32.totalorder %s124, %s125
    %p137 = scmp.eq.s32.totalorder %s21, 1
    %p138 = por %p136, %p137
    %p140 = scmp.ne.s32.totalorder %s125, %s139
    %p141 = scmp.eq.s32.totalorder %s21, 0
    %p142 = por %p140, %p141
    %s144 = sadd.s32 %s143, 1
    %p147 = scmp.eq.s32.totalorder %s15, 1
    %p148 = scmp.ne.s32.totalorder %s143, %s145
    %p149 = scmp.eq.s32.totalorder %s15, 0
    %p150 = por %p148, %p149
    %p151 = scmp.ne.s32.totalorder %s143, %s145
    %p152 = scmp.eq.s32.totalorder %s20, 1
    %p153 = por %p151, %p152
    %p154 = scmp.ne.s32.totalorder %s145, %s146
    %p155 = scmp.eq.s32.totalorder %s20, 0
    %p156 = por %p154, %p155
    %p157 = scmp.ne.s32.totalorder %s145, %s146
    %p158 = scmp.eq.s32.totalorder %s21, 1
    %p159 = por %p157, %p158
    %p161 = scmp.ne.s32.totalorder %s146, %s160
    %p162 = scmp.eq.s32.totalorder %s21, 0
    %p163 = por %p161, %p162
    %s165 = sadd.s32 %s164, 1
    %p168 = scmp.eq.s32.totalorder %s15, 1
    %p169 = scmp.ne.s32.totalorder %s164, %s166
    %p170 = scmp.eq.s32.totalorder %s15, 0
    %p171 = por %p169, %p170
    %p172 = scmp.ne.s32.totalorder %s164, %s166
    %p173 = scmp.eq.s32.totalorder %s20, 1
    %p174 = por %p172, %p173
    %p175 = scmp.ne.s32.totalorder %s166, %s167
    %p176 = scmp.eq.s32.totalorder %s20, 0
    %p177 = por %p175, %p176
    %p178 = scmp.ne.s32.totalorder %s166, %s167
    %p179 = scmp.eq.s32.totalorder %s21, 1
    %p180 = por %p178, %p179
    %p182 = scmp.ne.s32.totalorder %s167, %s181
    %p183 = scmp.eq.s32.totalorder %s21, 0
    %p184 = por %p182, %p183
    %s185 = ssub.s32 %s15, %s22
    %p186 = scmp.eq.s32.totalorder %s185, 0
    %s188 = sadd.s32 %s187, 1
    %s189 = scalar_select %p186, %s187, %s188
    %p192 = pneg %p186
    %p193 = scmp.eq.s32.totalorder %s15, 1
    %p194 = por %p192, %p193
    %p195 = scmp.ne.s32.totalorder %s187, %s190
    %p196 = scmp.eq.s32.totalorder %s15, 0
    %p197 = por %p195, %p196
    %p198 = scmp.ne.s32.totalorder %s187, %s190
    %p199 = scmp.eq.s32.totalorder %s20, 1
    %p200 = por %p198, %p199
    %p201 = scmp.ne.s32.totalorder %s190, %s191
    %p202 = scmp.eq.s32.totalorder %s20, 0
    %p203 = por %p201, %p202
    %p204 = scmp.ne.s32.totalorder %s190, %s191
    %p205 = scmp.eq.s32.totalorder %s21, 1
    %p206 = por %p204, %p205
    %p208 = scmp.ne.s32.totalorder %s191, %s207
    %p209 = scmp.eq.s32.totalorder %s21, 0
    %p210 = por %p208, %p209
    %s211 = ssub.s32 %s15, %s22
    %p212 = scmp.eq.s32.totalorder %s211, 0
    %s214 = sadd.s32 %s213, 1
    %s215 = scalar_select %p212, %s213, %s214
    %p218 = pneg %p212
    %p219 = scmp.eq.s32.totalorder %s15, 1
    %p220 = por %p218, %p219
    %p221 = scmp.ne.s32.totalorder %s213, %s216
    %p222 = scmp.eq.s32.totalorder %s15, 0
    %p223 = por %p221, %p222
    %p224 = scmp.ne.s32.totalorder %s213, %s216
    %p225 = scmp.eq.s32.totalorder %s20, 1
    %p226 = por %p224, %p225
    %p227 = scmp.ne.s32.totalorder %s216, %s217
    %p228 = scmp.eq.s32.totalorder %s20, 0
    %p229 = por %p227, %p228
    %p230 = scmp.ne.s32.totalorder %s216, %s217
    %p231 = scmp.eq.s32.totalorder %s21, 1
    %p232 = por %p230, %p231
    %p234 = scmp.ne.s32.totalorder %s217, %s233
    %p235 = scmp.eq.s32.totalorder %s21, 0
    %p236 = por %p234, %p235
    %s237 = ssub.s32 %s15, %s22
    %p238 = scmp.eq.s32.totalorder %s237, 0
    %s240 = sadd.s32 %s239, 1
    %s241 = scalar_select %p238, %s239, %s240
    %p244 = pneg %p238
    %p245 = scmp.eq.s32.totalorder %s15, 1
    %p246 = por %p244, %p245
    %p247 = scmp.ne.s32.totalorder %s239, %s242
    %p248 = scmp.eq.s32.totalorder %s15, 0
    %p249 = por %p247, %p248
    %p250 = scmp.ne.s32.totalorder %s239, %s242
    %p251 = scmp.eq.s32.totalorder %s20, 1
    %p252 = por %p250, %p251
    %p253 = scmp.ne.s32.totalorder %s242, %s243
    %p254 = scmp.eq.s32.totalorder %s20, 0
    %p255 = por %p253, %p254
    %p256 = scmp.ne.s32.totalorder %s242, %s243
    %p257 = scmp.eq.s32.totalorder %s21, 1
    %p258 = por %p256, %p257
    %p260 = scmp.ne.s32.totalorder %s243, %s259
    %p261 = scmp.eq.s32.totalorder %s21, 0
    %p262 = por %p260, %p261
    %p263 = scmp.le.s32.totalorder 1, %s15
    %p264 = scmp.lt.s32.totalorder %s15, 3
    %p265 = pnand %p263, %p264
    %p266 = pneg %p265
    // Predicated region
    $region9: #{tpu_custom_call.1} parent=5 // pred_check
      _
    $region10: #{tpu_custom_call.1} parent=5 // pred_check_branch
      %268 = sbr.rel (%p265) target = $region12
    $region11: #{tpu_custom_call.1} parent=5 // pred_region
      %s269 = ssub.s32 %s15, 1
      // Predicated region
      $region13: #{tpu_custom_call.1} parent=11 // pred_check
        %p270 = pneg %p114
      $region14: #{tpu_custom_call.1} parent=11 // pred_check_branch
        %272 = sbr.rel (%p270) target = $region16
      $region15: #{tpu_custom_call.1} parent=11 // pred_region
        _
      $region16: #{tpu_custom_call.1} parent=11 // pred_fallthru
        _
      // Predicated region
      $region17: #{tpu_custom_call.1} parent=11 // pred_check
        %p273 = pneg %p135
      $region18: #{tpu_custom_call.1} parent=11 // pred_check_branch
        %275 = sbr.rel (%p273) target = $region20
      $region19: #{tpu_custom_call.1} parent=11 // pred_region
        _
      $region20: #{tpu_custom_call.1} parent=11 // pred_fallthru
        _
      // Predicated region
      $region21: #{tpu_custom_call.1} parent=11 // pred_check
        %p276 = pneg %p156
      $region22: #{tpu_custom_call.1} parent=11 // pred_check_branch
        %278 = sbr.rel (%p276) target = $region24
      $region23: #{tpu_custom_call.1} parent=11 // pred_region
        _
      $region24: #{tpu_custom_call.1} parent=11 // pred_fallthru
        _
      // Predicated region
      $region25: #{tpu_custom_call.1} parent=11 // pred_check
        %p279 = pneg %p177
      $region26: #{tpu_custom_call.1} parent=11 // pred_check_branch
        %281 = sbr.rel (%p279) target = $region28
      $region27: #{tpu_custom_call.1} parent=11 // pred_region
        _
      $region28: #{tpu_custom_call.1} parent=11 // pred_fallthru
        _
    $region12: #{tpu_custom_call.1} parent=5 // pred_fallthru
      _
    %p282 = scmp.lt.s32.totalorder %s15, 2
    // Predicated region
    $region29: #{tpu_custom_call.1} parent=5 // pred_check
      %p283 = pneg %p282
    $region30: #{tpu_custom_call.1} parent=5 // pred_check_branch
      %285 = sbr.rel (%p283) target = $region32
    $region31: #{tpu_custom_call.1} parent=5 // pred_region
      // Predicated region
      $region33: #{tpu_custom_call.1} parent=31 // pred_check
        %p286 = pneg %p35
      $region34: #{tpu_custom_call.1} parent=31 // pred_check_branch
        %288 = sbr.rel (%p286) target = $region36
      $region35: #{tpu_custom_call.1} parent=31 // pred_region
        %s289 = smul.u32 2, %s15
        %p290 = scmp.lt.s32.totalorder %s289, 3
        %s291 = scalar_select %p290, %s289, 3
        %s292 = smul.addr %s291, 8
        %s293 = scalar_lea.vmem %s0, %s292
        %s294 = smul.u32 2, %s15
      $region36: #{tpu_custom_call.1} parent=31 // pred_fallthru
        _
      // Predicated region
      $region37: #{tpu_custom_call.1} parent=31 // pred_check
        %p295 = pneg %p61
      $region38: #{tpu_custom_call.1} parent=31 // pred_check_branch
        %297 = sbr.rel (%p295) target = $region40
      $region39: #{tpu_custom_call.1} parent=31 // pred_region
        %s298 = smul.u32 2, %s15
        %p299 = scmp.lt.s32.totalorder %s298, 3
        %s300 = scalar_select %p299, %s298, 3
        %s301 = smul.addr %s300, 12
        %s302 = smul.addr %s301, 8
        %s303 = scalar_lea.vmem %s1, %s302
        %s304 = smul.u32 2, %s15
      $region40: #{tpu_custom_call.1} parent=31 // pred_fallthru
        _
      // Predicated region
      $region41: #{tpu_custom_call.1} parent=31 // pred_check
        %p305 = pneg %p87
      $region42: #{tpu_custom_call.1} parent=31 // pred_check_branch
        %307 = sbr.rel (%p305) target = $region44
      $region43: #{tpu_custom_call.1} parent=31 // pred_region
        %s308 = smul.u32 2, %s15
        %p309 = scmp.lt.s32.totalorder %s308, 3
        %s310 = scalar_select %p309, %s308, 3
        %s311 = smul.addr %s310, 16
        %s312 = smul.addr %s311, 8
        %s313 = scalar_lea.vmem %s2, %s312
        %s314 = smul.u32 2, %s15
      $region44: #{tpu_custom_call.1} parent=31 // pred_fallthru
        _
      // Predicated region
      $region45: #{tpu_custom_call.1} parent=31 // pred_check
        %p315 = pneg %p197
      $region46: #{tpu_custom_call.1} parent=31 // pred_check_branch
        %317 = sbr.rel (%p315) target = $region48
      $region47: #{tpu_custom_call.1} parent=31 // pred_region
        %p318 = scmp.lt.s32.totalorder %s15, 1
        %s319 = scalar_select %p318, %s15, 1
        %s320 = smul.addr %s319, 10
        %s321 = smul.addr %s320, 8
        %s322 = scalar_lea.vmem %s7, %s321
      $region48: #{tpu_custom_call.1} parent=31 // pred_fallthru
        _
      // Predicated region
      $region49: #{tpu_custom_call.1} parent=31 // pred_check
        %p323 = pneg %p223
      $region50: #{tpu_custom_call.1} parent=31 // pred_check_branch
        %325 = sbr.rel (%p323) target = $region52
      $region51: #{tpu_custom_call.1} parent=31 // pred_region
        %p326 = scmp.lt.s32.totalorder %s15, 1
        %s327 = scalar_select %p326, %s15, 1
        %s328 = smul.addr %s327, 10
        %s329 = smul.addr %s328, 8
        %s330 = scalar_lea.vmem %s8, %s329
      $region52: #{tpu_custom_call.1} parent=31 // pred_fallthru
        _
    $region32: #{tpu_custom_call.1} parent=5 // pred_fallthru
      _
    %p331 = scmp.le.s32.totalorder 1, %s15
    %p332 = scmp.lt.s32.totalorder %s15, 3
    %p333 = pnand %p331, %p332
    %p334 = pneg %p333
    // Predicated region
    $region53: #{tpu_custom_call.1} parent=5 // pred_check
      _
    $region54: #{tpu_custom_call.1} parent=5 // pred_check_branch
      %336 = sbr.rel (%p333) target = $region56
    $region55: #{tpu_custom_call.1} parent=5 // pred_region
      %s337 = ssub.s32 %s15, 1
      %s338 = smul.u32 2, %s20
      %p339 = scmp.lt.s32.totalorder %s338, 3
      %s340 = scalar_select %p339, %s338, 3
      %s341 = smul.addr %s340, 8
      %s342 = scalar_lea.vmem %s0, %s341
      %p343 = pneg %p41
      %p344 = pneg %p38
      %s345 = smul.u32 2, %s20
      %p346 = scmp.lt.s32.totalorder %s345, 3
      %s347 = scalar_select %p346, %s345, 3
      %s348 = smul.addr %s347, 12
      %s349 = smul.addr %s348, 8
      %s350 = scalar_lea.vmem %s1, %s349
      %p351 = pneg %p67
      %p352 = pneg %p64
      %s353 = smul.u32 2, %s20
      %p354 = scmp.lt.s32.totalorder %s353, 3
      %s355 = scalar_select %p354, %s353, 3
      %s356 = smul.addr %s355, 16
      %s357 = smul.addr %s356, 8
      %s358 = scalar_lea.vmem %s2, %s357
      %p359 = pneg %p93
      %p360 = pneg %p90
      %p361 = pneg %p114
      %p362 = pneg %p111
      %p363 = pneg %p135
      %p364 = pneg %p132
      %p365 = pneg %p156
      %p366 = pneg %p153
      %p367 = pneg %p177
      %p368 = pneg %p174
      %p369 = scmp.lt.s32.totalorder %s20, 1
      %s370 = scalar_select %p369, %s20, 1
      %s371 = smul.addr %s370, 10
      %s372 = smul.addr %s371, 8
      %s373 = scalar_lea.vmem %s7, %s372
      %p374 = pneg %p203
      %p375 = pneg %p200
      %p376 = scmp.lt.s32.totalorder %s20, 1
      %s377 = scalar_select %p376, %s20, 1
      %s378 = smul.addr %s377, 10
      %s379 = smul.addr %s378, 8
      %s380 = scalar_lea.vmem %s8, %s379
      %p381 = pneg %p229
      %p382 = pneg %p226
      %p383 = pneg %p255
      %p384 = pneg %p252
      %p385 = scmp.lt.s32.totalorder %s20, 1
      %s386 = scalar_select %p385, %s20, 1
      %s387 = smul.addr %s386, 8
      %s388 = scalar_lea.vmem %s9, %s387
      %s389 = smul.u32 2, %s20
      %p390 = scmp.lt.s32.totalorder %s389, 3
      %s391 = scalar_select %p390, %s389, 3
      %s392 = smul.addr %s391, 8
      %s393 = scalar_lea.vmem %s0, %s392
      %s394 = smul.u32 2, %s20
      %s395 = smul.u32 2, %s20
      %p396 = scmp.lt.s32.totalorder %s395, 3
      %s397 = scalar_select %p396, %s395, 3
      %s398 = smul.addr %s397, 12
      %s399 = smul.addr %s398, 8
      %s400 = scalar_lea.vmem %s1, %s399
      %s401 = smul.u32 2, %s20
      %s402 = smul.u32 2, %s20
      %p403 = scmp.lt.s32.totalorder %s402, 3
      %s404 = scalar_select %p403, %s402, 3
      %s405 = smul.addr %s404, 16
      %s406 = smul.addr %s405, 8
      %s407 = scalar_lea.vmem %s2, %s406
      %s408 = smul.u32 2, %s20
      %p409 = scmp.lt.s32.totalorder %s20, 1
      %s410 = scalar_select %p409, %s20, 1
      %s411 = smul.addr %s410, 10
      %s412 = smul.addr %s411, 8
      %s413 = scalar_lea.vmem %s7, %s412
      %p414 = scmp.lt.s32.totalorder %s20, 1
      %s415 = scalar_select %p414, %s20, 1
      %s416 = smul.addr %s415, 10
      %s417 = smul.addr %s416, 8
      %s418 = scalar_lea.vmem %s8, %s417
      %p419 = scmp.lt.s32.totalorder %s20, 1
      %s420 = scalar_select %p419, %s20, 1
      %s421 = smul.addr %s420, 8
      %s422 = scalar_lea.vmem %s9, %s421
      %v423 = vld [vmem:[%s393] sm:$0xff]
      %v424 = vld [vmem:[%s393 + $0x8] sm:$0xff]
      %v425 = vld [vmem:[%s3] sm:$0xff]
      %v426 = vld [vmem:[%s3 + $0x8] sm:$0xff]
      %v427 = vld [vmem:[%s3 + $0x10] sm:$0xff]
      %v428 = vld [vmem:[%s3 + $0x18] sm:$0xff]
      %vm429 = vcmask 261120
      %v431 = vsel %vm429, %v423, 0
      %v434 = vsel %vm429, %v424, 0
      %436 = vmatprep.subr.mxu0 0.0
      %437 = vmatpush1.msra.mxu0 %v425
      %438 = vmatprep.subr.mxu0 0.0
      %439 = vmatpush1.msra.mxu0 %v426
      %440 = vmatprep.subr.mxu0 0.0
      %441 = vmatpush1.msra.mxu0 %v427
      %442 = vmatprep.subr.mxu0 0.0
      %443 = vmatpush1.msra.mxu0 %v428
      %444 = vmatprep.subr.mxu0 0.0
      %445 = vmatpush1.msra.mxu0 0.0
      %446 = vmatprep.subr.mxu0 0.0
      %447 = vmatpush1.msra.mxu0 0.0
      %448 = vmatprep.subr.mxu0 0.0
      %449 = vmatpush1.msra.mxu0 0.0
      %450 = vmatprep.subr.mxu0 0.0
      %451 = vmatpush1.msra.mxu0 0.0
      %452 = vmatprep.subr.mxu0 0.0
      %453 = vmatpush1.msra.mxu0 0.0
      %454 = vmatprep.subr.mxu0 0.0
      %455 = vmatpush1.msra.mxu0 0.0
      %456 = vmatprep.subr.mxu0 0.0
      %457 = vmatpush1.msra.mxu0 0.0
      %458 = vmatprep.subr.mxu0 0.0
      %459 = vmatpush1.msra.mxu0 0.0
      %460 = vmatprep.subr.mxu0 0.0
      %461 = vmatpush1.msra.mxu0 0.0
      %462 = vmatprep.subr.mxu0 0.0
      %463 = vmatpush1.msra.mxu0 0.0
      %464 = vmatprep.subr.mxu0 0.0
      %465 = vmatpush1.msra.mxu0 0.0
      %466 = vmatprep.subr.mxu0 0.0
      %467 = vmatpush1.msra.mxu0 0.0
      %468 = vmatprep.subr.mxu0 0.0
      %469 = vmatpush1.msra.mxu0 0.0
      %470 = vmatprep.subr.mxu0 0.0
      %471 = vmatpush1.msra.mxu0 0.0
      %472 = vmatprep.subr.mxu0 0.0
      %473 = vmatpush1.msra.mxu0 0.0
      %474 = vmatprep.subr.mxu0 0.0
      %475 = vmatpush1.msra.mxu0 0.0
      %476 = vmatprep.subr.mxu0 0.0
      %477 = vmatpush1.msra.mxu0 0.0
      %478 = vmatprep.subr.mxu0 0.0
      %479 = vmatpush1.msra.mxu0 0.0
      %480 = vmatprep.subr.mxu0 0.0
      %481 = vmatpush1.msra.mxu0 0.0
      %482 = vmatprep.subr.mxu0 0.0
      %483 = vmatpush1.msra.mxu0 0.0
      %484 = vmatprep.subr.mxu0 0.0
      %485 = vmatpush1.msra.mxu0 0.0
      %486 = vmatprep.subr.mxu0 0.0
      %487 = vmatpush1.msra.mxu0 0.0
      %488 = vmatprep.subr.mxu0 0.0
      %489 = vmatpush1.msra.mxu0 0.0
      %490 = vmatprep.subr.mxu0 0.0
      %491 = vmatpush1.msra.mxu0 0.0
      %492 = vmatprep.subr.mxu0 0.0
      %493 = vmatpush1.msra.mxu0 0.0
      %494 = vmatprep.subr.mxu0 0.0
      %495 = vmatpush1.msra.mxu0 0.0
      %496 = vmatprep.subr.mxu0 0.0
      %497 = vmatpush1.msra.mxu0 0.0
      %498 = vmatprep.subr.mxu0 0.0
      %499 = vmatpush1.msra.mxu0 0.0
      %500 = vmatprep.mubr.f32.mxu0 0.0
      %501 = vmatmul.mubr.f32.gmra.mrb[0].mxu0 %v431
      %v502 = vpop.f32.mrb[0].mxu0
      %v503 = vadd.f32 0.0, %v502
      %v504 = vpop.f32.mrb[0].mxu0
      %505 = vmatprep.mubr.f32.mxu0 0.0
      %506 = vmatmul.mubr.f32.gmra.mrb[0].mxu0 %v434
      %v507 = vpop.f32.mrb[0].mxu0
      %v508 = vadd.f32 0.0, %v507
      %v509 = vpop.f32.mrb[0].mxu0
      %510 = vdwg.mxu0
      %v511 = vld [vmem:[%s5] sm:$0xff]
      %v512 = vld [vmem:[%s5 + $0x8] sm:$0xff]
      %v513 = vld [vmem:[%s5 + $0x10] sm:$0xff]
      %v514 = vld [vmem:[%s5 + $0x18] sm:$0xff]
      %515 = vmatprep.subr.mxu0 0.0
      %516 = vmatpush1.msra.mxu0 %v511
      %517 = vmatprep.subr.mxu0 0.0
      %518 = vmatpush1.msra.mxu0 %v512
      %519 = vmatprep.subr.mxu0 0.0
      %520 = vmatpush1.msra.mxu0 %v513
      %521 = vmatprep.subr.mxu0 0.0
      %522 = vmatpush1.msra.mxu0 %v514
      %523 = vmatprep.subr.mxu0 0.0
      %524 = vmatpush1.msra.mxu0 0.0
      %525 = vmatprep.subr.mxu0 0.0
      %526 = vmatpush1.msra.mxu0 0.0
      %527 = vmatprep.subr.mxu0 0.0
      %528 = vmatpush1.msra.mxu0 0.0
      %529 = vmatprep.subr.mxu0 0.0
      %530 = vmatpush1.msra.mxu0 0.0
      %531 = vmatprep.subr.mxu0 0.0
      %532 = vmatpush1.msra.mxu0 0.0
      %533 = vmatprep.subr.mxu0 0.0
      %534 = vmatpush1.msra.mxu0 0.0
      %535 = vmatprep.subr.mxu0 0.0
      %536 = vmatpush1.msra.mxu0 0.0
      %537 = vmatprep.subr.mxu0 0.0
      %538 = vmatpush1.msra.mxu0 0.0
      %539 = vmatprep.subr.mxu0 0.0
      %540 = vmatpush1.msra.mxu0 0.0
      %541 = vmatprep.subr.mxu0 0.0
      %542 = vmatpush1.msra.mxu0 0.0
      %543 = vmatprep.subr.mxu0 0.0
      %544 = vmatpush1.msra.mxu0 0.0
      %545 = vmatprep.subr.mxu0 0.0
      %546 = vmatpush1.msra.mxu0 0.0
      %547 = vmatprep.subr.mxu0 0.0
      %548 = vmatpush1.msra.mxu0 0.0
      %549 = vmatprep.subr.mxu0 0.0
      %550 = vmatpush1.msra.mxu0 0.0
      %551 = vmatprep.subr.mxu0 0.0
      %552 = vmatpush1.msra.mxu0 0.0
      %553 = vmatprep.subr.mxu0 0.0
      %554 = vmatpush1.msra.mxu0 0.0
      %555 = vmatprep.subr.mxu0 0.0
      %556 = vmatpush1.msra.mxu0 0.0
      %557 = vmatprep.subr.mxu0 0.0
      %558 = vmatpush1.msra.mxu0 0.0
      %559 = vmatprep.subr.mxu0 0.0
      %560 = vmatpush1.msra.mxu0 0.0
      %561 = vmatprep.subr.mxu0 0.0
      %562 = vmatpush1.msra.mxu0 0.0
      %563 = vmatprep.subr.mxu0 0.0
      %564 = vmatpush1.msra.mxu0 0.0
      %565 = vmatprep.subr.mxu0 0.0
      %566 = vmatpush1.msra.mxu0 0.0
      %567 = vmatprep.subr.mxu0 0.0
      %568 = vmatpush1.msra.mxu0 0.0
      %569 = vmatprep.subr.mxu0 0.0
      %570 = vmatpush1.msra.mxu0 0.0
      %571 = vmatprep.subr.mxu0 0.0
      %572 = vmatpush1.msra.mxu0 0.0
      %573 = vmatprep.subr.mxu0 0.0
      %574 = vmatpush1.msra.mxu0 0.0
      %575 = vmatprep.subr.mxu0 0.0
      %576 = vmatpush1.msra.mxu0 0.0
      %577 = vmatprep.subr.mxu0 0.0
      %578 = vmatpush1.msra.mxu0 0.0
      %579 = vmatprep.mubr.f32.mxu0 0.0
      %580 = vmatmul.mubr.f32.gmra.mrb[0].mxu0 %v431
      %v581 = vpop.f32.mrb[0].mxu0
      %v582 = vadd.f32 0.0, %v581
      %v583 = vpop.f32.mrb[0].mxu0
      %584 = vmatprep.mubr.f32.mxu0 0.0
      %585 = vmatmul.mubr.f32.gmra.mrb[0].mxu0 %v434
      %v586 = vpop.f32.mrb[0].mxu0
      %v587 = vadd.f32 0.0, %v586
      %v588 = vpop.f32.mrb[0].mxu0
      %589 = vdwg.mxu0
      %v590 = vld [vmem:[%s400] sm:$0xff]
      %v592 = vcombine.high %v590, %v590
      %v594 = vunpack.c.l.s4 1966171168
      %v595 = vunpack.c.0.s8 %v594
      %v596 = vlaneseq
      %v597 = vshrl.u32 %v596, 7
      %v598 = vsub.s32 %v595, %v597
      %v599 = vrot.slane %v590, %v598
      %v601 = vunpack.c.l.s4 1966171168
      %v602 = vunpack.c.0.s8 %v601
      %v603 = vlaneseq
      %v604 = vshrl.u32 %v603, 7
      %v605 = vsub.s32 %v602, %v604
      %v606 = vrot.slane %v592, %v605
      %v607 = vcombine.high %v599, %v599
      %v608 = vcombine.high %v606, %v606
      %v610 = vunpack.c.l.s4 1966171168
      %v611 = vunpack.c.0.s8 %v610
      %v612 = vlaneseq
      %v613 = vshrl.u32 %v612, 7
      %v614 = vsub.s32 %v611, %v613
      %v615 = vrot.slane %v599, %v614
      %v617 = vunpack.c.l.s4 1966171168
      %v618 = vunpack.c.0.s8 %v617
      %v619 = vlaneseq
      %v620 = vshrl.u32 %v619, 7
      %v621 = vsub.s32 %v618, %v620
      %v622 = vrot.slane %v606, %v621
      %v624 = vunpack.c.l.s4 1966171168
      %v625 = vunpack.c.0.s8 %v624
      %v626 = vlaneseq
      %v627 = vshrl.u32 %v626, 7
      %v628 = vsub.s32 %v625, %v627
      %v629 = vrot.slane %v607, %v628
      %v631 = vunpack.c.l.s4 1966171168
      %v632 = vunpack.c.0.s8 %v631
      %v633 = vlaneseq
      %v634 = vshrl.u32 %v633, 7
      %v635 = vsub.s32 %v632, %v634
      %v636 = vrot.slane %v608, %v635
      %v637 = vcombine.high %v615, %v615
      %v638 = vcombine.high %v622, %v622
      %v639 = vcombine.high %v629, %v629
      %v640 = vcombine.high %v636, %v636
      %v641 = vlaneseq
      %v642 = vshrl.u32 %v641, 7
      %v643 = vsub.s32 0, %v642
      %v644 = vrot.slane %v615, %v643
      %v645 = vlaneseq
      %v646 = vshrl.u32 %v645, 7
      %v647 = vsub.s32 0, %v646
      %v648 = vrot.slane %v629, %v647
      %v649 = vlaneseq
      %v650 = vshrl.u32 %v649, 7
      %v651 = vsub.s32 0, %v650
      %v652 = vrot.slane %v637, %v651
      %v653 = vlaneseq
      %v654 = vshrl.u32 %v653, 7
      %v655 = vsub.s32 0, %v654
      %v656 = vrot.slane %v639, %v655
      %v657 = vlaneseq
      %v658 = vshrl.u32 %v657, 7
      %v659 = vsub.s32 0, %v658
      %v660 = vrot.slane %v622, %v659
      %v661 = vlaneseq
      %v662 = vshrl.u32 %v661, 7
      %v663 = vsub.s32 0, %v662
      %v664 = vrot.slane %v636, %v663
      %v665 = vlaneseq
      %v666 = vshrl.u32 %v665, 7
      %v667 = vsub.s32 0, %v666
      %v668 = vrot.slane %v638, %v667
      %v669 = vlaneseq
      %v670 = vshrl.u32 %v669, 7
      %v671 = vsub.s32 0, %v670
      %v672 = vrot.slane %v640, %v671
      %v681 = vmul.f32 %v644, %v590
      %v682 = vmul.f32 %v648, %v590
      %v683 = vmul.f32 %v652, %v590
      %v684 = vmul.f32 %v656, %v590
      %v685 = vmul.f32 %v660, %v590
      %v686 = vmul.f32 %v664, %v590
      %v687 = vmul.f32 %v668, %v590
      %v688 = vmul.f32 %v672, %v590
      %v689 = vld [vmem:[%s400 + $0x8] sm:$0xff]
      %v691 = vcombine.high %v689, %v689
      %v693 = vunpack.c.l.s4 1966171168
      %v694 = vunpack.c.0.s8 %v693
      %v695 = vlaneseq
      %v696 = vshrl.u32 %v695, 7
      %v697 = vsub.s32 %v694, %v696
      %v698 = vrot.slane %v689, %v697
      %v700 = vunpack.c.l.s4 1966171168
      %v701 = vunpack.c.0.s8 %v700
      %v702 = vlaneseq
      %v703 = vshrl.u32 %v702, 7
      %v704 = vsub.s32 %v701, %v703
      %v705 = vrot.slane %v691, %v704
      %v706 = vcombine.high %v698, %v698
      %v707 = vcombine.high %v705, %v705
      %v709 = vunpack.c.l.s4 1966171168
      %v710 = vunpack.c.0.s8 %v709
      %v711 = vlaneseq
      %v712 = vshrl.u32 %v711, 7
      %v713 = vsub.s32 %v710, %v712
      %v714 = vrot.slane %v698, %v713
      %v716 = vunpack.c.l.s4 1966171168
      %v717 = vunpack.c.0.s8 %v716
      %v718 = vlaneseq
      %v719 = vshrl.u32 %v718, 7
      %v720 = vsub.s32 %v717, %v719
      %v721 = vrot.slane %v705, %v720
      %v723 = vunpack.c.l.s4 1966171168
      %v724 = vunpack.c.0.s8 %v723
      %v725 = vlaneseq
      %v726 = vshrl.u32 %v725, 7
      %v727 = vsub.s32 %v724, %v726
      %v728 = vrot.slane %v706, %v727
      %v730 = vunpack.c.l.s4 1966171168
      %v731 = vunpack.c.0.s8 %v730
      %v732 = vlaneseq
      %v733 = vshrl.u32 %v732, 7
      %v734 = vsub.s32 %v731, %v733
      %v735 = vrot.slane %v707, %v734
      %v736 = vcombine.high %v714, %v714
      %v737 = vcombine.high %v721, %v721
      %v738 = vcombine.high %v728, %v728
      %v739 = vcombine.high %v735, %v735
      %v740 = vlaneseq
      %v741 = vshrl.u32 %v740, 7
      %v742 = vsub.s32 0, %v741
      %v743 = vrot.slane %v714, %v742
      %v744 = vlaneseq
      %v745 = vshrl.u32 %v744, 7
      %v746 = vsub.s32 0, %v745
      %v747 = vrot.slane %v728, %v746
      %v748 = vlaneseq
      %v749 = vshrl.u32 %v748, 7
      %v750 = vsub.s32 0, %v749
      %v751 = vrot.slane %v736, %v750
      %v752 = vlaneseq
      %v753 = vshrl.u32 %v752, 7
      %v754 = vsub.s32 0, %v753
      %v755 = vrot.slane %v738, %v754
      %v756 = vlaneseq
      %v757 = vshrl.u32 %v756, 7
      %v758 = vsub.s32 0, %v757
      %v759 = vrot.slane %v721, %v758
      %v760 = vlaneseq
      %v761 = vshrl.u32 %v760, 7
      %v762 = vsub.s32 0, %v761
      %v763 = vrot.slane %v735, %v762
      %v764 = vlaneseq
      %v765 = vshrl.u32 %v764, 7
      %v766 = vsub.s32 0, %v765
      %v767 = vrot.slane %v737, %v766
      %v768 = vlaneseq
      %v769 = vshrl.u32 %v768, 7
      %v770 = vsub.s32 0, %v769
      %v771 = vrot.slane %v739, %v770
      %v780 = vmul.f32 %v743, %v689
      %v781 = vmul.f32 %v747, %v689
      %v782 = vmul.f32 %v751, %v689
      %v783 = vmul.f32 %v755, %v689
      %v784 = vmul.f32 %v759, %v689
      %v785 = vmul.f32 %v763, %v689
      %v786 = vmul.f32 %v767, %v689
      %v787 = vmul.f32 %v771, %v689
      %v788 = vadd.f32 %v681, %v780
      %v789 = vadd.f32 %v682, %v781
      %v790 = vadd.f32 %v683, %v782
      %v791 = vadd.f32 %v684, %v783
      %v792 = vadd.f32 %v685, %v784
      %v793 = vadd.f32 %v686, %v785
      %v794 = vadd.f32 %v687, %v786
      %v795 = vadd.f32 %v688, %v787
      %v796 = vld [vmem:[%s400 + $0x10] sm:$0xff]
      %v798 = vcombine.high %v796, %v796
      %v800 = vunpack.c.l.s4 1966171168
      %v801 = vunpack.c.0.s8 %v800
      %v802 = vlaneseq
      %v803 = vshrl.u32 %v802, 7
      %v804 = vsub.s32 %v801, %v803
      %v805 = vrot.slane %v796, %v804
      %v807 = vunpack.c.l.s4 1966171168
      %v808 = vunpack.c.0.s8 %v807
      %v809 = vlaneseq
      %v810 = vshrl.u32 %v809, 7
      %v811 = vsub.s32 %v808, %v810
      %v812 = vrot.slane %v798, %v811
      %v813 = vcombine.high %v805, %v805
      %v814 = vcombine.high %v812, %v812
      %v816 = vunpack.c.l.s4 1966171168
      %v817 = vunpack.c.0.s8 %v816
      %v818 = vlaneseq
      %v819 = vshrl.u32 %v818, 7
      %v820 = vsub.s32 %v817, %v819
      %v821 = vrot.slane %v805, %v820
      %v823 = vunpack.c.l.s4 1966171168
      %v824 = vunpack.c.0.s8 %v823
      %v825 = vlaneseq
      %v826 = vshrl.u32 %v825, 7
      %v827 = vsub.s32 %v824, %v826
      %v828 = vrot.slane %v812, %v827
      %v830 = vunpack.c.l.s4 1966171168
      %v831 = vunpack.c.0.s8 %v830
      %v832 = vlaneseq
      %v833 = vshrl.u32 %v832, 7
      %v834 = vsub.s32 %v831, %v833
      %v835 = vrot.slane %v813, %v834
      %v837 = vunpack.c.l.s4 1966171168
      %v838 = vunpack.c.0.s8 %v837
      %v839 = vlaneseq
      %v840 = vshrl.u32 %v839, 7
      %v841 = vsub.s32 %v838, %v840
      %v842 = vrot.slane %v814, %v841
      %v843 = vcombine.high %v821, %v821
      %v844 = vcombine.high %v828, %v828
      %v845 = vcombine.high %v835, %v835
      %v846 = vcombine.high %v842, %v842
      %v847 = vlaneseq
      %v848 = vshrl.u32 %v847, 7
      %v849 = vsub.s32 0, %v848
      %v850 = vrot.slane %v821, %v849
      %v851 = vlaneseq
      %v852 = vshrl.u32 %v851, 7
      %v853 = vsub.s32 0, %v852
      %v854 = vrot.slane %v835, %v853
      %v855 = vlaneseq
      %v856 = vshrl.u32 %v855, 7
      %v857 = vsub.s32 0, %v856
      %v858 = vrot.slane %v843, %v857
      %v859 = vlaneseq
      %v860 = vshrl.u32 %v859, 7
      %v861 = vsub.s32 0, %v860
      %v862 = vrot.slane %v845, %v861
      %v863 = vlaneseq
      %v864 = vshrl.u32 %v863, 7
      %v865 = vsub.s32 0, %v864
      %v866 = vrot.slane %v828, %v865
      %v867 = vlaneseq
      %v868 = vshrl.u32 %v867, 7
      %v869 = vsub.s32 0, %v868
      %v870 = vrot.slane %v842, %v869
      %v871 = vlaneseq
      %v872 = vshrl.u32 %v871, 7
      %v873 = vsub.s32 0, %v872
      %v874 = vrot.slane %v844, %v873
      %v875 = vlaneseq
      %v876 = vshrl.u32 %v875, 7
      %v877 = vsub.s32 0, %v876
      %v878 = vrot.slane %v846, %v877
      %v887 = vmul.f32 %v850, %v796
      %v888 = vmul.f32 %v854, %v796
      %v889 = vmul.f32 %v858, %v796
      %v890 = vmul.f32 %v862, %v796
      %v891 = vmul.f32 %v866, %v796
      %v892 = vmul.f32 %v870, %v796
      %v893 = vmul.f32 %v874, %v796
      %v894 = vmul.f32 %v878, %v796
      %v895 = vadd.f32 %v788, %v887
      %v896 = vadd.f32 %v789, %v888
      %v897 = vadd.f32 %v790, %v889
      %v898 = vadd.f32 %v791, %v890
      %v899 = vadd.f32 %v792, %v891
      %v900 = vadd.f32 %v793, %v892
      %v901 = vadd.f32 %v794, %v893
      %v902 = vadd.f32 %v795, %v894
      %v903 = vld [vmem:[%s400 + $0x18] sm:$0xff]
      %v905 = vcombine.high %v903, %v903
      %v907 = vunpack.c.l.s4 1966171168
      %v908 = vunpack.c.0.s8 %v907
      %v909 = vlaneseq
      %v910 = vshrl.u32 %v909, 7
      %v911 = vsub.s32 %v908, %v910
      %v912 = vrot.slane %v903, %v911
      %v914 = vunpack.c.l.s4 1966171168
      %v915 = vunpack.c.0.s8 %v914
      %v916 = vlaneseq
      %v917 = vshrl.u32 %v916, 7
      %v918 = vsub.s32 %v915, %v917
      %v919 = vrot.slane %v905, %v918
      %v920 = vcombine.high %v912, %v912
      %v921 = vcombine.high %v919, %v919
      %v923 = vunpack.c.l.s4 1966171168
      %v924 = vunpack.c.0.s8 %v923
      %v925 = vlaneseq
      %v926 = vshrl.u32 %v925, 7
      %v927 = vsub.s32 %v924, %v926
      %v928 = vrot.slane %v912, %v927
      %v930 = vunpack.c.l.s4 1966171168
      %v931 = vunpack.c.0.s8 %v930
      %v932 = vlaneseq
      %v933 = vshrl.u32 %v932, 7
      %v934 = vsub.s32 %v931, %v933
      %v935 = vrot.slane %v919, %v934
      %v937 = vunpack.c.l.s4 1966171168
      %v938 = vunpack.c.0.s8 %v937
      %v939 = vlaneseq
      %v940 = vshrl.u32 %v939, 7
      %v941 = vsub.s32 %v938, %v940
      %v942 = vrot.slane %v920, %v941
      %v944 = vunpack.c.l.s4 1966171168
      %v945 = vunpack.c.0.s8 %v944
      %v946 = vlaneseq
      %v947 = vshrl.u32 %v946, 7
      %v948 = vsub.s32 %v945, %v947
      %v949 = vrot.slane %v921, %v948
      %v950 = vcombine.high %v928, %v928
      %v951 = vcombine.high %v935, %v935
      %v952 = vcombine.high %v942, %v942
      %v953 = vcombine.high %v949, %v949
      %v954 = vlaneseq
      %v955 = vshrl.u32 %v954, 7
      %v956 = vsub.s32 0, %v955
      %v957 = vrot.slane %v928, %v956
      %v958 = vlaneseq
      %v959 = vshrl.u32 %v958, 7
      %v960 = vsub.s32 0, %v959
      %v961 = vrot.slane %v942, %v960
      %v962 = vlaneseq
      %v963 = vshrl.u32 %v962, 7
      %v964 = vsub.s32 0, %v963
      %v965 = vrot.slane %v950, %v964
      %v966 = vlaneseq
      %v967 = vshrl.u32 %v966, 7
      %v968 = vsub.s32 0, %v967
      %v969 = vrot.slane %v952, %v968
      %v970 = vlaneseq
      %v971 = vshrl.u32 %v970, 7
      %v972 = vsub.s32 0, %v971
      %v973 = vrot.slane %v935, %v972
      %v974 = vlaneseq
      %v975 = vshrl.u32 %v974, 7
      %v976 = vsub.s32 0, %v975
      %v977 = vrot.slane %v949, %v976
      %v978 = vlaneseq
      %v979 = vshrl.u32 %v978, 7
      %v980 = vsub.s32 0, %v979
      %v981 = vrot.slane %v951, %v980
      %v982 = vlaneseq
      %v983 = vshrl.u32 %v982, 7
      %v984 = vsub.s32 0, %v983
      %v985 = vrot.slane %v953, %v984
      %v994 = vmul.f32 %v957, %v903
      %v995 = vmul.f32 %v961, %v903
      %v996 = vmul.f32 %v965, %v903
      %v997 = vmul.f32 %v969, %v903
      %v998 = vmul.f32 %v973, %v903
      %v999 = vmul.f32 %v977, %v903
      %v1000 = vmul.f32 %v981, %v903
      %v1001 = vmul.f32 %v985, %v903
      %v1002 = vadd.f32 %v895, %v994
      %v1003 = vadd.f32 %v896, %v995
      %v1004 = vadd.f32 %v897, %v996
      %v1005 = vadd.f32 %v898, %v997
      %v1006 = vadd.f32 %v899, %v998
      %v1007 = vadd.f32 %v900, %v999
      %v1008 = vadd.f32 %v901, %v1000
      %v1009 = vadd.f32 %v902, %v1001
      %v1010 = vld [vmem:[%s400 + $0x20] sm:$0xff]
      %v1012 = vcombine.high %v1010, %v1010
      %v1014 = vunpack.c.l.s4 1966171168
      %v1015 = vunpack.c.0.s8 %v1014
      %v1016 = vlaneseq
      %v1017 = vshrl.u32 %v1016, 7
      %v1018 = vsub.s32 %v1015, %v1017
      %v1019 = vrot.slane %v1010, %v1018
      %v1021 = vunpack.c.l.s4 1966171168
      %v1022 = vunpack.c.0.s8 %v1021
      %v1023 = vlaneseq
      %v1024 = vshrl.u32 %v1023, 7
      %v1025 = vsub.s32 %v1022, %v1024
      %v1026 = vrot.slane %v1012, %v1025
      %v1027 = vcombine.high %v1019, %v1019
      %v1028 = vcombine.high %v1026, %v1026
      %v1030 = vunpack.c.l.s4 1966171168
      %v1031 = vunpack.c.0.s8 %v1030
      %v1032 = vlaneseq
      %v1033 = vshrl.u32 %v1032, 7
      %v1034 = vsub.s32 %v1031, %v1033
      %v1035 = vrot.slane %v1019, %v1034
      %v1037 = vunpack.c.l.s4 1966171168
      %v1038 = vunpack.c.0.s8 %v1037
      %v1039 = vlaneseq
      %v1040 = vshrl.u32 %v1039, 7
      %v1041 = vsub.s32 %v1038, %v1040
      %v1042 = vrot.slane %v1026, %v1041
      %v1044 = vunpack.c.l.s4 1966171168
      %v1045 = vunpack.c.0.s8 %v1044
      %v1046 = vlaneseq
      %v1047 = vshrl.u32 %v1046, 7
      %v1048 = vsub.s32 %v1045, %v1047
      %v1049 = vrot.slane %v1027, %v1048
      %v1051 = vunpack.c.l.s4 1966171168
      %v1052 = vunpack.c.0.s8 %v1051
      %v1053 = vlaneseq
      %v1054 = vshrl.u32 %v1053, 7
      %v1055 = vsub.s32 %v1052, %v1054
      %v1056 = vrot.slane %v1028, %v1055
      %v1057 = vcombine.high %v1035, %v1035
      %v1058 = vcombine.high %v1042, %v1042
      %v1059 = vcombine.high %v1049, %v1049
      %v1060 = vcombine.high %v1056, %v1056
      %v1061 = vlaneseq
      %v1062 = vshrl.u32 %v1061, 7
      %v1063 = vsub.s32 0, %v1062
      %v1064 = vrot.slane %v1035, %v1063
      %v1065 = vlaneseq
      %v1066 = vshrl.u32 %v1065, 7
      %v1067 = vsub.s32 0, %v1066
      %v1068 = vrot.slane %v1049, %v1067
      %v1069 = vlaneseq
      %v1070 = vshrl.u32 %v1069, 7
      %v1071 = vsub.s32 0, %v1070
      %v1072 = vrot.slane %v1057, %v1071
      %v1073 = vlaneseq
      %v1074 = vshrl.u32 %v1073, 7
      %v1075 = vsub.s32 0, %v1074
      %v1076 = vrot.slane %v1059, %v1075
      %v1077 = vlaneseq
      %v1078 = vshrl.u32 %v1077, 7
      %v1079 = vsub.s32 0, %v1078
      %v1080 = vrot.slane %v1042, %v1079
      %v1081 = vlaneseq
      %v1082 = vshrl.u32 %v1081, 7
      %v1083 = vsub.s32 0, %v1082
      %v1084 = vrot.slane %v1056, %v1083
      %v1085 = vlaneseq
      %v1086 = vshrl.u32 %v1085, 7
      %v1087 = vsub.s32 0, %v1086
      %v1088 = vrot.slane %v1058, %v1087
      %v1089 = vlaneseq
      %v1090 = vshrl.u32 %v1089, 7
      %v1091 = vsub.s32 0, %v1090
      %v1092 = vrot.slane %v1060, %v1091
      %v1101 = vmul.f32 %v1064, %v1010
      %v1102 = vmul.f32 %v1068, %v1010
      %v1103 = vmul.f32 %v1072, %v1010
      %v1104 = vmul.f32 %v1076, %v1010
      %v1105 = vmul.f32 %v1080, %v1010
      %v1106 = vmul.f32 %v1084, %v1010
      %v1107 = vmul.f32 %v1088, %v1010
      %v1108 = vmul.f32 %v1092, %v1010
      %v1109 = vadd.f32 %v1002, %v1101
      %v1110 = vadd.f32 %v1003, %v1102
      %v1111 = vadd.f32 %v1004, %v1103
      %v1112 = vadd.f32 %v1005, %v1104
      %v1113 = vadd.f32 %v1006, %v1105
      %v1114 = vadd.f32 %v1007, %v1106
      %v1115 = vadd.f32 %v1008, %v1107
      %v1116 = vadd.f32 %v1009, %v1108
      %v1117 = vld [vmem:[%s400 + $0x28] sm:$0xff]
      %v1119 = vcombine.high %v1117, %v1117
      %v1121 = vunpack.c.l.s4 1966171168
      %v1122 = vunpack.c.0.s8 %v1121
      %v1123 = vlaneseq
      %v1124 = vshrl.u32 %v1123, 7
      %v1125 = vsub.s32 %v1122, %v1124
      %v1126 = vrot.slane %v1117, %v1125
      %v1128 = vunpack.c.l.s4 1966171168
      %v1129 = vunpack.c.0.s8 %v1128
      %v1130 = vlaneseq
      %v1131 = vshrl.u32 %v1130, 7
      %v1132 = vsub.s32 %v1129, %v1131
      %v1133 = vrot.slane %v1119, %v1132
      %v1134 = vcombine.high %v1126, %v1126
      %v1135 = vcombine.high %v1133, %v1133
      %v1137 = vunpack.c.l.s4 1966171168
      %v1138 = vunpack.c.0.s8 %v1137
      %v1139 = vlaneseq
      %v1140 = vshrl.u32 %v1139, 7
      %v1141 = vsub.s32 %v1138, %v1140
      %v1142 = vrot.slane %v1126, %v1141
      %v1144 = vunpack.c.l.s4 1966171168
      %v1145 = vunpack.c.0.s8 %v1144
      %v1146 = vlaneseq
      %v1147 = vshrl.u32 %v1146, 7
      %v1148 = vsub.s32 %v1145, %v1147
      %v1149 = vrot.slane %v1133, %v1148
      %v1151 = vunpack.c.l.s4 1966171168
      %v1152 = vunpack.c.0.s8 %v1151
      %v1153 = vlaneseq
      %v1154 = vshrl.u32 %v1153, 7
      %v1155 = vsub.s32 %v1152, %v1154
      %v1156 = vrot.slane %v1134, %v1155
      %v1158 = vunpack.c.l.s4 1966171168
      %v1159 = vunpack.c.0.s8 %v1158
      %v1160 = vlaneseq
      %v1161 = vshrl.u32 %v1160, 7
      %v1162 = vsub.s32 %v1159, %v1161
      %v1163 = vrot.slane %v1135, %v1162
      %v1164 = vcombine.high %v1142, %v1142
      %v1165 = vcombine.high %v1149, %v1149
      %v1166 = vcombine.high %v1156, %v1156
      %v1167 = vcombine.high %v1163, %v1163
      %v1168 = vlaneseq
      %v1169 = vshrl.u32 %v1168, 7
      %v1170 = vsub.s32 0, %v1169
      %v1171 = vrot.slane %v1142, %v1170
      %v1172 = vlaneseq
      %v1173 = vshrl.u32 %v1172, 7
      %v1174 = vsub.s32 0, %v1173
      %v1175 = vrot.slane %v1156, %v1174
      %v1176 = vlaneseq
      %v1177 = vshrl.u32 %v1176, 7
      %v1178 = vsub.s32 0, %v1177
      %v1179 = vrot.slane %v1164, %v1178
      %v1180 = vlaneseq
      %v1181 = vshrl.u32 %v1180, 7
      %v1182 = vsub.s32 0, %v1181
      %v1183 = vrot.slane %v1166, %v1182
      %v1184 = vlaneseq
      %v1185 = vshrl.u32 %v1184, 7
      %v1186 = vsub.s32 0, %v1185
      %v1187 = vrot.slane %v1149, %v1186
      %v1188 = vlaneseq
      %v1189 = vshrl.u32 %v1188, 7
      %v1190 = vsub.s32 0, %v1189
      %v1191 = vrot.slane %v1163, %v1190
      %v1192 = vlaneseq
      %v1193 = vshrl.u32 %v1192, 7
      %v1194 = vsub.s32 0, %v1193
      %v1195 = vrot.slane %v1165, %v1194
      %v1196 = vlaneseq
      %v1197 = vshrl.u32 %v1196, 7
      %v1198 = vsub.s32 0, %v1197
      %v1199 = vrot.slane %v1167, %v1198
      %v1208 = vmul.f32 %v1171, %v1117
      %v1209 = vmul.f32 %v1175, %v1117
      %v1210 = vmul.f32 %v1179, %v1117
      %v1211 = vmul.f32 %v1183, %v1117
      %v1212 = vmul.f32 %v1187, %v1117
      %v1213 = vmul.f32 %v1191, %v1117
      %v1214 = vmul.f32 %v1195, %v1117
      %v1215 = vmul.f32 %v1199, %v1117
      %v1216 = vadd.f32 %v1109, %v1208
      %v1217 = vadd.f32 %v1110, %v1209
      %v1218 = vadd.f32 %v1111, %v1210
      %v1219 = vadd.f32 %v1112, %v1211
      %v1220 = vadd.f32 %v1113, %v1212
      %v1221 = vadd.f32 %v1114, %v1213
      %v1222 = vadd.f32 %v1115, %v1214
      %v1223 = vadd.f32 %v1116, %v1215
      %v1224 = vld [vmem:[%s400 + $0x30] sm:$0xff]
      %v1226 = vcombine.high %v1224, %v1224
      %v1228 = vunpack.c.l.s4 1966171168
      %v1229 = vunpack.c.0.s8 %v1228
      %v1230 = vlaneseq
      %v1231 = vshrl.u32 %v1230, 7
      %v1232 = vsub.s32 %v1229, %v1231
      %v1233 = vrot.slane %v1224, %v1232
      %v1235 = vunpack.c.l.s4 1966171168
      %v1236 = vunpack.c.0.s8 %v1235
      %v1237 = vlaneseq
      %v1238 = vshrl.u32 %v1237, 7
      %v1239 = vsub.s32 %v1236, %v1238
      %v1240 = vrot.slane %v1226, %v1239
      %v1241 = vcombine.high %v1233, %v1233
      %v1242 = vcombine.high %v1240, %v1240
      %v1244 = vunpack.c.l.s4 1966171168
      %v1245 = vunpack.c.0.s8 %v1244
      %v1246 = vlaneseq
      %v1247 = vshrl.u32 %v1246, 7
      %v1248 = vsub.s32 %v1245, %v1247
      %v1249 = vrot.slane %v1233, %v1248
      %v1251 = vunpack.c.l.s4 1966171168
      %v1252 = vunpack.c.0.s8 %v1251
      %v1253 = vlaneseq
      %v1254 = vshrl.u32 %v1253, 7
      %v1255 = vsub.s32 %v1252, %v1254
      %v1256 = vrot.slane %v1240, %v1255
      %v1258 = vunpack.c.l.s4 1966171168
      %v1259 = vunpack.c.0.s8 %v1258
      %v1260 = vlaneseq
      %v1261 = vshrl.u32 %v1260, 7
      %v1262 = vsub.s32 %v1259, %v1261
      %v1263 = vrot.slane %v1241, %v1262
      %v1265 = vunpack.c.l.s4 1966171168
      %v1266 = vunpack.c.0.s8 %v1265
      %v1267 = vlaneseq
      %v1268 = vshrl.u32 %v1267, 7
      %v1269 = vsub.s32 %v1266, %v1268
      %v1270 = vrot.slane %v1242, %v1269
      %v1271 = vcombine.high %v1249, %v1249
      %v1272 = vcombine.high %v1256, %v1256
      %v1273 = vcombine.high %v1263, %v1263
      %v1274 = vcombine.high %v1270, %v1270
      %v1275 = vlaneseq
      %v1276 = vshrl.u32 %v1275, 7
      %v1277 = vsub.s32 0, %v1276
      %v1278 = vrot.slane %v1249, %v1277
      %v1279 = vlaneseq
      %v1280 = vshrl.u32 %v1279, 7
      %v1281 = vsub.s32 0, %v1280
      %v1282 = vrot.slane %v1263, %v1281
      %v1283 = vlaneseq
      %v1284 = vshrl.u32 %v1283, 7
      %v1285 = vsub.s32 0, %v1284
      %v1286 = vrot.slane %v1271, %v1285
      %v1287 = vlaneseq
      %v1288 = vshrl.u32 %v1287, 7
      %v1289 = vsub.s32 0, %v1288
      %v1290 = vrot.slane %v1273, %v1289
      %v1291 = vlaneseq
      %v1292 = vshrl.u32 %v1291, 7
      %v1293 = vsub.s32 0, %v1292
      %v1294 = vrot.slane %v1256, %v1293
      %v1295 = vlaneseq
      %v1296 = vshrl.u32 %v1295, 7
      %v1297 = vsub.s32 0, %v1296
      %v1298 = vrot.slane %v1270, %v1297
      %v1299 = vlaneseq
      %v1300 = vshrl.u32 %v1299, 7
      %v1301 = vsub.s32 0, %v1300
      %v1302 = vrot.slane %v1272, %v1301
      %v1303 = vlaneseq
      %v1304 = vshrl.u32 %v1303, 7
      %v1305 = vsub.s32 0, %v1304
      %v1306 = vrot.slane %v1274, %v1305
      %v1315 = vmul.f32 %v1278, %v1224
      %v1316 = vmul.f32 %v1282, %v1224
      %v1317 = vmul.f32 %v1286, %v1224
      %v1318 = vmul.f32 %v1290, %v1224
      %v1319 = vmul.f32 %v1294, %v1224
      %v1320 = vmul.f32 %v1298, %v1224
      %v1321 = vmul.f32 %v1302, %v1224
      %v1322 = vmul.f32 %v1306, %v1224
      %v1323 = vadd.f32 %v1216, %v1315
      %v1324 = vadd.f32 %v1217, %v1316
      %v1325 = vadd.f32 %v1218, %v1317
      %v1326 = vadd.f32 %v1219, %v1318
      %v1327 = vadd.f32 %v1220, %v1319
      %v1328 = vadd.f32 %v1221, %v1320
      %v1329 = vadd.f32 %v1222, %v1321
      %v1330 = vadd.f32 %v1223, %v1322
      %v1331 = vld [vmem:[%s400 + $0x38] sm:$0xff]
      %v1333 = vcombine.high %v1331, %v1331
      %v1335 = vunpack.c.l.s4 1966171168
      %v1336 = vunpack.c.0.s8 %v1335
      %v1337 = vlaneseq
      %v1338 = vshrl.u32 %v1337, 7
      %v1339 = vsub.s32 %v1336, %v1338
      %v1340 = vrot.slane %v1331, %v1339
      %v1342 = vunpack.c.l.s4 1966171168
      %v1343 = vunpack.c.0.s8 %v1342
      %v1344 = vlaneseq
      %v1345 = vshrl.u32 %v1344, 7
      %v1346 = vsub.s32 %v1343, %v1345
      %v1347 = vrot.slane %v1333, %v1346
      %v1348 = vcombine.high %v1340, %v1340
      %v1349 = vcombine.high %v1347, %v1347
      %v1351 = vunpack.c.l.s4 1966171168
      %v1352 = vunpack.c.0.s8 %v1351
      %v1353 = vlaneseq
      %v1354 = vshrl.u32 %v1353, 7
      %v1355 = vsub.s32 %v1352, %v1354
      %v1356 = vrot.slane %v1340, %v1355
      %v1358 = vunpack.c.l.s4 1966171168
      %v1359 = vunpack.c.0.s8 %v1358
      %v1360 = vlaneseq
      %v1361 = vshrl.u32 %v1360, 7
      %v1362 = vsub.s32 %v1359, %v1361
      %v1363 = vrot.slane %v1347, %v1362
      %v1365 = vunpack.c.l.s4 1966171168
      %v1366 = vunpack.c.0.s8 %v1365
      %v1367 = vlaneseq
      %v1368 = vshrl.u32 %v1367, 7
      %v1369 = vsub.s32 %v1366, %v1368
      %v1370 = vrot.slane %v1348, %v1369
      %v1372 = vunpack.c.l.s4 1966171168
      %v1373 = vunpack.c.0.s8 %v1372
      %v1374 = vlaneseq
      %v1375 = vshrl.u32 %v1374, 7
      %v1376 = vsub.s32 %v1373, %v1375
      %v1377 = vrot.slane %v1349, %v1376
      %v1378 = vcombine.high %v1356, %v1356
      %v1379 = vcombine.high %v1363, %v1363
      %v1380 = vcombine.high %v1370, %v1370
      %v1381 = vcombine.high %v1377, %v1377
      %v1382 = vlaneseq
      %v1383 = vshrl.u32 %v1382, 7
      %v1384 = vsub.s32 0, %v1383
      %v1385 = vrot.slane %v1356, %v1384
      %v1386 = vlaneseq
      %v1387 = vshrl.u32 %v1386, 7
      %v1388 = vsub.s32 0, %v1387
      %v1389 = vrot.slane %v1370, %v1388
      %v1390 = vlaneseq
      %v1391 = vshrl.u32 %v1390, 7
      %v1392 = vsub.s32 0, %v1391
      %v1393 = vrot.slane %v1378, %v1392
      %v1394 = vlaneseq
      %v1395 = vshrl.u32 %v1394, 7
      %v1396 = vsub.s32 0, %v1395
      %v1397 = vrot.slane %v1380, %v1396
      %v1398 = vlaneseq
      %v1399 = vshrl.u32 %v1398, 7
      %v1400 = vsub.s32 0, %v1399
      %v1401 = vrot.slane %v1363, %v1400
      %v1402 = vlaneseq
      %v1403 = vshrl.u32 %v1402, 7
      %v1404 = vsub.s32 0, %v1403
      %v1405 = vrot.slane %v1377, %v1404
      %v1406 = vlaneseq
      %v1407 = vshrl.u32 %v1406, 7
      %v1408 = vsub.s32 0, %v1407
      %v1409 = vrot.slane %v1379, %v1408
      %v1410 = vlaneseq
      %v1411 = vshrl.u32 %v1410, 7
      %v1412 = vsub.s32 0, %v1411
      %v1413 = vrot.slane %v1381, %v1412
      %v1422 = vmul.f32 %v1385, %v1331
      %v1423 = vmul.f32 %v1389, %v1331
      %v1424 = vmul.f32 %v1393, %v1331
      %v1425 = vmul.f32 %v1397, %v1331
      %v1426 = vmul.f32 %v1401, %v1331
      %v1427 = vmul.f32 %v1405, %v1331
      %v1428 = vmul.f32 %v1409, %v1331
      %v1429 = vmul.f32 %v1413, %v1331
      %v1430 = vadd.f32 %v1323, %v1422
      %v1431 = vadd.f32 %v1324, %v1423
      %v1432 = vadd.f32 %v1325, %v1424
      %v1433 = vadd.f32 %v1326, %v1425
      %v1434 = vadd.f32 %v1327, %v1426
      %v1435 = vadd.f32 %v1328, %v1427
      %v1436 = vadd.f32 %v1329, %v1428
      %v1437 = vadd.f32 %v1330, %v1429
      %v1438 = vld [vmem:[%s400 + $0x40] sm:$0xff]
      %v1440 = vcombine.high %v1438, %v1438
      %v1442 = vunpack.c.l.s4 1966171168
      %v1443 = vunpack.c.0.s8 %v1442
      %v1444 = vlaneseq
      %v1445 = vshrl.u32 %v1444, 7
      %v1446 = vsub.s32 %v1443, %v1445
      %v1447 = vrot.slane %v1438, %v1446
      %v1449 = vunpack.c.l.s4 1966171168
      %v1450 = vunpack.c.0.s8 %v1449
      %v1451 = vlaneseq
      %v1452 = vshrl.u32 %v1451, 7
      %v1453 = vsub.s32 %v1450, %v1452
      %v1454 = vrot.slane %v1440, %v1453
      %v1455 = vcombine.high %v1447, %v1447
      %v1456 = vcombine.high %v1454, %v1454
      %v1458 = vunpack.c.l.s4 1966171168
      %v1459 = vunpack.c.0.s8 %v1458
      %v1460 = vlaneseq
      %v1461 = vshrl.u32 %v1460, 7
      %v1462 = vsub.s32 %v1459, %v1461
      %v1463 = vrot.slane %v1447, %v1462
      %v1465 = vunpack.c.l.s4 1966171168
      %v1466 = vunpack.c.0.s8 %v1465
      %v1467 = vlaneseq
      %v1468 = vshrl.u32 %v1467, 7
      %v1469 = vsub.s32 %v1466, %v1468
      %v1470 = vrot.slane %v1454, %v1469
      %v1472 = vunpack.c.l.s4 1966171168
      %v1473 = vunpack.c.0.s8 %v1472
      %v1474 = vlaneseq
      %v1475 = vshrl.u32 %v1474, 7
      %v1476 = vsub.s32 %v1473, %v1475
      %v1477 = vrot.slane %v1455, %v1476
      %v1479 = vunpack.c.l.s4 1966171168
      %v1480 = vunpack.c.0.s8 %v1479
      %v1481 = vlaneseq
      %v1482 = vshrl.u32 %v1481, 7
      %v1483 = vsub.s32 %v1480, %v1482
      %v1484 = vrot.slane %v1456, %v1483
      %v1485 = vcombine.high %v1463, %v1463
      %v1486 = vcombine.high %v1470, %v1470
      %v1487 = vcombine.high %v1477, %v1477
      %v1488 = vcombine.high %v1484, %v1484
      %v1489 = vlaneseq
      %v1490 = vshrl.u32 %v1489, 7
      %v1491 = vsub.s32 0, %v1490
      %v1492 = vrot.slane %v1463, %v1491
      %v1493 = vlaneseq
      %v1494 = vshrl.u32 %v1493, 7
      %v1495 = vsub.s32 0, %v1494
      %v1496 = vrot.slane %v1477, %v1495
      %v1497 = vlaneseq
      %v1498 = vshrl.u32 %v1497, 7
      %v1499 = vsub.s32 0, %v1498
      %v1500 = vrot.slane %v1485, %v1499
      %v1501 = vlaneseq
      %v1502 = vshrl.u32 %v1501, 7
      %v1503 = vsub.s32 0, %v1502
      %v1504 = vrot.slane %v1487, %v1503
      %v1505 = vlaneseq
      %v1506 = vshrl.u32 %v1505, 7
      %v1507 = vsub.s32 0, %v1506
      %v1508 = vrot.slane %v1470, %v1507
      %v1509 = vlaneseq
      %v1510 = vshrl.u32 %v1509, 7
      %v1511 = vsub.s32 0, %v1510
      %v1512 = vrot.slane %v1484, %v1511
      %v1513 = vlaneseq
      %v1514 = vshrl.u32 %v1513, 7
      %v1515 = vsub.s32 0, %v1514
      %v1516 = vrot.slane %v1486, %v1515
      %v1517 = vlaneseq
      %v1518 = vshrl.u32 %v1517, 7
      %v1519 = vsub.s32 0, %v1518
      %v1520 = vrot.slane %v1488, %v1519
      %v1529 = vmul.f32 %v1492, %v1438
      %v1530 = vmul.f32 %v1496, %v1438
      %v1531 = vmul.f32 %v1500, %v1438
      %v1532 = vmul.f32 %v1504, %v1438
      %v1533 = vmul.f32 %v1508, %v1438
      %v1534 = vmul.f32 %v1512, %v1438
      %v1535 = vmul.f32 %v1516, %v1438
      %v1536 = vmul.f32 %v1520, %v1438
      %v1537 = vadd.f32 %v1430, %v1529
      %v1538 = vadd.f32 %v1431, %v1530
      %v1539 = vadd.f32 %v1432, %v1531
      %v1540 = vadd.f32 %v1433, %v1532
      %v1541 = vadd.f32 %v1434, %v1533
      %v1542 = vadd.f32 %v1435, %v1534
      %v1543 = vadd.f32 %v1436, %v1535
      %v1544 = vadd.f32 %v1437, %v1536
      %v1545 = vld [vmem:[%s400 + $0x48] sm:$0xff]
      %v1547 = vcombine.high %v1545, %v1545
      %v1549 = vunpack.c.l.s4 1966171168
      %v1550 = vunpack.c.0.s8 %v1549
      %v1551 = vlaneseq
      %v1552 = vshrl.u32 %v1551, 7
      %v1553 = vsub.s32 %v1550, %v1552
      %v1554 = vrot.slane %v1545, %v1553
      %v1556 = vunpack.c.l.s4 1966171168
      %v1557 = vunpack.c.0.s8 %v1556
      %v1558 = vlaneseq
      %v1559 = vshrl.u32 %v1558, 7
      %v1560 = vsub.s32 %v1557, %v1559
      %v1561 = vrot.slane %v1547, %v1560
      %v1562 = vcombine.high %v1554, %v1554
      %v1563 = vcombine.high %v1561, %v1561
      %v1565 = vunpack.c.l.s4 1966171168
      %v1566 = vunpack.c.0.s8 %v1565
      %v1567 = vlaneseq
      %v1568 = vshrl.u32 %v1567, 7
      %v1569 = vsub.s32 %v1566, %v1568
      %v1570 = vrot.slane %v1554, %v1569
      %v1572 = vunpack.c.l.s4 1966171168
      %v1573 = vunpack.c.0.s8 %v1572
      %v1574 = vlaneseq
      %v1575 = vshrl.u32 %v1574, 7
      %v1576 = vsub.s32 %v1573, %v1575
      %v1577 = vrot.slane %v1561, %v1576
      %v1579 = vunpack.c.l.s4 1966171168
      %v1580 = vunpack.c.0.s8 %v1579
      %v1581 = vlaneseq
      %v1582 = vshrl.u32 %v1581, 7
      %v1583 = vsub.s32 %v1580, %v1582
      %v1584 = vrot.slane %v1562, %v1583
      %v1586 = vunpack.c.l.s4 1966171168
      %v1587 = vunpack.c.0.s8 %v1586
      %v1588 = vlaneseq
      %v1589 = vshrl.u32 %v1588, 7
      %v1590 = vsub.s32 %v1587, %v1589
      %v1591 = vrot.slane %v1563, %v1590
      %v1592 = vcombine.high %v1570, %v1570
      %v1593 = vcombine.high %v1577, %v1577
      %v1594 = vcombine.high %v1584, %v1584
      %v1595 = vcombine.high %v1591, %v1591
      %v1596 = vlaneseq
      %v1597 = vshrl.u32 %v1596, 7
      %v1598 = vsub.s32 0, %v1597
      %v1599 = vrot.slane %v1570, %v1598
      %v1600 = vlaneseq
      %v1601 = vshrl.u32 %v1600, 7
      %v1602 = vsub.s32 0, %v1601
      %v1603 = vrot.slane %v1584, %v1602
      %v1604 = vlaneseq
      %v1605 = vshrl.u32 %v1604, 7
      %v1606 = vsub.s32 0, %v1605
      %v1607 = vrot.slane %v1592, %v1606
      %v1608 = vlaneseq
      %v1609 = vshrl.u32 %v1608, 7
      %v1610 = vsub.s32 0, %v1609
      %v1611 = vrot.slane %v1594, %v1610
      %v1612 = vlaneseq
      %v1613 = vshrl.u32 %v1612, 7
      %v1614 = vsub.s32 0, %v1613
      %v1615 = vrot.slane %v1577, %v1614
      %v1616 = vlaneseq
      %v1617 = vshrl.u32 %v1616, 7
      %v1618 = vsub.s32 0, %v1617
      %v1619 = vrot.slane %v1591, %v1618
      %v1620 = vlaneseq
      %v1621 = vshrl.u32 %v1620, 7
      %v1622 = vsub.s32 0, %v1621
      %v1623 = vrot.slane %v1593, %v1622
      %v1624 = vlaneseq
      %v1625 = vshrl.u32 %v1624, 7
      %v1626 = vsub.s32 0, %v1625
      %v1627 = vrot.slane %v1595, %v1626
      %v1636 = vmul.f32 %v1599, %v1545
      %v1637 = vmul.f32 %v1603, %v1545
      %v1638 = vmul.f32 %v1607, %v1545
      %v1639 = vmul.f32 %v1611, %v1545
      %v1640 = vmul.f32 %v1615, %v1545
      %v1641 = vmul.f32 %v1619, %v1545
      %v1642 = vmul.f32 %v1623, %v1545
      %v1643 = vmul.f32 %v1627, %v1545
      %v1644 = vadd.f32 %v1537, %v1636
      %v1645 = vadd.f32 %v1538, %v1637
      %v1646 = vadd.f32 %v1539, %v1638
      %v1647 = vadd.f32 %v1540, %v1639
      %v1648 = vadd.f32 %v1541, %v1640
      %v1649 = vadd.f32 %v1542, %v1641
      %v1650 = vadd.f32 %v1543, %v1642
      %v1651 = vadd.f32 %v1544, %v1643
      %v1652 = vld [vmem:[%s400 + $0x50] sm:$0xff]
      %v1654 = vcombine.high %v1652, %v1652
      %v1656 = vunpack.c.l.s4 1966171168
      %v1657 = vunpack.c.0.s8 %v1656
      %v1658 = vlaneseq
      %v1659 = vshrl.u32 %v1658, 7
      %v1660 = vsub.s32 %v1657, %v1659
      %v1661 = vrot.slane %v1652, %v1660
      %v1663 = vunpack.c.l.s4 1966171168
      %v1664 = vunpack.c.0.s8 %v1663
      %v1665 = vlaneseq
      %v1666 = vshrl.u32 %v1665, 7
      %v1667 = vsub.s32 %v1664, %v1666
      %v1668 = vrot.slane %v1654, %v1667
      %v1669 = vcombine.high %v1661, %v1661
      %v1670 = vcombine.high %v1668, %v1668
      %v1672 = vunpack.c.l.s4 1966171168
      %v1673 = vunpack.c.0.s8 %v1672
      %v1674 = vlaneseq
      %v1675 = vshrl.u32 %v1674, 7
      %v1676 = vsub.s32 %v1673, %v1675
      %v1677 = vrot.slane %v1661, %v1676
      %v1679 = vunpack.c.l.s4 1966171168
      %v1680 = vunpack.c.0.s8 %v1679
      %v1681 = vlaneseq
      %v1682 = vshrl.u32 %v1681, 7
      %v1683 = vsub.s32 %v1680, %v1682
      %v1684 = vrot.slane %v1668, %v1683
      %v1686 = vunpack.c.l.s4 1966171168
      %v1687 = vunpack.c.0.s8 %v1686
      %v1688 = vlaneseq
      %v1689 = vshrl.u32 %v1688, 7
      %v1690 = vsub.s32 %v1687, %v1689
      %v1691 = vrot.slane %v1669, %v1690
      %v1693 = vunpack.c.l.s4 1966171168
      %v1694 = vunpack.c.0.s8 %v1693
      %v1695 = vlaneseq
      %v1696 = vshrl.u32 %v1695, 7
      %v1697 = vsub.s32 %v1694, %v1696
      %v1698 = vrot.slane %v1670, %v1697
      %v1699 = vcombine.high %v1677, %v1677
      %v1700 = vcombine.high %v1684, %v1684
      %v1701 = vcombine.high %v1691, %v1691
      %v1702 = vcombine.high %v1698, %v1698
      %v1703 = vlaneseq
      %v1704 = vshrl.u32 %v1703, 7
      %v1705 = vsub.s32 0, %v1704
      %v1706 = vrot.slane %v1677, %v1705
      %v1707 = vlaneseq
      %v1708 = vshrl.u32 %v1707, 7
      %v1709 = vsub.s32 0, %v1708
      %v1710 = vrot.slane %v1691, %v1709
      %v1711 = vlaneseq
      %v1712 = vshrl.u32 %v1711, 7
      %v1713 = vsub.s32 0, %v1712
      %v1714 = vrot.slane %v1699, %v1713
      %v1715 = vlaneseq
      %v1716 = vshrl.u32 %v1715, 7
      %v1717 = vsub.s32 0, %v1716
      %v1718 = vrot.slane %v1701, %v1717
      %v1719 = vlaneseq
      %v1720 = vshrl.u32 %v1719, 7
      %v1721 = vsub.s32 0, %v1720
      %v1722 = vrot.slane %v1684, %v1721
      %v1723 = vlaneseq
      %v1724 = vshrl.u32 %v1723, 7
      %v1725 = vsub.s32 0, %v1724
      %v1726 = vrot.slane %v1698, %v1725
      %v1727 = vlaneseq
      %v1728 = vshrl.u32 %v1727, 7
      %v1729 = vsub.s32 0, %v1728
      %v1730 = vrot.slane %v1700, %v1729
      %v1731 = vlaneseq
      %v1732 = vshrl.u32 %v1731, 7
      %v1733 = vsub.s32 0, %v1732
      %v1734 = vrot.slane %v1702, %v1733
      %v1743 = vmul.f32 %v1706, %v1652
      %v1744 = vmul.f32 %v1710, %v1652
      %v1745 = vmul.f32 %v1714, %v1652
      %v1746 = vmul.f32 %v1718, %v1652
      %v1747 = vmul.f32 %v1722, %v1652
      %v1748 = vmul.f32 %v1726, %v1652
      %v1749 = vmul.f32 %v1730, %v1652
      %v1750 = vmul.f32 %v1734, %v1652
      %v1751 = vadd.f32 %v1644, %v1743
      %v1752 = vadd.f32 %v1645, %v1744
      %v1753 = vadd.f32 %v1646, %v1745
      %v1754 = vadd.f32 %v1647, %v1746
      %v1755 = vadd.f32 %v1648, %v1747
      %v1756 = vadd.f32 %v1649, %v1748
      %v1757 = vadd.f32 %v1650, %v1749
      %v1758 = vadd.f32 %v1651, %v1750
      %v1759 = vld [vmem:[%s400 + $0x58] sm:$0xff]
      %v1761 = vcombine.high %v1759, %v1759
      %v1763 = vunpack.c.l.s4 1966171168
      %v1764 = vunpack.c.0.s8 %v1763
      %v1765 = vlaneseq
      %v1766 = vshrl.u32 %v1765, 7
      %v1767 = vsub.s32 %v1764, %v1766
      %v1768 = vrot.slane %v1759, %v1767
      %v1770 = vunpack.c.l.s4 1966171168
      %v1771 = vunpack.c.0.s8 %v1770
      %v1772 = vlaneseq
      %v1773 = vshrl.u32 %v1772, 7
      %v1774 = vsub.s32 %v1771, %v1773
      %v1775 = vrot.slane %v1761, %v1774
      %v1776 = vcombine.high %v1768, %v1768
      %v1777 = vcombine.high %v1775, %v1775
      %v1779 = vunpack.c.l.s4 1966171168
      %v1780 = vunpack.c.0.s8 %v1779
      %v1781 = vlaneseq
      %v1782 = vshrl.u32 %v1781, 7
      %v1783 = vsub.s32 %v1780, %v1782
      %v1784 = vrot.slane %v1768, %v1783
      %v1786 = vunpack.c.l.s4 1966171168
      %v1787 = vunpack.c.0.s8 %v1786
      %v1788 = vlaneseq
      %v1789 = vshrl.u32 %v1788, 7
      %v1790 = vsub.s32 %v1787, %v1789
      %v1791 = vrot.slane %v1775, %v1790
      %v1793 = vunpack.c.l.s4 1966171168
      %v1794 = vunpack.c.0.s8 %v1793
      %v1795 = vlaneseq
      %v1796 = vshrl.u32 %v1795, 7
      %v1797 = vsub.s32 %v1794, %v1796
      %v1798 = vrot.slane %v1776, %v1797
      %v1800 = vunpack.c.l.s4 1966171168
      %v1801 = vunpack.c.0.s8 %v1800
      %v1802 = vlaneseq
      %v1803 = vshrl.u32 %v1802, 7
      %v1804 = vsub.s32 %v1801, %v1803
      %v1805 = vrot.slane %v1777, %v1804
      %v1806 = vcombine.high %v1784, %v1784
      %v1807 = vcombine.high %v1791, %v1791
      %v1808 = vcombine.high %v1798, %v1798
      %v1809 = vcombine.high %v1805, %v1805
      %v1810 = vlaneseq
      %v1811 = vshrl.u32 %v1810, 7
      %v1812 = vsub.s32 0, %v1811
      %v1813 = vrot.slane %v1784, %v1812
      %v1814 = vlaneseq
      %v1815 = vshrl.u32 %v1814, 7
      %v1816 = vsub.s32 0, %v1815
      %v1817 = vrot.slane %v1798, %v1816
      %v1818 = vlaneseq
      %v1819 = vshrl.u32 %v1818, 7
      %v1820 = vsub.s32 0, %v1819
      %v1821 = vrot.slane %v1806, %v1820
      %v1822 = vlaneseq
      %v1823 = vshrl.u32 %v1822, 7
      %v1824 = vsub.s32 0, %v1823
      %v1825 = vrot.slane %v1808, %v1824
      %v1826 = vlaneseq
      %v1827 = vshrl.u32 %v1826, 7
      %v1828 = vsub.s32 0, %v1827
      %v1829 = vrot.slane %v1791, %v1828
      %v1830 = vlaneseq
      %v1831 = vshrl.u32 %v1830, 7
      %v1832 = vsub.s32 0, %v1831
      %v1833 = vrot.slane %v1805, %v1832
      %v1834 = vlaneseq
      %v1835 = vshrl.u32 %v1834, 7
      %v1836 = vsub.s32 0, %v1835
      %v1837 = vrot.slane %v1807, %v1836
      %v1838 = vlaneseq
      %v1839 = vshrl.u32 %v1838, 7
      %v1840 = vsub.s32 0, %v1839
      %v1841 = vrot.slane %v1809, %v1840
      %v1850 = vmul.f32 %v1813, %v1759
      %v1851 = vmul.f32 %v1817, %v1759
      %v1852 = vmul.f32 %v1821, %v1759
      %v1853 = vmul.f32 %v1825, %v1759
      %v1854 = vmul.f32 %v1829, %v1759
      %v1855 = vmul.f32 %v1833, %v1759
      %v1856 = vmul.f32 %v1837, %v1759
      %v1857 = vmul.f32 %v1841, %v1759
      %v1858 = vadd.f32 %v1751, %v1850
      %v1859 = vadd.f32 %v1752, %v1851
      %v1860 = vadd.f32 %v1753, %v1852
      %v1861 = vadd.f32 %v1754, %v1853
      %v1862 = vadd.f32 %v1755, %v1854
      %v1863 = vadd.f32 %v1756, %v1855
      %v1864 = vadd.f32 %v1757, %v1856
      %v1865 = vadd.f32 %v1758, %v1857
      %1866 = vadd.xlane.f32.xlu0 %v1858
      %v1867 = vpop.xlane.xlu0 %1866
      %1868 = vadd.xlane.f32.xlu0 %v1859
      %v1869 = vpop.xlane.xlu0 %1868
      %1870 = vadd.xlane.f32.xlu0 %v1860
      %v1871 = vpop.xlane.xlu0 %1870
      %1872 = vadd.xlane.f32.xlu0 %v1861
      %v1873 = vpop.xlane.xlu0 %1872
      %1874 = vadd.xlane.f32.xlu0 %v1862
      %v1875 = vpop.xlane.xlu0 %1874
      %1876 = vadd.xlane.f32.xlu0 %v1863
      %v1877 = vpop.xlane.xlu0 %1876
      %1878 = vadd.xlane.f32.xlu0 %v1864
      %v1879 = vpop.xlane.xlu0 %1878
      %1880 = vadd.xlane.f32.xlu0 %v1865
      %v1881 = vpop.xlane.xlu0 %1880
      %v1882 = vmax.f32 %v1867, 1e-20
      %v1883 = vmax.f32 %v1869, 1e-20
      %v1884 = vmax.f32 %v1871, 1e-20
      %v1885 = vmax.f32 %v1873, 1e-20
      %v1886 = vmax.f32 %v1875, 1e-20
      %v1887 = vmax.f32 %v1877, 1e-20
      %v1888 = vmax.f32 %v1879, 1e-20
      %v1889 = vmax.f32 %v1881, 1e-20
      %v1890 = vld [vmem:[%s407] sm:$0xff]
      %v1891 = vld [vmem:[%s407 + $0x8] sm:$0xff]
      %v1892 = vld [vmem:[%s407 + $0x10] sm:$0xff]
      %v1893 = vld [vmem:[%s407 + $0x18] sm:$0xff]
      %v1894 = vld [vmem:[%s407 + $0x20] sm:$0xff]
      %v1895 = vld [vmem:[%s407 + $0x28] sm:$0xff]
      %v1896 = vld [vmem:[%s407 + $0x30] sm:$0xff]
      %v1897 = vld [vmem:[%s407 + $0x38] sm:$0xff]
      %v1898 = vld [vmem:[%s407 + $0x40] sm:$0xff]
      %v1899 = vld [vmem:[%s407 + $0x48] sm:$0xff]
      %v1900 = vld [vmem:[%s407 + $0x50] sm:$0xff]
      %v1901 = vld [vmem:[%s407 + $0x58] sm:$0xff]
      %v1902 = vld [vmem:[%s407 + $0x60] sm:$0xff]
      %v1903 = vld [vmem:[%s407 + $0x68] sm:$0xff]
      %v1904 = vld [vmem:[%s407 + $0x70] sm:$0xff]
      %v1905 = vld [vmem:[%s407 + $0x78] sm:$0xff]
      %1906 = vmatprep.subr.mxu0 0.0
      %1907 = vmatpush1.msra.mxu0 %v1890
      %1908 = vmatprep.subr.mxu0 0.0
      %1909 = vmatpush1.msra.mxu0 %v1891
      %1910 = vmatprep.subr.mxu0 0.0
      %1911 = vmatpush1.msra.mxu0 %v1892
      %1912 = vmatprep.subr.mxu0 0.0
      %1913 = vmatpush1.msra.mxu0 %v1893
      %1914 = vmatprep.subr.mxu0 0.0
      %1915 = vmatpush1.msra.mxu0 %v1894
      %1916 = vmatprep.subr.mxu0 0.0
      %1917 = vmatpush1.msra.mxu0 %v1895
      %1918 = vmatprep.subr.mxu0 0.0
      %1919 = vmatpush1.msra.mxu0 %v1896
      %1920 = vmatprep.subr.mxu0 0.0
      %1921 = vmatpush1.msra.mxu0 %v1897
      %1922 = vmatprep.subr.mxu0 0.0
      %1923 = vmatpush1.msra.mxu0 %v1898
      %1924 = vmatprep.subr.mxu0 0.0
      %1925 = vmatpush1.msra.mxu0 %v1899
      %1926 = vmatprep.subr.mxu0 0.0
      %1927 = vmatpush1.msra.mxu0 %v1900
      %1928 = vmatprep.subr.mxu0 0.0
      %1929 = vmatpush1.msra.mxu0 %v1901
      %1930 = vmatprep.subr.mxu0 0.0
      %1931 = vmatpush1.msra.mxu0 %v1902
      %1932 = vmatprep.subr.mxu0 0.0
      %1933 = vmatpush1.msra.mxu0 %v1903
      %1934 = vmatprep.subr.mxu0 0.0
      %1935 = vmatpush1.msra.mxu0 %v1904
      %1936 = vmatprep.subr.mxu0 0.0
      %1937 = vmatpush1.msra.mxu0 %v1905
      %1938 = vmatprep.subr.mxu0 0.0
      %1939 = vmatpush1.msra.mxu0 0.0
      %1940 = vmatprep.subr.mxu0 0.0
      %1941 = vmatpush1.msra.mxu0 0.0
      %1942 = vmatprep.subr.mxu0 0.0
      %1943 = vmatpush1.msra.mxu0 0.0
      %1944 = vmatprep.subr.mxu0 0.0
      %1945 = vmatpush1.msra.mxu0 0.0
      %1946 = vmatprep.subr.mxu0 0.0
      %1947 = vmatpush1.msra.mxu0 0.0
      %1948 = vmatprep.subr.mxu0 0.0
      %1949 = vmatpush1.msra.mxu0 0.0
      %1950 = vmatprep.subr.mxu0 0.0
      %1951 = vmatpush1.msra.mxu0 0.0
      %1952 = vmatprep.subr.mxu0 0.0
      %1953 = vmatpush1.msra.mxu0 0.0
      %1954 = vmatprep.subr.mxu0 0.0
      %1955 = vmatpush1.msra.mxu0 0.0
      %1956 = vmatprep.subr.mxu0 0.0
      %1957 = vmatpush1.msra.mxu0 0.0
      %1958 = vmatprep.subr.mxu0 0.0
      %1959 = vmatpush1.msra.mxu0 0.0
      %1960 = vmatprep.subr.mxu0 0.0
      %1961 = vmatpush1.msra.mxu0 0.0
      %1962 = vmatprep.subr.mxu0 0.0
      %1963 = vmatpush1.msra.mxu0 0.0
      %1964 = vmatprep.subr.mxu0 0.0
      %1965 = vmatpush1.msra.mxu0 0.0
      %1966 = vmatprep.subr.mxu0 0.0
      %1967 = vmatpush1.msra.mxu0 0.0
      %1968 = vmatprep.subr.mxu0 0.0
      %1969 = vmatpush1.msra.mxu0 0.0
      %1970 = vmatprep.mubr.f32.mxu0 0.0
      %1971 = vmatmul.mubr.f32.gmra.mrb[0].mxu0 %v1858
      %v1972 = vpop.f32.mrb[0].mxu0
      %v1973 = vadd.f32 0.0, %v1972
      %v1974 = vpop.f32.mrb[0].mxu0
      %1975 = vmatprep.mubr.f32.mxu0 0.0
      %1976 = vmatmul.mubr.f32.gmra.mrb[0].mxu0 %v1859
      %v1977 = vpop.f32.mrb[0].mxu0
      %v1978 = vadd.f32 0.0, %v1977
      %v1979 = vpop.f32.mrb[0].mxu0
      %1980 = vmatprep.mubr.f32.mxu0 0.0
      %1981 = vmatmul.mubr.f32.gmra.mrb[0].mxu0 %v1860
      %v1982 = vpop.f32.mrb[0].mxu0
      %v1983 = vadd.f32 0.0, %v1982
      %v1984 = vpop.f32.mrb[0].mxu0
      %1985 = vmatprep.mubr.f32.mxu0 0.0
      %1986 = vmatmul.mubr.f32.gmra.mrb[0].mxu0 %v1861
      %v1987 = vpop.f32.mrb[0].mxu0
      %v1988 = vadd.f32 0.0, %v1987
      %v1989 = vpop.f32.mrb[0].mxu0
      %1990 = vmatprep.mubr.f32.mxu0 0.0
      %1991 = vmatmul.mubr.f32.gmra.mrb[0].mxu0 %v1862
      %v1992 = vpop.f32.mrb[0].mxu0
      %v1993 = vadd.f32 0.0, %v1992
      %v1994 = vpop.f32.mrb[0].mxu0
      %1995 = vmatprep.mubr.f32.mxu0 0.0
      %1996 = vmatmul.mubr.f32.gmra.mrb[0].mxu0 %v1863
      %v1997 = vpop.f32.mrb[0].mxu0
      %v1998 = vadd.f32 0.0, %v1997
      %v1999 = vpop.f32.mrb[0].mxu0
      %2000 = vmatprep.mubr.f32.mxu0 0.0
      %2001 = vmatmul.mubr.f32.gmra.mrb[0].mxu0 %v1864
      %v2002 = vpop.f32.mrb[0].mxu0
      %v2003 = vadd.f32 0.0, %v2002
      %v2004 = vpop.f32.mrb[0].mxu0
      %2005 = vmatprep.mubr.f32.mxu0 0.0
      %2006 = vmatmul.mubr.f32.gmra.mrb[0].mxu0 %v1865
      %v2007 = vpop.f32.mrb[0].mxu0
      %v2008 = vadd.f32 0.0, %v2007
      %v2009 = vpop.f32.mrb[0].mxu0
      %2010 = vdwg.mxu0
      %v2011 = vrcp.pop %v1882
      %v2012 = vrcp.pop %v1883
      %v2013 = vrcp.pop %v1884
      %v2014 = vrcp.pop %v1885
      %v2015 = vrcp.pop %v1886
      %v2016 = vrcp.pop %v1887
      %v2017 = vrcp.pop %v1888
      %v2018 = vrcp.pop %v1889
      %v2019 = vmul.f32 %v1973, %v2011
      %v2020 = vmul.f32 %v1978, %v2012
      %v2021 = vmul.f32 %v1983, %v2013
      %v2022 = vmul.f32 %v1988, %v2014
      %v2023 = vmul.f32 %v1993, %v2015
      %v2024 = vmul.f32 %v1998, %v2016
      %v2025 = vmul.f32 %v2003, %v2017
      %v2026 = vmul.f32 %v2008, %v2018
      %v2028 = vcombine.high %v503, %v503
      %v2030 = vunpack.c.l.s4 1966171168
      %v2031 = vunpack.c.0.s8 %v2030
      %v2032 = vlaneseq
      %v2033 = vshrl.u32 %v2032, 7
      %v2034 = vsub.s32 %v2031, %v2033
      %v2035 = vrot.slane %v503, %v2034
      %v2037 = vunpack.c.l.s4 1966171168
      %v2038 = vunpack.c.0.s8 %v2037
      %v2039 = vlaneseq
      %v2040 = vshrl.u32 %v2039, 7
      %v2041 = vsub.s32 %v2038, %v2040
      %v2042 = vrot.slane %v2028, %v2041
      %v2043 = vcombine.high %v2035, %v2035
      %v2044 = vcombine.high %v2042, %v2042
      %v2046 = vunpack.c.l.s4 1966171168
      %v2047 = vunpack.c.0.s8 %v2046
      %v2048 = vlaneseq
      %v2049 = vshrl.u32 %v2048, 7
      %v2050 = vsub.s32 %v2047, %v2049
      %v2051 = vrot.slane %v2035, %v2050
      %v2053 = vunpack.c.l.s4 1966171168
      %v2054 = vunpack.c.0.s8 %v2053
      %v2055 = vlaneseq
      %v2056 = vshrl.u32 %v2055, 7
      %v2057 = vsub.s32 %v2054, %v2056
      %v2058 = vrot.slane %v2042, %v2057
      %v2060 = vunpack.c.l.s4 1966171168
      %v2061 = vunpack.c.0.s8 %v2060
      %v2062 = vlaneseq
      %v2063 = vshrl.u32 %v2062, 7
      %v2064 = vsub.s32 %v2061, %v2063
      %v2065 = vrot.slane %v2043, %v2064
      %v2067 = vunpack.c.l.s4 1966171168
      %v2068 = vunpack.c.0.s8 %v2067
      %v2069 = vlaneseq
      %v2070 = vshrl.u32 %v2069, 7
      %v2071 = vsub.s32 %v2068, %v2070
      %v2072 = vrot.slane %v2044, %v2071
      %v2073 = vcombine.high %v2051, %v2051
      %v2074 = vcombine.high %v2058, %v2058
      %v2075 = vcombine.high %v2065, %v2065
      %v2076 = vcombine.high %v2072, %v2072
      %v2077 = vlaneseq
      %v2078 = vshrl.u32 %v2077, 7
      %v2079 = vsub.s32 0, %v2078
      %v2080 = vrot.slane %v2051, %v2079
      %v2081 = vlaneseq
      %v2082 = vshrl.u32 %v2081, 7
      %v2083 = vsub.s32 0, %v2082
      %v2084 = vrot.slane %v2065, %v2083
      %v2085 = vlaneseq
      %v2086 = vshrl.u32 %v2085, 7
      %v2087 = vsub.s32 0, %v2086
      %v2088 = vrot.slane %v2073, %v2087
      %v2089 = vlaneseq
      %v2090 = vshrl.u32 %v2089, 7
      %v2091 = vsub.s32 0, %v2090
      %v2092 = vrot.slane %v2075, %v2091
      %v2093 = vlaneseq
      %v2094 = vshrl.u32 %v2093, 7
      %v2095 = vsub.s32 0, %v2094
      %v2096 = vrot.slane %v2058, %v2095
      %v2097 = vlaneseq
      %v2098 = vshrl.u32 %v2097, 7
      %v2099 = vsub.s32 0, %v2098
      %v2100 = vrot.slane %v2072, %v2099
      %v2101 = vlaneseq
      %v2102 = vshrl.u32 %v2101, 7
      %v2103 = vsub.s32 0, %v2102
      %v2104 = vrot.slane %v2074, %v2103
      %v2105 = vlaneseq
      %v2106 = vshrl.u32 %v2105, 7
      %v2107 = vsub.s32 0, %v2106
      %v2108 = vrot.slane %v2076, %v2107
      %s2117 = scalar_lea.vmem %s400, 96
      %v2118 = vld [vmem:[%s2117] sm:$0xff]
      %v2120 = vcombine.high %v2118, %v2118
      %v2122 = vunpack.c.l.s4 1966171168
      %v2123 = vunpack.c.0.s8 %v2122
      %v2124 = vlaneseq
      %v2125 = vshrl.u32 %v2124, 7
      %v2126 = vsub.s32 %v2123, %v2125
      %v2127 = vrot.slane %v2118, %v2126
      %v2129 = vunpack.c.l.s4 1966171168
      %v2130 = vunpack.c.0.s8 %v2129
      %v2131 = vlaneseq
      %v2132 = vshrl.u32 %v2131, 7
      %v2133 = vsub.s32 %v2130, %v2132
      %v2134 = vrot.slane %v2120, %v2133
      %v2135 = vcombine.high %v2127, %v2127
      %v2136 = vcombine.high %v2134, %v2134
      %v2138 = vunpack.c.l.s4 1966171168
      %v2139 = vunpack.c.0.s8 %v2138
      %v2140 = vlaneseq
      %v2141 = vshrl.u32 %v2140, 7
      %v2142 = vsub.s32 %v2139, %v2141
      %v2143 = vrot.slane %v2127, %v2142
      %v2145 = vunpack.c.l.s4 1966171168
      %v2146 = vunpack.c.0.s8 %v2145
      %v2147 = vlaneseq
      %v2148 = vshrl.u32 %v2147, 7
      %v2149 = vsub.s32 %v2146, %v2148
      %v2150 = vrot.slane %v2134, %v2149
      %v2152 = vunpack.c.l.s4 1966171168
      %v2153 = vunpack.c.0.s8 %v2152
      %v2154 = vlaneseq
      %v2155 = vshrl.u32 %v2154, 7
      %v2156 = vsub.s32 %v2153, %v2155
      %v2157 = vrot.slane %v2135, %v2156
      %v2159 = vunpack.c.l.s4 1966171168
      %v2160 = vunpack.c.0.s8 %v2159
      %v2161 = vlaneseq
      %v2162 = vshrl.u32 %v2161, 7
      %v2163 = vsub.s32 %v2160, %v2162
      %v2164 = vrot.slane %v2136, %v2163
      %v2165 = vcombine.high %v2143, %v2143
      %v2166 = vcombine.high %v2150, %v2150
      %v2167 = vcombine.high %v2157, %v2157
      %v2168 = vcombine.high %v2164, %v2164
      %v2169 = vlaneseq
      %v2170 = vshrl.u32 %v2169, 7
      %v2171 = vsub.s32 0, %v2170
      %v2172 = vrot.slane %v2143, %v2171
      %v2173 = vlaneseq
      %v2174 = vshrl.u32 %v2173, 7
      %v2175 = vsub.s32 0, %v2174
      %v2176 = vrot.slane %v2157, %v2175
      %v2177 = vlaneseq
      %v2178 = vshrl.u32 %v2177, 7
      %v2179 = vsub.s32 0, %v2178
      %v2180 = vrot.slane %v2165, %v2179
      %v2181 = vlaneseq
      %v2182 = vshrl.u32 %v2181, 7
      %v2183 = vsub.s32 0, %v2182
      %v2184 = vrot.slane %v2167, %v2183
      %v2185 = vlaneseq
      %v2186 = vshrl.u32 %v2185, 7
      %v2187 = vsub.s32 0, %v2186
      %v2188 = vrot.slane %v2150, %v2187
      %v2189 = vlaneseq
      %v2190 = vshrl.u32 %v2189, 7
      %v2191 = vsub.s32 0, %v2190
      %v2192 = vrot.slane %v2164, %v2191
      %v2193 = vlaneseq
      %v2194 = vshrl.u32 %v2193, 7
      %v2195 = vsub.s32 0, %v2194
      %v2196 = vrot.slane %v2166, %v2195
      %v2197 = vlaneseq
      %v2198 = vshrl.u32 %v2197, 7
      %v2199 = vsub.s32 0, %v2198
      %v2200 = vrot.slane %v2168, %v2199
      %v2209 = vmul.f32 %v2172, %v2118
      %v2210 = vmul.f32 %v2176, %v2118
      %v2211 = vmul.f32 %v2180, %v2118
      %v2212 = vmul.f32 %v2184, %v2118
      %v2213 = vmul.f32 %v2188, %v2118
      %v2214 = vmul.f32 %v2192, %v2118
      %v2215 = vmul.f32 %v2196, %v2118
      %v2216 = vmul.f32 %v2200, %v2118
      %v2217 = vld [vmem:[%s2117 + $0x8] sm:$0xff]
      %v2219 = vcombine.high %v2217, %v2217
      %v2221 = vunpack.c.l.s4 1966171168
      %v2222 = vunpack.c.0.s8 %v2221
      %v2223 = vlaneseq
      %v2224 = vshrl.u32 %v2223, 7
      %v2225 = vsub.s32 %v2222, %v2224
      %v2226 = vrot.slane %v2217, %v2225
      %v2228 = vunpack.c.l.s4 1966171168
      %v2229 = vunpack.c.0.s8 %v2228
      %v2230 = vlaneseq
      %v2231 = vshrl.u32 %v2230, 7
      %v2232 = vsub.s32 %v2229, %v2231
      %v2233 = vrot.slane %v2219, %v2232
      %v2234 = vcombine.high %v2226, %v2226
      %v2235 = vcombine.high %v2233, %v2233
      %v2237 = vunpack.c.l.s4 1966171168
      %v2238 = vunpack.c.0.s8 %v2237
      %v2239 = vlaneseq
      %v2240 = vshrl.u32 %v2239, 7
      %v2241 = vsub.s32 %v2238, %v2240
      %v2242 = vrot.slane %v2226, %v2241
      %v2244 = vunpack.c.l.s4 1966171168
      %v2245 = vunpack.c.0.s8 %v2244
      %v2246 = vlaneseq
      %v2247 = vshrl.u32 %v2246, 7
      %v2248 = vsub.s32 %v2245, %v2247
      %v2249 = vrot.slane %v2233, %v2248
      %v2251 = vunpack.c.l.s4 1966171168
      %v2252 = vunpack.c.0.s8 %v2251
      %v2253 = vlaneseq
      %v2254 = vshrl.u32 %v2253, 7
      %v2255 = vsub.s32 %v2252, %v2254
      %v2256 = vrot.slane %v2234, %v2255
      %v2258 = vunpack.c.l.s4 1966171168
      %v2259 = vunpack.c.0.s8 %v2258
      %v2260 = vlaneseq
      %v2261 = vshrl.u32 %v2260, 7
      %v2262 = vsub.s32 %v2259, %v2261
      %v2263 = vrot.slane %v2235, %v2262
      %v2264 = vcombine.high %v2242, %v2242
      %v2265 = vcombine.high %v2249, %v2249
      %v2266 = vcombine.high %v2256, %v2256
      %v2267 = vcombine.high %v2263, %v2263
      %v2268 = vlaneseq
      %v2269 = vshrl.u32 %v2268, 7
      %v2270 = vsub.s32 0, %v2269
      %v2271 = vrot.slane %v2242, %v2270
      %v2272 = vlaneseq
      %v2273 = vshrl.u32 %v2272, 7
      %v2274 = vsub.s32 0, %v2273
      %v2275 = vrot.slane %v2256, %v2274
      %v2276 = vlaneseq
      %v2277 = vshrl.u32 %v2276, 7
      %v2278 = vsub.s32 0, %v2277
      %v2279 = vrot.slane %v2264, %v2278
      %v2280 = vlaneseq
      %v2281 = vshrl.u32 %v2280, 7
      %v2282 = vsub.s32 0, %v2281
      %v2283 = vrot.slane %v2266, %v2282
      %v2284 = vlaneseq
      %v2285 = vshrl.u32 %v2284, 7
      %v2286 = vsub.s32 0, %v2285
      %v2287 = vrot.slane %v2249, %v2286
      %v2288 = vlaneseq
      %v2289 = vshrl.u32 %v2288, 7
      %v2290 = vsub.s32 0, %v2289
      %v2291 = vrot.slane %v2263, %v2290
      %v2292 = vlaneseq
      %v2293 = vshrl.u32 %v2292, 7
      %v2294 = vsub.s32 0, %v2293
      %v2295 = vrot.slane %v2265, %v2294
      %v2296 = vlaneseq
      %v2297 = vshrl.u32 %v2296, 7
      %v2298 = vsub.s32 0, %v2297
      %v2299 = vrot.slane %v2267, %v2298
      %v2308 = vmul.f32 %v2271, %v2217
      %v2309 = vmul.f32 %v2275, %v2217
      %v2310 = vmul.f32 %v2279, %v2217
      %v2311 = vmul.f32 %v2283, %v2217
      %v2312 = vmul.f32 %v2287, %v2217
      %v2313 = vmul.f32 %v2291, %v2217
      %v2314 = vmul.f32 %v2295, %v2217
      %v2315 = vmul.f32 %v2299, %v2217
      %v2316 = vadd.f32 %v2209, %v2308
      %v2317 = vadd.f32 %v2210, %v2309
      %v2318 = vadd.f32 %v2211, %v2310
      %v2319 = vadd.f32 %v2212, %v2311
      %v2320 = vadd.f32 %v2213, %v2312
      %v2321 = vadd.f32 %v2214, %v2313
      %v2322 = vadd.f32 %v2215, %v2314
      %v2323 = vadd.f32 %v2216, %v2315
      %v2324 = vld [vmem:[%s2117 + $0x10] sm:$0xff]
      %v2326 = vcombine.high %v2324, %v2324
      %v2328 = vunpack.c.l.s4 1966171168
      %v2329 = vunpack.c.0.s8 %v2328
      %v2330 = vlaneseq
      %v2331 = vshrl.u32 %v2330, 7
      %v2332 = vsub.s32 %v2329, %v2331
      %v2333 = vrot.slane %v2324, %v2332
      %v2335 = vunpack.c.l.s4 1966171168
      %v2336 = vunpack.c.0.s8 %v2335
      %v2337 = vlaneseq
      %v2338 = vshrl.u32 %v2337, 7
      %v2339 = vsub.s32 %v2336, %v2338
      %v2340 = vrot.slane %v2326, %v2339
      %v2341 = vcombine.high %v2333, %v2333
      %v2342 = vcombine.high %v2340, %v2340
      %v2344 = vunpack.c.l.s4 1966171168
      %v2345 = vunpack.c.0.s8 %v2344
      %v2346 = vlaneseq
      %v2347 = vshrl.u32 %v2346, 7
      %v2348 = vsub.s32 %v2345, %v2347
      %v2349 = vrot.slane %v2333, %v2348
      %v2351 = vunpack.c.l.s4 1966171168
      %v2352 = vunpack.c.0.s8 %v2351
      %v2353 = vlaneseq
      %v2354 = vshrl.u32 %v2353, 7
      %v2355 = vsub.s32 %v2352, %v2354
      %v2356 = vrot.slane %v2340, %v2355
      %v2358 = vunpack.c.l.s4 1966171168
      %v2359 = vunpack.c.0.s8 %v2358
      %v2360 = vlaneseq
      %v2361 = vshrl.u32 %v2360, 7
      %v2362 = vsub.s32 %v2359, %v2361
      %v2363 = vrot.slane %v2341, %v2362
      %v2365 = vunpack.c.l.s4 1966171168
      %v2366 = vunpack.c.0.s8 %v2365
      %v2367 = vlaneseq
      %v2368 = vshrl.u32 %v2367, 7
      %v2369 = vsub.s32 %v2366, %v2368
      %v2370 = vrot.slane %v2342, %v2369
      %v2371 = vcombine.high %v2349, %v2349
      %v2372 = vcombine.high %v2356, %v2356
      %v2373 = vcombine.high %v2363, %v2363
      %v2374 = vcombine.high %v2370, %v2370
      %v2375 = vlaneseq
      %v2376 = vshrl.u32 %v2375, 7
      %v2377 = vsub.s32 0, %v2376
      %v2378 = vrot.slane %v2349, %v2377
      %v2379 = vlaneseq
      %v2380 = vshrl.u32 %v2379, 7
      %v2381 = vsub.s32 0, %v2380
      %v2382 = vrot.slane %v2363, %v2381
      %v2383 = vlaneseq
      %v2384 = vshrl.u32 %v2383, 7
      %v2385 = vsub.s32 0, %v2384
      %v2386 = vrot.slane %v2371, %v2385
      %v2387 = vlaneseq
      %v2388 = vshrl.u32 %v2387, 7
      %v2389 = vsub.s32 0, %v2388
      %v2390 = vrot.slane %v2373, %v2389
      %v2391 = vlaneseq
      %v2392 = vshrl.u32 %v2391, 7
      %v2393 = vsub.s32 0, %v2392
      %v2394 = vrot.slane %v2356, %v2393
      %v2395 = vlaneseq
      %v2396 = vshrl.u32 %v2395, 7
      %v2397 = vsub.s32 0, %v2396
      %v2398 = vrot.slane %v2370, %v2397
      %v2399 = vlaneseq
      %v2400 = vshrl.u32 %v2399, 7
      %v2401 = vsub.s32 0, %v2400
      %v2402 = vrot.slane %v2372, %v2401
      %v2403 = vlaneseq
      %v2404 = vshrl.u32 %v2403, 7
      %v2405 = vsub.s32 0, %v2404
      %v2406 = vrot.slane %v2374, %v2405
      %v2415 = vmul.f32 %v2378, %v2324
      %v2416 = vmul.f32 %v2382, %v2324
      %v2417 = vmul.f32 %v2386, %v2324
      %v2418 = vmul.f32 %v2390, %v2324
      %v2419 = vmul.f32 %v2394, %v2324
      %v2420 = vmul.f32 %v2398, %v2324
      %v2421 = vmul.f32 %v2402, %v2324
      %v2422 = vmul.f32 %v2406, %v2324
      %v2423 = vadd.f32 %v2316, %v2415
      %v2424 = vadd.f32 %v2317, %v2416
      %v2425 = vadd.f32 %v2318, %v2417
      %v2426 = vadd.f32 %v2319, %v2418
      %v2427 = vadd.f32 %v2320, %v2419
      %v2428 = vadd.f32 %v2321, %v2420
      %v2429 = vadd.f32 %v2322, %v2421
      %v2430 = vadd.f32 %v2323, %v2422
      %v2431 = vld [vmem:[%s2117 + $0x18] sm:$0xff]
      %v2433 = vcombine.high %v2431, %v2431
      %v2435 = vunpack.c.l.s4 1966171168
      %v2436 = vunpack.c.0.s8 %v2435
      %v2437 = vlaneseq
      %v2438 = vshrl.u32 %v2437, 7
      %v2439 = vsub.s32 %v2436, %v2438
      %v2440 = vrot.slane %v2431, %v2439
      %v2442 = vunpack.c.l.s4 1966171168
      %v2443 = vunpack.c.0.s8 %v2442
      %v2444 = vlaneseq
      %v2445 = vshrl.u32 %v2444, 7
      %v2446 = vsub.s32 %v2443, %v2445
      %v2447 = vrot.slane %v2433, %v2446
      %v2448 = vcombine.high %v2440, %v2440
      %v2449 = vcombine.high %v2447, %v2447
      %v2451 = vunpack.c.l.s4 1966171168
      %v2452 = vunpack.c.0.s8 %v2451
      %v2453 = vlaneseq
      %v2454 = vshrl.u32 %v2453, 7
      %v2455 = vsub.s32 %v2452, %v2454
      %v2456 = vrot.slane %v2440, %v2455
      %v2458 = vunpack.c.l.s4 1966171168
      %v2459 = vunpack.c.0.s8 %v2458
      %v2460 = vlaneseq
      %v2461 = vshrl.u32 %v2460, 7
      %v2462 = vsub.s32 %v2459, %v2461
      %v2463 = vrot.slane %v2447, %v2462
      %v2465 = vunpack.c.l.s4 1966171168
      %v2466 = vunpack.c.0.s8 %v2465
      %v2467 = vlaneseq
      %v2468 = vshrl.u32 %v2467, 7
      %v2469 = vsub.s32 %v2466, %v2468
      %v2470 = vrot.slane %v2448, %v2469
      %v2472 = vunpack.c.l.s4 1966171168
      %v2473 = vunpack.c.0.s8 %v2472
      %v2474 = vlaneseq
      %v2475 = vshrl.u32 %v2474, 7
      %v2476 = vsub.s32 %v2473, %v2475
      %v2477 = vrot.slane %v2449, %v2476
      %v2478 = vcombine.high %v2456, %v2456
      %v2479 = vcombine.high %v2463, %v2463
      %v2480 = vcombine.high %v2470, %v2470
      %v2481 = vcombine.high %v2477, %v2477
      %v2482 = vlaneseq
      %v2483 = vshrl.u32 %v2482, 7
      %v2484 = vsub.s32 0, %v2483
      %v2485 = vrot.slane %v2456, %v2484
      %v2486 = vlaneseq
      %v2487 = vshrl.u32 %v2486, 7
      %v2488 = vsub.s32 0, %v2487
      %v2489 = vrot.slane %v2470, %v2488
      %v2490 = vlaneseq
      %v2491 = vshrl.u32 %v2490, 7
      %v2492 = vsub.s32 0, %v2491
      %v2493 = vrot.slane %v2478, %v2492
      %v2494 = vlaneseq
      %v2495 = vshrl.u32 %v2494, 7
      %v2496 = vsub.s32 0, %v2495
      %v2497 = vrot.slane %v2480, %v2496
      %v2498 = vlaneseq
      %v2499 = vshrl.u32 %v2498, 7
      %v2500 = vsub.s32 0, %v2499
      %v2501 = vrot.slane %v2463, %v2500
      %v2502 = vlaneseq
      %v2503 = vshrl.u32 %v2502, 7
      %v2504 = vsub.s32 0, %v2503
      %v2505 = vrot.slane %v2477, %v2504
      %v2506 = vlaneseq
      %v2507 = vshrl.u32 %v2506, 7
      %v2508 = vsub.s32 0, %v2507
      %v2509 = vrot.slane %v2479, %v2508
      %v2510 = vlaneseq
      %v2511 = vshrl.u32 %v2510, 7
      %v2512 = vsub.s32 0, %v2511
      %v2513 = vrot.slane %v2481, %v2512
      %v2522 = vmul.f32 %v2485, %v2431
      %v2523 = vmul.f32 %v2489, %v2431
      %v2524 = vmul.f32 %v2493, %v2431
      %v2525 = vmul.f32 %v2497, %v2431
      %v2526 = vmul.f32 %v2501, %v2431
      %v2527 = vmul.f32 %v2505, %v2431
      %v2528 = vmul.f32 %v2509, %v2431
      %v2529 = vmul.f32 %v2513, %v2431
      %v2530 = vadd.f32 %v2423, %v2522
      %v2531 = vadd.f32 %v2424, %v2523
      %v2532 = vadd.f32 %v2425, %v2524
      %v2533 = vadd.f32 %v2426, %v2525
      %v2534 = vadd.f32 %v2427, %v2526
      %v2535 = vadd.f32 %v2428, %v2527
      %v2536 = vadd.f32 %v2429, %v2528
      %v2537 = vadd.f32 %v2430, %v2529
      %v2538 = vld [vmem:[%s2117 + $0x20] sm:$0xff]
      %v2540 = vcombine.high %v2538, %v2538
      %v2542 = vunpack.c.l.s4 1966171168
      %v2543 = vunpack.c.0.s8 %v2542
      %v2544 = vlaneseq
      %v2545 = vshrl.u32 %v2544, 7
      %v2546 = vsub.s32 %v2543, %v2545
      %v2547 = vrot.slane %v2538, %v2546
      %v2549 = vunpack.c.l.s4 1966171168
      %v2550 = vunpack.c.0.s8 %v2549
      %v2551 = vlaneseq
      %v2552 = vshrl.u32 %v2551, 7
      %v2553 = vsub.s32 %v2550, %v2552
      %v2554 = vrot.slane %v2540, %v2553
      %v2555 = vcombine.high %v2547, %v2547
      %v2556 = vcombine.high %v2554, %v2554
      %v2558 = vunpack.c.l.s4 1966171168
      %v2559 = vunpack.c.0.s8 %v2558
      %v2560 = vlaneseq
      %v2561 = vshrl.u32 %v2560, 7
      %v2562 = vsub.s32 %v2559, %v2561
      %v2563 = vrot.slane %v2547, %v2562
      %v2565 = vunpack.c.l.s4 1966171168
      %v2566 = vunpack.c.0.s8 %v2565
      %v2567 = vlaneseq
      %v2568 = vshrl.u32 %v2567, 7
      %v2569 = vsub.s32 %v2566, %v2568
      %v2570 = vrot.slane %v2554, %v2569
      %v2572 = vunpack.c.l.s4 1966171168
      %v2573 = vunpack.c.0.s8 %v2572
      %v2574 = vlaneseq
      %v2575 = vshrl.u32 %v2574, 7
      %v2576 = vsub.s32 %v2573, %v2575
      %v2577 = vrot.slane %v2555, %v2576
      %v2579 = vunpack.c.l.s4 1966171168
      %v2580 = vunpack.c.0.s8 %v2579
      %v2581 = vlaneseq
      %v2582 = vshrl.u32 %v2581, 7
      %v2583 = vsub.s32 %v2580, %v2582
      %v2584 = vrot.slane %v2556, %v2583
      %v2585 = vcombine.high %v2563, %v2563
      %v2586 = vcombine.high %v2570, %v2570
      %v2587 = vcombine.high %v2577, %v2577
      %v2588 = vcombine.high %v2584, %v2584
      %v2589 = vlaneseq
      %v2590 = vshrl.u32 %v2589, 7
      %v2591 = vsub.s32 0, %v2590
      %v2592 = vrot.slane %v2563, %v2591
      %v2593 = vlaneseq
      %v2594 = vshrl.u32 %v2593, 7
      %v2595 = vsub.s32 0, %v2594
      %v2596 = vrot.slane %v2577, %v2595
      %v2597 = vlaneseq
      %v2598 = vshrl.u32 %v2597, 7
      %v2599 = vsub.s32 0, %v2598
      %v2600 = vrot.slane %v2585, %v2599
      %v2601 = vlaneseq
      %v2602 = vshrl.u32 %v2601, 7
      %v2603 = vsub.s32 0, %v2602
      %v2604 = vrot.slane %v2587, %v2603
      %v2605 = vlaneseq
      %v2606 = vshrl.u32 %v2605, 7
      %v2607 = vsub.s32 0, %v2606
      %v2608 = vrot.slane %v2570, %v2607
      %v2609 = vlaneseq
      %v2610 = vshrl.u32 %v2609, 7
      %v2611 = vsub.s32 0, %v2610
      %v2612 = vrot.slane %v2584, %v2611
      %v2613 = vlaneseq
      %v2614 = vshrl.u32 %v2613, 7
      %v2615 = vsub.s32 0, %v2614
      %v2616 = vrot.slane %v2586, %v2615
      %v2617 = vlaneseq
      %v2618 = vshrl.u32 %v2617, 7
      %v2619 = vsub.s32 0, %v2618
      %v2620 = vrot.slane %v2588, %v2619
      %v2629 = vmul.f32 %v2592, %v2538
      %v2630 = vmul.f32 %v2596, %v2538
      %v2631 = vmul.f32 %v2600, %v2538
      %v2632 = vmul.f32 %v2604, %v2538
      %v2633 = vmul.f32 %v2608, %v2538
      %v2634 = vmul.f32 %v2612, %v2538
      %v2635 = vmul.f32 %v2616, %v2538
      %v2636 = vmul.f32 %v2620, %v2538
      %v2637 = vadd.f32 %v2530, %v2629
      %v2638 = vadd.f32 %v2531, %v2630
      %v2639 = vadd.f32 %v2532, %v2631
      %v2640 = vadd.f32 %v2533, %v2632
      %v2641 = vadd.f32 %v2534, %v2633
      %v2642 = vadd.f32 %v2535, %v2634
      %v2643 = vadd.f32 %v2536, %v2635
      %v2644 = vadd.f32 %v2537, %v2636
      %v2645 = vld [vmem:[%s2117 + $0x28] sm:$0xff]
      %v2647 = vcombine.high %v2645, %v2645
      %v2649 = vunpack.c.l.s4 1966171168
      %v2650 = vunpack.c.0.s8 %v2649
      %v2651 = vlaneseq
      %v2652 = vshrl.u32 %v2651, 7
      %v2653 = vsub.s32 %v2650, %v2652
      %v2654 = vrot.slane %v2645, %v2653
      %v2656 = vunpack.c.l.s4 1966171168
      %v2657 = vunpack.c.0.s8 %v2656
      %v2658 = vlaneseq
      %v2659 = vshrl.u32 %v2658, 7
      %v2660 = vsub.s32 %v2657, %v2659
      %v2661 = vrot.slane %v2647, %v2660
      %v2662 = vcombine.high %v2654, %v2654
      %v2663 = vcombine.high %v2661, %v2661
      %v2665 = vunpack.c.l.s4 1966171168
      %v2666 = vunpack.c.0.s8 %v2665
      %v2667 = vlaneseq
      %v2668 = vshrl.u32 %v2667, 7
      %v2669 = vsub.s32 %v2666, %v2668
      %v2670 = vrot.slane %v2654, %v2669
      %v2672 = vunpack.c.l.s4 1966171168
      %v2673 = vunpack.c.0.s8 %v2672
      %v2674 = vlaneseq
      %v2675 = vshrl.u32 %v2674, 7
      %v2676 = vsub.s32 %v2673, %v2675
      %v2677 = vrot.slane %v2661, %v2676
      %v2679 = vunpack.c.l.s4 1966171168
      %v2680 = vunpack.c.0.s8 %v2679
      %v2681 = vlaneseq
      %v2682 = vshrl.u32 %v2681, 7
      %v2683 = vsub.s32 %v2680, %v2682
      %v2684 = vrot.slane %v2662, %v2683
      %v2686 = vunpack.c.l.s4 1966171168
      %v2687 = vunpack.c.0.s8 %v2686
      %v2688 = vlaneseq
      %v2689 = vshrl.u32 %v2688, 7
      %v2690 = vsub.s32 %v2687, %v2689
      %v2691 = vrot.slane %v2663, %v2690
      %v2692 = vcombine.high %v2670, %v2670
      %v2693 = vcombine.high %v2677, %v2677
      %v2694 = vcombine.high %v2684, %v2684
      %v2695 = vcombine.high %v2691, %v2691
      %v2696 = vlaneseq
      %v2697 = vshrl.u32 %v2696, 7
      %v2698 = vsub.s32 0, %v2697
      %v2699 = vrot.slane %v2670, %v2698
      %v2700 = vlaneseq
      %v2701 = vshrl.u32 %v2700, 7
      %v2702 = vsub.s32 0, %v2701
      %v2703 = vrot.slane %v2684, %v2702
      %v2704 = vlaneseq
      %v2705 = vshrl.u32 %v2704, 7
      %v2706 = vsub.s32 0, %v2705
      %v2707 = vrot.slane %v2692, %v2706
      %v2708 = vlaneseq
      %v2709 = vshrl.u32 %v2708, 7
      %v2710 = vsub.s32 0, %v2709
      %v2711 = vrot.slane %v2694, %v2710
      %v2712 = vlaneseq
      %v2713 = vshrl.u32 %v2712, 7
      %v2714 = vsub.s32 0, %v2713
      %v2715 = vrot.slane %v2677, %v2714
      %v2716 = vlaneseq
      %v2717 = vshrl.u32 %v2716, 7
      %v2718 = vsub.s32 0, %v2717
      %v2719 = vrot.slane %v2691, %v2718
      %v2720 = vlaneseq
      %v2721 = vshrl.u32 %v2720, 7
      %v2722 = vsub.s32 0, %v2721
      %v2723 = vrot.slane %v2693, %v2722
      %v2724 = vlaneseq
      %v2725 = vshrl.u32 %v2724, 7
      %v2726 = vsub.s32 0, %v2725
      %v2727 = vrot.slane %v2695, %v2726
      %v2736 = vmul.f32 %v2699, %v2645
      %v2737 = vmul.f32 %v2703, %v2645
      %v2738 = vmul.f32 %v2707, %v2645
      %v2739 = vmul.f32 %v2711, %v2645
      %v2740 = vmul.f32 %v2715, %v2645
      %v2741 = vmul.f32 %v2719, %v2645
      %v2742 = vmul.f32 %v2723, %v2645
      %v2743 = vmul.f32 %v2727, %v2645
      %v2744 = vadd.f32 %v2637, %v2736
      %v2745 = vadd.f32 %v2638, %v2737
      %v2746 = vadd.f32 %v2639, %v2738
      %v2747 = vadd.f32 %v2640, %v2739
      %v2748 = vadd.f32 %v2641, %v2740
      %v2749 = vadd.f32 %v2642, %v2741
      %v2750 = vadd.f32 %v2643, %v2742
      %v2751 = vadd.f32 %v2644, %v2743
      %v2752 = vld [vmem:[%s2117 + $0x30] sm:$0xff]
      %v2754 = vcombine.high %v2752, %v2752
      %v2756 = vunpack.c.l.s4 1966171168
      %v2757 = vunpack.c.0.s8 %v2756
      %v2758 = vlaneseq
      %v2759 = vshrl.u32 %v2758, 7
      %v2760 = vsub.s32 %v2757, %v2759
      %v2761 = vrot.slane %v2752, %v2760
      %v2763 = vunpack.c.l.s4 1966171168
      %v2764 = vunpack.c.0.s8 %v2763
      %v2765 = vlaneseq
      %v2766 = vshrl.u32 %v2765, 7
      %v2767 = vsub.s32 %v2764, %v2766
      %v2768 = vrot.slane %v2754, %v2767
      %v2769 = vcombine.high %v2761, %v2761
      %v2770 = vcombine.high %v2768, %v2768
      %v2772 = vunpack.c.l.s4 1966171168
      %v2773 = vunpack.c.0.s8 %v2772
      %v2774 = vlaneseq
      %v2775 = vshrl.u32 %v2774, 7
      %v2776 = vsub.s32 %v2773, %v2775
      %v2777 = vrot.slane %v2761, %v2776
      %v2779 = vunpack.c.l.s4 1966171168
      %v2780 = vunpack.c.0.s8 %v2779
      %v2781 = vlaneseq
      %v2782 = vshrl.u32 %v2781, 7
      %v2783 = vsub.s32 %v2780, %v2782
      %v2784 = vrot.slane %v2768, %v2783
      %v2786 = vunpack.c.l.s4 1966171168
      %v2787 = vunpack.c.0.s8 %v2786
      %v2788 = vlaneseq
      %v2789 = vshrl.u32 %v2788, 7
      %v2790 = vsub.s32 %v2787, %v2789
      %v2791 = vrot.slane %v2769, %v2790
      %v2793 = vunpack.c.l.s4 1966171168
      %v2794 = vunpack.c.0.s8 %v2793
      %v2795 = vlaneseq
      %v2796 = vshrl.u32 %v2795, 7
      %v2797 = vsub.s32 %v2794, %v2796
      %v2798 = vrot.slane %v2770, %v2797
      %v2799 = vcombine.high %v2777, %v2777
      %v2800 = vcombine.high %v2784, %v2784
      %v2801 = vcombine.high %v2791, %v2791
      %v2802 = vcombine.high %v2798, %v2798
      %v2803 = vlaneseq
      %v2804 = vshrl.u32 %v2803, 7
      %v2805 = vsub.s32 0, %v2804
      %v2806 = vrot.slane %v2777, %v2805
      %v2807 = vlaneseq
      %v2808 = vshrl.u32 %v2807, 7
      %v2809 = vsub.s32 0, %v2808
      %v2810 = vrot.slane %v2791, %v2809
      %v2811 = vlaneseq
      %v2812 = vshrl.u32 %v2811, 7
      %v2813 = vsub.s32 0, %v2812
      %v2814 = vrot.slane %v2799, %v2813
      %v2815 = vlaneseq
      %v2816 = vshrl.u32 %v2815, 7
      %v2817 = vsub.s32 0, %v2816
      %v2818 = vrot.slane %v2801, %v2817
      %v2819 = vlaneseq
      %v2820 = vshrl.u32 %v2819, 7
      %v2821 = vsub.s32 0, %v2820
      %v2822 = vrot.slane %v2784, %v2821
      %v2823 = vlaneseq
      %v2824 = vshrl.u32 %v2823, 7
      %v2825 = vsub.s32 0, %v2824
      %v2826 = vrot.slane %v2798, %v2825
      %v2827 = vlaneseq
      %v2828 = vshrl.u32 %v2827, 7
      %v2829 = vsub.s32 0, %v2828
      %v2830 = vrot.slane %v2800, %v2829
      %v2831 = vlaneseq
      %v2832 = vshrl.u32 %v2831, 7
      %v2833 = vsub.s32 0, %v2832
      %v2834 = vrot.slane %v2802, %v2833
      %v2843 = vmul.f32 %v2806, %v2752
      %v2844 = vmul.f32 %v2810, %v2752
      %v2845 = vmul.f32 %v2814, %v2752
      %v2846 = vmul.f32 %v2818, %v2752
      %v2847 = vmul.f32 %v2822, %v2752
      %v2848 = vmul.f32 %v2826, %v2752
      %v2849 = vmul.f32 %v2830, %v2752
      %v2850 = vmul.f32 %v2834, %v2752
      %v2851 = vadd.f32 %v2744, %v2843
      %v2852 = vadd.f32 %v2745, %v2844
      %v2853 = vadd.f32 %v2746, %v2845
      %v2854 = vadd.f32 %v2747, %v2846
      %v2855 = vadd.f32 %v2748, %v2847
      %v2856 = vadd.f32 %v2749, %v2848
      %v2857 = vadd.f32 %v2750, %v2849
      %v2858 = vadd.f32 %v2751, %v2850
      %v2859 = vld [vmem:[%s2117 + $0x38] sm:$0xff]
      %v2861 = vcombine.high %v2859, %v2859
      %v2863 = vunpack.c.l.s4 1966171168
      %v2864 = vunpack.c.0.s8 %v2863
      %v2865 = vlaneseq
      %v2866 = vshrl.u32 %v2865, 7
      %v2867 = vsub.s32 %v2864, %v2866
      %v2868 = vrot.slane %v2859, %v2867
      %v2870 = vunpack.c.l.s4 1966171168
      %v2871 = vunpack.c.0.s8 %v2870
      %v2872 = vlaneseq
      %v2873 = vshrl.u32 %v2872, 7
      %v2874 = vsub.s32 %v2871, %v2873
      %v2875 = vrot.slane %v2861, %v2874
      %v2876 = vcombine.high %v2868, %v2868
      %v2877 = vcombine.high %v2875, %v2875
      %v2879 = vunpack.c.l.s4 1966171168
      %v2880 = vunpack.c.0.s8 %v2879
      %v2881 = vlaneseq
      %v2882 = vshrl.u32 %v2881, 7
      %v2883 = vsub.s32 %v2880, %v2882
      %v2884 = vrot.slane %v2868, %v2883
      %v2886 = vunpack.c.l.s4 1966171168
      %v2887 = vunpack.c.0.s8 %v2886
      %v2888 = vlaneseq
      %v2889 = vshrl.u32 %v2888, 7
      %v2890 = vsub.s32 %v2887, %v2889
      %v2891 = vrot.slane %v2875, %v2890
      %v2893 = vunpack.c.l.s4 1966171168
      %v2894 = vunpack.c.0.s8 %v2893
      %v2895 = vlaneseq
      %v2896 = vshrl.u32 %v2895, 7
      %v2897 = vsub.s32 %v2894, %v2896
      %v2898 = vrot.slane %v2876, %v2897
      %v2900 = vunpack.c.l.s4 1966171168
      %v2901 = vunpack.c.0.s8 %v2900
      %v2902 = vlaneseq
      %v2903 = vshrl.u32 %v2902, 7
      %v2904 = vsub.s32 %v2901, %v2903
      %v2905 = vrot.slane %v2877, %v2904
      %v2906 = vcombine.high %v2884, %v2884
      %v2907 = vcombine.high %v2891, %v2891
      %v2908 = vcombine.high %v2898, %v2898
      %v2909 = vcombine.high %v2905, %v2905
      %v2910 = vlaneseq
      %v2911 = vshrl.u32 %v2910, 7
      %v2912 = vsub.s32 0, %v2911
      %v2913 = vrot.slane %v2884, %v2912
      %v2914 = vlaneseq
      %v2915 = vshrl.u32 %v2914, 7
      %v2916 = vsub.s32 0, %v2915
      %v2917 = vrot.slane %v2898, %v2916
      %v2918 = vlaneseq
      %v2919 = vshrl.u32 %v2918, 7
      %v2920 = vsub.s32 0, %v2919
      %v2921 = vrot.slane %v2906, %v2920
      %v2922 = vlaneseq
      %v2923 = vshrl.u32 %v2922, 7
      %v2924 = vsub.s32 0, %v2923
      %v2925 = vrot.slane %v2908, %v2924
      %v2926 = vlaneseq
      %v2927 = vshrl.u32 %v2926, 7
      %v2928 = vsub.s32 0, %v2927
      %v2929 = vrot.slane %v2891, %v2928
      %v2930 = vlaneseq
      %v2931 = vshrl.u32 %v2930, 7
      %v2932 = vsub.s32 0, %v2931
      %v2933 = vrot.slane %v2905, %v2932
      %v2934 = vlaneseq
      %v2935 = vshrl.u32 %v2934, 7
      %v2936 = vsub.s32 0, %v2935
      %v2937 = vrot.slane %v2907, %v2936
      %v2938 = vlaneseq
      %v2939 = vshrl.u32 %v2938, 7
      %v2940 = vsub.s32 0, %v2939
      %v2941 = vrot.slane %v2909, %v2940
      %v2950 = vmul.f32 %v2913, %v2859
      %v2951 = vmul.f32 %v2917, %v2859
      %v2952 = vmul.f32 %v2921, %v2859
      %v2953 = vmul.f32 %v2925, %v2859
      %v2954 = vmul.f32 %v2929, %v2859
      %v2955 = vmul.f32 %v2933, %v2859
      %v2956 = vmul.f32 %v2937, %v2859
      %v2957 = vmul.f32 %v2941, %v2859
      %v2958 = vadd.f32 %v2851, %v2950
      %v2959 = vadd.f32 %v2852, %v2951
      %v2960 = vadd.f32 %v2853, %v2952
      %v2961 = vadd.f32 %v2854, %v2953
      %v2962 = vadd.f32 %v2855, %v2954
      %v2963 = vadd.f32 %v2856, %v2955
      %v2964 = vadd.f32 %v2857, %v2956
      %v2965 = vadd.f32 %v2858, %v2957
      %v2966 = vld [vmem:[%s2117 + $0x40] sm:$0xff]
      %v2968 = vcombine.high %v2966, %v2966
      %v2970 = vunpack.c.l.s4 1966171168
      %v2971 = vunpack.c.0.s8 %v2970
      %v2972 = vlaneseq
      %v2973 = vshrl.u32 %v2972, 7
      %v2974 = vsub.s32 %v2971, %v2973
      %v2975 = vrot.slane %v2966, %v2974
      %v2977 = vunpack.c.l.s4 1966171168
      %v2978 = vunpack.c.0.s8 %v2977
      %v2979 = vlaneseq
      %v2980 = vshrl.u32 %v2979, 7
      %v2981 = vsub.s32 %v2978, %v2980
      %v2982 = vrot.slane %v2968, %v2981
      %v2983 = vcombine.high %v2975, %v2975
      %v2984 = vcombine.high %v2982, %v2982
      %v2986 = vunpack.c.l.s4 1966171168
      %v2987 = vunpack.c.0.s8 %v2986
      %v2988 = vlaneseq
      %v2989 = vshrl.u32 %v2988, 7
      %v2990 = vsub.s32 %v2987, %v2989
      %v2991 = vrot.slane %v2975, %v2990
      %v2993 = vunpack.c.l.s4 1966171168
      %v2994 = vunpack.c.0.s8 %v2993
      %v2995 = vlaneseq
      %v2996 = vshrl.u32 %v2995, 7
      %v2997 = vsub.s32 %v2994, %v2996
      %v2998 = vrot.slane %v2982, %v2997
      %v3000 = vunpack.c.l.s4 1966171168
      %v3001 = vunpack.c.0.s8 %v3000
      %v3002 = vlaneseq
      %v3003 = vshrl.u32 %v3002, 7
      %v3004 = vsub.s32 %v3001, %v3003
      %v3005 = vrot.slane %v2983, %v3004
      %v3007 = vunpack.c.l.s4 1966171168
      %v3008 = vunpack.c.0.s8 %v3007
      %v3009 = vlaneseq
      %v3010 = vshrl.u32 %v3009, 7
      %v3011 = vsub.s32 %v3008, %v3010
      %v3012 = vrot.slane %v2984, %v3011
      %v3013 = vcombine.high %v2991, %v2991
      %v3014 = vcombine.high %v2998, %v2998
      %v3015 = vcombine.high %v3005, %v3005
      %v3016 = vcombine.high %v3012, %v3012
      %v3017 = vlaneseq
      %v3018 = vshrl.u32 %v3017, 7
      %v3019 = vsub.s32 0, %v3018
      %v3020 = vrot.slane %v2991, %v3019
      %v3021 = vlaneseq
      %v3022 = vshrl.u32 %v3021, 7
      %v3023 = vsub.s32 0, %v3022
      %v3024 = vrot.slane %v3005, %v3023
      %v3025 = vlaneseq
      %v3026 = vshrl.u32 %v3025, 7
      %v3027 = vsub.s32 0, %v3026
      %v3028 = vrot.slane %v3013, %v3027
      %v3029 = vlaneseq
      %v3030 = vshrl.u32 %v3029, 7
      %v3031 = vsub.s32 0, %v3030
      %v3032 = vrot.slane %v3015, %v3031
      %v3033 = vlaneseq
      %v3034 = vshrl.u32 %v3033, 7
      %v3035 = vsub.s32 0, %v3034
      %v3036 = vrot.slane %v2998, %v3035
      %v3037 = vlaneseq
      %v3038 = vshrl.u32 %v3037, 7
      %v3039 = vsub.s32 0, %v3038
      %v3040 = vrot.slane %v3012, %v3039
      %v3041 = vlaneseq
      %v3042 = vshrl.u32 %v3041, 7
      %v3043 = vsub.s32 0, %v3042
      %v3044 = vrot.slane %v3014, %v3043
      %v3045 = vlaneseq
      %v3046 = vshrl.u32 %v3045, 7
      %v3047 = vsub.s32 0, %v3046
      %v3048 = vrot.slane %v3016, %v3047
      %v3057 = vmul.f32 %v3020, %v2966
      %v3058 = vmul.f32 %v3024, %v2966
      %v3059 = vmul.f32 %v3028, %v2966
      %v3060 = vmul.f32 %v3032, %v2966
      %v3061 = vmul.f32 %v3036, %v2966
      %v3062 = vmul.f32 %v3040, %v2966
      %v3063 = vmul.f32 %v3044, %v2966
      %v3064 = vmul.f32 %v3048, %v2966
      %v3065 = vadd.f32 %v2958, %v3057
      %v3066 = vadd.f32 %v2959, %v3058
      %v3067 = vadd.f32 %v2960, %v3059
      %v3068 = vadd.f32 %v2961, %v3060
      %v3069 = vadd.f32 %v2962, %v3061
      %v3070 = vadd.f32 %v2963, %v3062
      %v3071 = vadd.f32 %v2964, %v3063
      %v3072 = vadd.f32 %v2965, %v3064
      %v3073 = vld [vmem:[%s2117 + $0x48] sm:$0xff]
      %v3075 = vcombine.high %v3073, %v3073
      %v3077 = vunpack.c.l.s4 1966171168
      %v3078 = vunpack.c.0.s8 %v3077
      %v3079 = vlaneseq
      %v3080 = vshrl.u32 %v3079, 7
      %v3081 = vsub.s32 %v3078, %v3080
      %v3082 = vrot.slane %v3073, %v3081
      %v3084 = vunpack.c.l.s4 1966171168
      %v3085 = vunpack.c.0.s8 %v3084
      %v3086 = vlaneseq
      %v3087 = vshrl.u32 %v3086, 7
      %v3088 = vsub.s32 %v3085, %v3087
      %v3089 = vrot.slane %v3075, %v3088
      %v3090 = vcombine.high %v3082, %v3082
      %v3091 = vcombine.high %v3089, %v3089
      %v3093 = vunpack.c.l.s4 1966171168
      %v3094 = vunpack.c.0.s8 %v3093
      %v3095 = vlaneseq
      %v3096 = vshrl.u32 %v3095, 7
      %v3097 = vsub.s32 %v3094, %v3096
      %v3098 = vrot.slane %v3082, %v3097
      %v3100 = vunpack.c.l.s4 1966171168
      %v3101 = vunpack.c.0.s8 %v3100
      %v3102 = vlaneseq
      %v3103 = vshrl.u32 %v3102, 7
      %v3104 = vsub.s32 %v3101, %v3103
      %v3105 = vrot.slane %v3089, %v3104
      %v3107 = vunpack.c.l.s4 1966171168
      %v3108 = vunpack.c.0.s8 %v3107
      %v3109 = vlaneseq
      %v3110 = vshrl.u32 %v3109, 7
      %v3111 = vsub.s32 %v3108, %v3110
      %v3112 = vrot.slane %v3090, %v3111
      %v3114 = vunpack.c.l.s4 1966171168
      %v3115 = vunpack.c.0.s8 %v3114
      %v3116 = vlaneseq
      %v3117 = vshrl.u32 %v3116, 7
      %v3118 = vsub.s32 %v3115, %v3117
      %v3119 = vrot.slane %v3091, %v3118
      %v3120 = vcombine.high %v3098, %v3098
      %v3121 = vcombine.high %v3105, %v3105
      %v3122 = vcombine.high %v3112, %v3112
      %v3123 = vcombine.high %v3119, %v3119
      %v3124 = vlaneseq
      %v3125 = vshrl.u32 %v3124, 7
      %v3126 = vsub.s32 0, %v3125
      %v3127 = vrot.slane %v3098, %v3126
      %v3128 = vlaneseq
      %v3129 = vshrl.u32 %v3128, 7
      %v3130 = vsub.s32 0, %v3129
      %v3131 = vrot.slane %v3112, %v3130
      %v3132 = vlaneseq
      %v3133 = vshrl.u32 %v3132, 7
      %v3134 = vsub.s32 0, %v3133
      %v3135 = vrot.slane %v3120, %v3134
      %v3136 = vlaneseq
      %v3137 = vshrl.u32 %v3136, 7
      %v3138 = vsub.s32 0, %v3137
      %v3139 = vrot.slane %v3122, %v3138
      %v3140 = vlaneseq
      %v3141 = vshrl.u32 %v3140, 7
      %v3142 = vsub.s32 0, %v3141
      %v3143 = vrot.slane %v3105, %v3142
      %v3144 = vlaneseq
      %v3145 = vshrl.u32 %v3144, 7
      %v3146 = vsub.s32 0, %v3145
      %v3147 = vrot.slane %v3119, %v3146
      %v3148 = vlaneseq
      %v3149 = vshrl.u32 %v3148, 7
      %v3150 = vsub.s32 0, %v3149
      %v3151 = vrot.slane %v3121, %v3150
      %v3152 = vlaneseq
      %v3153 = vshrl.u32 %v3152, 7
      %v3154 = vsub.s32 0, %v3153
      %v3155 = vrot.slane %v3123, %v3154
      %v3164 = vmul.f32 %v3127, %v3073
      %v3165 = vmul.f32 %v3131, %v3073
      %v3166 = vmul.f32 %v3135, %v3073
      %v3167 = vmul.f32 %v3139, %v3073
      %v3168 = vmul.f32 %v3143, %v3073
      %v3169 = vmul.f32 %v3147, %v3073
      %v3170 = vmul.f32 %v3151, %v3073
      %v3171 = vmul.f32 %v3155, %v3073
      %v3172 = vadd.f32 %v3065, %v3164
      %v3173 = vadd.f32 %v3066, %v3165
      %v3174 = vadd.f32 %v3067, %v3166
      %v3175 = vadd.f32 %v3068, %v3167
      %v3176 = vadd.f32 %v3069, %v3168
      %v3177 = vadd.f32 %v3070, %v3169
      %v3178 = vadd.f32 %v3071, %v3170
      %v3179 = vadd.f32 %v3072, %v3171
      %v3180 = vld [vmem:[%s2117 + $0x50] sm:$0xff]
      %v3182 = vcombine.high %v3180, %v3180
      %v3184 = vunpack.c.l.s4 1966171168
      %v3185 = vunpack.c.0.s8 %v3184
      %v3186 = vlaneseq
      %v3187 = vshrl.u32 %v3186, 7
      %v3188 = vsub.s32 %v3185, %v3187
      %v3189 = vrot.slane %v3180, %v3188
      %v3191 = vunpack.c.l.s4 1966171168
      %v3192 = vunpack.c.0.s8 %v3191
      %v3193 = vlaneseq
      %v3194 = vshrl.u32 %v3193, 7
      %v3195 = vsub.s32 %v3192, %v3194
      %v3196 = vrot.slane %v3182, %v3195
      %v3197 = vcombine.high %v3189, %v3189
      %v3198 = vcombine.high %v3196, %v3196
      %v3200 = vunpack.c.l.s4 1966171168
      %v3201 = vunpack.c.0.s8 %v3200
      %v3202 = vlaneseq
      %v3203 = vshrl.u32 %v3202, 7
      %v3204 = vsub.s32 %v3201, %v3203
      %v3205 = vrot.slane %v3189, %v3204
      %v3207 = vunpack.c.l.s4 1966171168
      %v3208 = vunpack.c.0.s8 %v3207
      %v3209 = vlaneseq
      %v3210 = vshrl.u32 %v3209, 7
      %v3211 = vsub.s32 %v3208, %v3210
      %v3212 = vrot.slane %v3196, %v3211
      %v3214 = vunpack.c.l.s4 1966171168
      %v3215 = vunpack.c.0.s8 %v3214
      %v3216 = vlaneseq
      %v3217 = vshrl.u32 %v3216, 7
      %v3218 = vsub.s32 %v3215, %v3217
      %v3219 = vrot.slane %v3197, %v3218
      %v3221 = vunpack.c.l.s4 1966171168
      %v3222 = vunpack.c.0.s8 %v3221
      %v3223 = vlaneseq
      %v3224 = vshrl.u32 %v3223, 7
      %v3225 = vsub.s32 %v3222, %v3224
      %v3226 = vrot.slane %v3198, %v3225
      %v3227 = vcombine.high %v3205, %v3205
      %v3228 = vcombine.high %v3212, %v3212
      %v3229 = vcombine.high %v3219, %v3219
      %v3230 = vcombine.high %v3226, %v3226
      %v3231 = vlaneseq
      %v3232 = vshrl.u32 %v3231, 7
      %v3233 = vsub.s32 0, %v3232
      %v3234 = vrot.slane %v3205, %v3233
      %v3235 = vlaneseq
      %v3236 = vshrl.u32 %v3235, 7
      %v3237 = vsub.s32 0, %v3236
      %v3238 = vrot.slane %v3219, %v3237
      %v3239 = vlaneseq
      %v3240 = vshrl.u32 %v3239, 7
      %v3241 = vsub.s32 0, %v3240
      %v3242 = vrot.slane %v3227, %v3241
      %v3243 = vlaneseq
      %v3244 = vshrl.u32 %v3243, 7
      %v3245 = vsub.s32 0, %v3244
      %v3246 = vrot.slane %v3229, %v3245
      %v3247 = vlaneseq
      %v3248 = vshrl.u32 %v3247, 7
      %v3249 = vsub.s32 0, %v3248
      %v3250 = vrot.slane %v3212, %v3249
      %v3251 = vlaneseq
      %v3252 = vshrl.u32 %v3251, 7
      %v3253 = vsub.s32 0, %v3252
      %v3254 = vrot.slane %v3226, %v3253
      %v3255 = vlaneseq
      %v3256 = vshrl.u32 %v3255, 7
      %v3257 = vsub.s32 0, %v3256
      %v3258 = vrot.slane %v3228, %v3257
      %v3259 = vlaneseq
      %v3260 = vshrl.u32 %v3259, 7
      %v3261 = vsub.s32 0, %v3260
      %v3262 = vrot.slane %v3230, %v3261
      %v3271 = vmul.f32 %v3234, %v3180
      %v3272 = vmul.f32 %v3238, %v3180
      %v3273 = vmul.f32 %v3242, %v3180
      %v3274 = vmul.f32 %v3246, %v3180
      %v3275 = vmul.f32 %v3250, %v3180
      %v3276 = vmul.f32 %v3254, %v3180
      %v3277 = vmul.f32 %v3258, %v3180
      %v3278 = vmul.f32 %v3262, %v3180
      %v3279 = vadd.f32 %v3172, %v3271
      %v3280 = vadd.f32 %v3173, %v3272
      %v3281 = vadd.f32 %v3174, %v3273
      %v3282 = vadd.f32 %v3175, %v3274
      %v3283 = vadd.f32 %v3176, %v3275
      %v3284 = vadd.f32 %v3177, %v3276
      %v3285 = vadd.f32 %v3178, %v3277
      %v3286 = vadd.f32 %v3179, %v3278
      %v3287 = vld [vmem:[%s2117 + $0x58] sm:$0xff]
      %v3289 = vcombine.high %v3287, %v3287
      %v3291 = vunpack.c.l.s4 1966171168
      %v3292 = vunpack.c.0.s8 %v3291
      %v3293 = vlaneseq
      %v3294 = vshrl.u32 %v3293, 7
      %v3295 = vsub.s32 %v3292, %v3294
      %v3296 = vrot.slane %v3287, %v3295
      %v3298 = vunpack.c.l.s4 1966171168
      %v3299 = vunpack.c.0.s8 %v3298
      %v3300 = vlaneseq
      %v3301 = vshrl.u32 %v3300, 7
      %v3302 = vsub.s32 %v3299, %v3301
      %v3303 = vrot.slane %v3289, %v3302
      %v3304 = vcombine.high %v3296, %v3296
      %v3305 = vcombine.high %v3303, %v3303
      %v3307 = vunpack.c.l.s4 1966171168
      %v3308 = vunpack.c.0.s8 %v3307
      %v3309 = vlaneseq
      %v3310 = vshrl.u32 %v3309, 7
      %v3311 = vsub.s32 %v3308, %v3310
      %v3312 = vrot.slane %v3296, %v3311
      %v3314 = vunpack.c.l.s4 1966171168
      %v3315 = vunpack.c.0.s8 %v3314
      %v3316 = vlaneseq
      %v3317 = vshrl.u32 %v3316, 7
      %v3318 = vsub.s32 %v3315, %v3317
      %v3319 = vrot.slane %v3303, %v3318
      %v3321 = vunpack.c.l.s4 1966171168
      %v3322 = vunpack.c.0.s8 %v3321
      %v3323 = vlaneseq
      %v3324 = vshrl.u32 %v3323, 7
      %v3325 = vsub.s32 %v3322, %v3324
      %v3326 = vrot.slane %v3304, %v3325
      %v3328 = vunpack.c.l.s4 1966171168
      %v3329 = vunpack.c.0.s8 %v3328
      %v3330 = vlaneseq
      %v3331 = vshrl.u32 %v3330, 7
      %v3332 = vsub.s32 %v3329, %v3331
      %v3333 = vrot.slane %v3305, %v3332
      %v3334 = vcombine.high %v3312, %v3312
      %v3335 = vcombine.high %v3319, %v3319
      %v3336 = vcombine.high %v3326, %v3326
      %v3337 = vcombine.high %v3333, %v3333
      %v3338 = vlaneseq
      %v3339 = vshrl.u32 %v3338, 7
      %v3340 = vsub.s32 0, %v3339
      %v3341 = vrot.slane %v3312, %v3340
      %v3342 = vlaneseq
      %v3343 = vshrl.u32 %v3342, 7
      %v3344 = vsub.s32 0, %v3343
      %v3345 = vrot.slane %v3326, %v3344
      %v3346 = vlaneseq
      %v3347 = vshrl.u32 %v3346, 7
      %v3348 = vsub.s32 0, %v3347
      %v3349 = vrot.slane %v3334, %v3348
      %v3350 = vlaneseq
      %v3351 = vshrl.u32 %v3350, 7
      %v3352 = vsub.s32 0, %v3351
      %v3353 = vrot.slane %v3336, %v3352
      %v3354 = vlaneseq
      %v3355 = vshrl.u32 %v3354, 7
      %v3356 = vsub.s32 0, %v3355
      %v3357 = vrot.slane %v3319, %v3356
      %v3358 = vlaneseq
      %v3359 = vshrl.u32 %v3358, 7
      %v3360 = vsub.s32 0, %v3359
      %v3361 = vrot.slane %v3333, %v3360
      %v3362 = vlaneseq
      %v3363 = vshrl.u32 %v3362, 7
      %v3364 = vsub.s32 0, %v3363
      %v3365 = vrot.slane %v3335, %v3364
      %v3366 = vlaneseq
      %v3367 = vshrl.u32 %v3366, 7
      %v3368 = vsub.s32 0, %v3367
      %v3369 = vrot.slane %v3337, %v3368
      %v3378 = vmul.f32 %v3341, %v3287
      %v3379 = vmul.f32 %v3345, %v3287
      %v3380 = vmul.f32 %v3349, %v3287
      %v3381 = vmul.f32 %v3353, %v3287
      %v3382 = vmul.f32 %v3357, %v3287
      %v3383 = vmul.f32 %v3361, %v3287
      %v3384 = vmul.f32 %v3365, %v3287
      %v3385 = vmul.f32 %v3369, %v3287
      %v3386 = vadd.f32 %v3279, %v3378
      %v3387 = vadd.f32 %v3280, %v3379
      %v3388 = vadd.f32 %v3281, %v3380
      %v3389 = vadd.f32 %v3282, %v3381
      %v3390 = vadd.f32 %v3283, %v3382
      %v3391 = vadd.f32 %v3284, %v3383
      %v3392 = vadd.f32 %v3285, %v3384
      %v3393 = vadd.f32 %v3286, %v3385
      %3394 = vadd.xlane.f32.xlu0 %v3386
      %v3395 = vpop.xlane.xlu0 %3394
      %3396 = vadd.xlane.f32.xlu0 %v3387
      %v3397 = vpop.xlane.xlu0 %3396
      %3398 = vadd.xlane.f32.xlu0 %v3388
      %v3399 = vpop.xlane.xlu0 %3398
      %3400 = vadd.xlane.f32.xlu0 %v3389
      %v3401 = vpop.xlane.xlu0 %3400
      %3402 = vadd.xlane.f32.xlu0 %v3390
      %v3403 = vpop.xlane.xlu0 %3402
      %3404 = vadd.xlane.f32.xlu0 %v3391
      %v3405 = vpop.xlane.xlu0 %3404
      %3406 = vadd.xlane.f32.xlu0 %v3392
      %v3407 = vpop.xlane.xlu0 %3406
      %3408 = vadd.xlane.f32.xlu0 %v3393
      %v3409 = vpop.xlane.xlu0 %3408
      %v3410 = vmax.f32 %v3395, 1e-20
      %v3411 = vmax.f32 %v3397, 1e-20
      %v3412 = vmax.f32 %v3399, 1e-20
      %v3413 = vmax.f32 %v3401, 1e-20
      %v3414 = vmax.f32 %v3403, 1e-20
      %v3415 = vmax.f32 %v3405, 1e-20
      %v3416 = vmax.f32 %v3407, 1e-20
      %v3417 = vmax.f32 %v3409, 1e-20
      %s3418 = scalar_lea.vmem %s407, 128
      %v3419 = vld [vmem:[%s3418] sm:$0xff]
      %v3420 = vld [vmem:[%s3418 + $0x8] sm:$0xff]
      %v3421 = vld [vmem:[%s3418 + $0x10] sm:$0xff]
      %v3422 = vld [vmem:[%s3418 + $0x18] sm:$0xff]
      %v3423 = vld [vmem:[%s3418 + $0x20] sm:$0xff]
      %v3424 = vld [vmem:[%s3418 + $0x28] sm:$0xff]
      %v3425 = vld [vmem:[%s3418 + $0x30] sm:$0xff]
      %v3426 = vld [vmem:[%s3418 + $0x38] sm:$0xff]
      %v3427 = vld [vmem:[%s3418 + $0x40] sm:$0xff]
      %v3428 = vld [vmem:[%s3418 + $0x48] sm:$0xff]
      %v3429 = vld [vmem:[%s3418 + $0x50] sm:$0xff]
      %v3430 = vld [vmem:[%s3418 + $0x58] sm:$0xff]
      %v3431 = vld [vmem:[%s3418 + $0x60] sm:$0xff]
      %v3432 = vld [vmem:[%s3418 + $0x68] sm:$0xff]
      %v3433 = vld [vmem:[%s3418 + $0x70] sm:$0xff]
      %v3434 = vld [vmem:[%s3418 + $0x78] sm:$0xff]
      %3435 = vmatprep.subr.mxu0 0.0
      %3436 = vmatpush1.msra.mxu0 %v3419
      %3437 = vmatprep.subr.mxu0 0.0
      %3438 = vmatpush1.msra.mxu0 %v3420
      %3439 = vmatprep.subr.mxu0 0.0
      %3440 = vmatpush1.msra.mxu0 %v3421
      %3441 = vmatprep.subr.mxu0 0.0
      %3442 = vmatpush1.msra.mxu0 %v3422
      %3443 = vmatprep.subr.mxu0 0.0
      %3444 = vmatpush1.msra.mxu0 %v3423
      %3445 = vmatprep.subr.mxu0 0.0
      %3446 = vmatpush1.msra.mxu0 %v3424
      %3447 = vmatprep.subr.mxu0 0.0
      %3448 = vmatpush1.msra.mxu0 %v3425
      %3449 = vmatprep.subr.mxu0 0.0
      %3450 = vmatpush1.msra.mxu0 %v3426
      %3451 = vmatprep.subr.mxu0 0.0
      %3452 = vmatpush1.msra.mxu0 %v3427
      %3453 = vmatprep.subr.mxu0 0.0
      %3454 = vmatpush1.msra.mxu0 %v3428
      %3455 = vmatprep.subr.mxu0 0.0
      %3456 = vmatpush1.msra.mxu0 %v3429
      %3457 = vmatprep.subr.mxu0 0.0
      %3458 = vmatpush1.msra.mxu0 %v3430
      %3459 = vmatprep.subr.mxu0 0.0
      %3460 = vmatpush1.msra.mxu0 %v3431
      %3461 = vmatprep.subr.mxu0 0.0
      %3462 = vmatpush1.msra.mxu0 %v3432
      %3463 = vmatprep.subr.mxu0 0.0
      %3464 = vmatpush1.msra.mxu0 %v3433
      %3465 = vmatprep.subr.mxu0 0.0
      %3466 = vmatpush1.msra.mxu0 %v3434
      %3467 = vmatprep.subr.mxu0 0.0
      %3468 = vmatpush1.msra.mxu0 0.0
      %3469 = vmatprep.subr.mxu0 0.0
      %3470 = vmatpush1.msra.mxu0 0.0
      %3471 = vmatprep.subr.mxu0 0.0
      %3472 = vmatpush1.msra.mxu0 0.0
      %3473 = vmatprep.subr.mxu0 0.0
      %3474 = vmatpush1.msra.mxu0 0.0
      %3475 = vmatprep.subr.mxu0 0.0
      %3476 = vmatpush1.msra.mxu0 0.0
      %3477 = vmatprep.subr.mxu0 0.0
      %3478 = vmatpush1.msra.mxu0 0.0
      %3479 = vmatprep.subr.mxu0 0.0
      %3480 = vmatpush1.msra.mxu0 0.0
      %3481 = vmatprep.subr.mxu0 0.0
      %3482 = vmatpush1.msra.mxu0 0.0
      %3483 = vmatprep.subr.mxu0 0.0
      %3484 = vmatpush1.msra.mxu0 0.0
      %3485 = vmatprep.subr.mxu0 0.0
      %3486 = vmatpush1.msra.mxu0 0.0
      %3487 = vmatprep.subr.mxu0 0.0
      %3488 = vmatpush1.msra.mxu0 0.0
      %3489 = vmatprep.subr.mxu0 0.0
      %3490 = vmatpush1.msra.mxu0 0.0
      %3491 = vmatprep.subr.mxu0 0.0
      %3492 = vmatpush1.msra.mxu0 0.0
      %3493 = vmatprep.subr.mxu0 0.0
      %3494 = vmatpush1.msra.mxu0 0.0
      %3495 = vmatprep.subr.mxu0 0.0
      %3496 = vmatpush1.msra.mxu0 0.0
      %3497 = vmatprep.subr.mxu0 0.0
      %3498 = vmatpush1.msra.mxu0 0.0
      %3499 = vmatprep.mubr.f32.mxu0 0.0
      %3500 = vmatmul.mubr.f32.gmra.mrb[0].mxu0 %v3386
      %v3501 = vpop.f32.mrb[0].mxu0
      %v3502 = vadd.f32 0.0, %v3501
      %v3503 = vpop.f32.mrb[0].mxu0
      %3504 = vmatprep.mubr.f32.mxu0 0.0
      %3505 = vmatmul.mubr.f32.gmra.mrb[0].mxu0 %v3387
      %v3506 = vpop.f32.mrb[0].mxu0
      %v3507 = vadd.f32 0.0, %v3506
      %v3508 = vpop.f32.mrb[0].mxu0
      %3509 = vmatprep.mubr.f32.mxu0 0.0
      %3510 = vmatmul.mubr.f32.gmra.mrb[0].mxu0 %v3388
      %v3511 = vpop.f32.mrb[0].mxu0
      %v3512 = vadd.f32 0.0, %v3511
      %v3513 = vpop.f32.mrb[0].mxu0
      %3514 = vmatprep.mubr.f32.mxu0 0.0
      %3515 = vmatmul.mubr.f32.gmra.mrb[0].mxu0 %v3389
      %v3516 = vpop.f32.mrb[0].mxu0
      %v3517 = vadd.f32 0.0, %v3516
      %v3518 = vpop.f32.mrb[0].mxu0
      %3519 = vmatprep.mubr.f32.mxu0 0.0
      %3520 = vmatmul.mubr.f32.gmra.mrb[0].mxu0 %v3390
      %v3521 = vpop.f32.mrb[0].mxu0
      %v3522 = vadd.f32 0.0, %v3521
      %v3523 = vpop.f32.mrb[0].mxu0
      %3524 = vmatprep.mubr.f32.mxu0 0.0
      %3525 = vmatmul.mubr.f32.gmra.mrb[0].mxu0 %v3391
      %v3526 = vpop.f32.mrb[0].mxu0
      %v3527 = vadd.f32 0.0, %v3526
      %v3528 = vpop.f32.mrb[0].mxu0
      %3529 = vmatprep.mubr.f32.mxu0 0.0
      %3530 = vmatmul.mubr.f32.gmra.mrb[0].mxu0 %v3392
      %v3531 = vpop.f32.mrb[0].mxu0
      %v3532 = vadd.f32 0.0, %v3531
      %v3533 = vpop.f32.mrb[0].mxu0
      %3534 = vmatprep.mubr.f32.mxu0 0.0
      %3535 = vmatmul.mubr.f32.gmra.mrb[0].mxu0 %v3393
      %v3536 = vpop.f32.mrb[0].mxu0
      %v3537 = vadd.f32 0.0, %v3536
      %v3538 = vpop.f32.mrb[0].mxu0
      %3539 = vdwg.mxu0
      %v3540 = vrcp.pop %v3410
      %v3541 = vrcp.pop %v3411
      %v3542 = vrcp.pop %v3412
      %v3543 = vrcp.pop %v3413
      %v3544 = vrcp.pop %v3414
      %v3545 = vrcp.pop %v3415
      %v3546 = vrcp.pop %v3416
      %v3547 = vrcp.pop %v3417
      %v3548 = vmul.f32 %v3502, %v3540
      %v3549 = vmul.f32 %v3507, %v3541
      %v3550 = vmul.f32 %v3512, %v3542
      %v3551 = vmul.f32 %v3517, %v3543
      %v3552 = vmul.f32 %v3522, %v3544
      %v3553 = vmul.f32 %v3527, %v3545
      %v3554 = vmul.f32 %v3532, %v3546
      %v3555 = vmul.f32 %v3537, %v3547
      %v3557 = vcombine.high %v508, %v508
      %v3559 = vunpack.c.l.s4 1966171168
      %v3560 = vunpack.c.0.s8 %v3559
      %v3561 = vlaneseq
      %v3562 = vshrl.u32 %v3561, 7
      %v3563 = vsub.s32 %v3560, %v3562
      %v3564 = vrot.slane %v508, %v3563
      %v3566 = vunpack.c.l.s4 1966171168
      %v3567 = vunpack.c.0.s8 %v3566
      %v3568 = vlaneseq
      %v3569 = vshrl.u32 %v3568, 7
      %v3570 = vsub.s32 %v3567, %v3569
      %v3571 = vrot.slane %v3557, %v3570
      %v3572 = vcombine.high %v3564, %v3564
      %v3573 = vcombine.high %v3571, %v3571
      %v3575 = vunpack.c.l.s4 1966171168
      %v3576 = vunpack.c.0.s8 %v3575
      %v3577 = vlaneseq
      %v3578 = vshrl.u32 %v3577, 7
      %v3579 = vsub.s32 %v3576, %v3578
      %v3580 = vrot.slane %v3564, %v3579
      %v3582 = vunpack.c.l.s4 1966171168
      %v3583 = vunpack.c.0.s8 %v3582
      %v3584 = vlaneseq
      %v3585 = vshrl.u32 %v3584, 7
      %v3586 = vsub.s32 %v3583, %v3585
      %v3587 = vrot.slane %v3571, %v3586
      %v3589 = vunpack.c.l.s4 1966171168
      %v3590 = vunpack.c.0.s8 %v3589
      %v3591 = vlaneseq
      %v3592 = vshrl.u32 %v3591, 7
      %v3593 = vsub.s32 %v3590, %v3592
      %v3594 = vrot.slane %v3572, %v3593
      %v3596 = vunpack.c.l.s4 1966171168
      %v3597 = vunpack.c.0.s8 %v3596
      %v3598 = vlaneseq
      %v3599 = vshrl.u32 %v3598, 7
      %v3600 = vsub.s32 %v3597, %v3599
      %v3601 = vrot.slane %v3573, %v3600
      %v3602 = vcombine.high %v3580, %v3580
      %v3603 = vcombine.high %v3587, %v3587
      %v3604 = vcombine.high %v3594, %v3594
      %v3605 = vcombine.high %v3601, %v3601
      %v3606 = vlaneseq
      %v3607 = vshrl.u32 %v3606, 7
      %v3608 = vsub.s32 0, %v3607
      %v3609 = vrot.slane %v3580, %v3608
      %v3610 = vlaneseq
      %v3611 = vshrl.u32 %v3610, 7
      %v3612 = vsub.s32 0, %v3611
      %v3613 = vrot.slane %v3594, %v3612
      %v3614 = vlaneseq
      %v3615 = vshrl.u32 %v3614, 7
      %v3616 = vsub.s32 0, %v3615
      %v3617 = vrot.slane %v3602, %v3616
      %v3618 = vlaneseq
      %v3619 = vshrl.u32 %v3618, 7
      %v3620 = vsub.s32 0, %v3619
      %v3621 = vrot.slane %v3604, %v3620
      %v3622 = vlaneseq
      %v3623 = vshrl.u32 %v3622, 7
      %v3624 = vsub.s32 0, %v3623
      %v3625 = vrot.slane %v3587, %v3624
      %v3626 = vlaneseq
      %v3627 = vshrl.u32 %v3626, 7
      %v3628 = vsub.s32 0, %v3627
      %v3629 = vrot.slane %v3601, %v3628
      %v3630 = vlaneseq
      %v3631 = vshrl.u32 %v3630, 7
      %v3632 = vsub.s32 0, %v3631
      %v3633 = vrot.slane %v3603, %v3632
      %v3634 = vlaneseq
      %v3635 = vshrl.u32 %v3634, 7
      %v3636 = vsub.s32 0, %v3635
      %v3637 = vrot.slane %v3605, %v3636
      %v3646 = vld [vmem:[%s4] sm:$0xff]
      %v3647 = vld [vmem:[%s4 + $0x8] sm:$0xff]
      %v3648 = vld [vmem:[%s4 + $0x10] sm:$0xff]
      %v3649 = vld [vmem:[%s4 + $0x18] sm:$0xff]
      %v3651 = vsel %vm429, %v2019, 0
      %v3654 = vsel %vm429, %v2020, 0
      %v3657 = vsel %vm429, %v2021, 0
      %v3660 = vsel %vm429, %v2022, 0
      %v3663 = vsel %vm429, %v2023, 0
      %v3666 = vsel %vm429, %v2024, 0
      %v3669 = vsel %vm429, %v2025, 0
      %v3672 = vsel %vm429, %v2026, 0
      %v3675 = vsel %vm429, %v3548, 0
      %v3678 = vsel %vm429, %v3549, 0
      %v3681 = vsel %vm429, %v3550, 0
      %v3684 = vsel %vm429, %v3551, 0
      %v3687 = vsel %vm429, %v3552, 0
      %v3690 = vsel %vm429, %v3553, 0
      %v3693 = vsel %vm429, %v3554, 0
      %v3696 = vsel %vm429, %v3555, 0
      %3698 = vmatprep.subr.mxu0 0.0
      %3699 = vmatpush1.msra.mxu0 %v3646
      %3700 = vmatprep.subr.mxu0 0.0
      %3701 = vmatpush1.msra.mxu0 %v3647
      %3702 = vmatprep.subr.mxu0 0.0
      %3703 = vmatpush1.msra.mxu0 %v3648
      %3704 = vmatprep.subr.mxu0 0.0
      %3705 = vmatpush1.msra.mxu0 %v3649
      %3706 = vmatprep.subr.mxu0 0.0
      %3707 = vmatpush1.msra.mxu0 0.0
      %3708 = vmatprep.subr.mxu0 0.0
      %3709 = vmatpush1.msra.mxu0 0.0
      %3710 = vmatprep.subr.mxu0 0.0
      %3711 = vmatpush1.msra.mxu0 0.0
      %3712 = vmatprep.subr.mxu0 0.0
      %3713 = vmatpush1.msra.mxu0 0.0
      %3714 = vmatprep.subr.mxu0 0.0
      %3715 = vmatpush1.msra.mxu0 0.0
      %3716 = vmatprep.subr.mxu0 0.0
      %3717 = vmatpush1.msra.mxu0 0.0
      %3718 = vmatprep.subr.mxu0 0.0
      %3719 = vmatpush1.msra.mxu0 0.0
      %3720 = vmatprep.subr.mxu0 0.0
      %3721 = vmatpush1.msra.mxu0 0.0
      %3722 = vmatprep.subr.mxu0 0.0
      %3723 = vmatpush1.msra.mxu0 0.0
      %3724 = vmatprep.subr.mxu0 0.0
      %3725 = vmatpush1.msra.mxu0 0.0
      %3726 = vmatprep.subr.mxu0 0.0
      %3727 = vmatpush1.msra.mxu0 0.0
      %3728 = vmatprep.subr.mxu0 0.0
      %3729 = vmatpush1.msra.mxu0 0.0
      %3730 = vmatprep.subr.mxu0 0.0
      %3731 = vmatpush1.msra.mxu0 0.0
      %3732 = vmatprep.subr.mxu0 0.0
      %3733 = vmatpush1.msra.mxu0 0.0
      %3734 = vmatprep.subr.mxu0 0.0
      %3735 = vmatpush1.msra.mxu0 0.0
      %3736 = vmatprep.subr.mxu0 0.0
      %3737 = vmatpush1.msra.mxu0 0.0
      %3738 = vmatprep.subr.mxu0 0.0
      %3739 = vmatpush1.msra.mxu0 0.0
      %3740 = vmatprep.subr.mxu0 0.0
      %3741 = vmatpush1.msra.mxu0 0.0
      %3742 = vmatprep.subr.mxu0 0.0
      %3743 = vmatpush1.msra.mxu0 0.0
      %3744 = vmatprep.subr.mxu0 0.0
      %3745 = vmatpush1.msra.mxu0 0.0
      %3746 = vmatprep.subr.mxu0 0.0
      %3747 = vmatpush1.msra.mxu0 0.0
      %3748 = vmatprep.subr.mxu0 0.0
      %3749 = vmatpush1.msra.mxu0 0.0
      %3750 = vmatprep.subr.mxu0 0.0
      %3751 = vmatpush1.msra.mxu0 0.0
      %3752 = vmatprep.subr.mxu0 0.0
      %3753 = vmatpush1.msra.mxu0 0.0
      %3754 = vmatprep.subr.mxu0 0.0
      %3755 = vmatpush1.msra.mxu0 0.0
      %3756 = vmatprep.subr.mxu0 0.0
      %3757 = vmatpush1.msra.mxu0 0.0
      %3758 = vmatprep.subr.mxu0 0.0
      %3759 = vmatpush1.msra.mxu0 0.0
      %3760 = vmatprep.subr.mxu0 0.0
      %3761 = vmatpush1.msra.mxu0 0.0
      %3762 = vmatprep.mubr.f32.mxu0 0.0
      %3763 = vmatmul.mubr.f32.gmra.mrb[0].mxu0 %v3651
      %v3764 = vpop.f32.mrb[0].mxu0
      %v3765 = vadd.f32 %v2080, %v3764
      %v3766 = vpop.f32.mrb[0].mxu0
      %3767 = vmatprep.mubr.f32.mxu0 0.0
      %3768 = vmatmul.mubr.f32.gmra.mrb[0].mxu0 %v3654
      %v3769 = vpop.f32.mrb[0].mxu0
      %v3770 = vadd.f32 %v2084, %v3769
      %v3771 = vpop.f32.mrb[0].mxu0
      %3772 = vmatprep.mubr.f32.mxu0 0.0
      %3773 = vmatmul.mubr.f32.gmra.mrb[0].mxu0 %v3657
      %v3774 = vpop.f32.mrb[0].mxu0
      %v3775 = vadd.f32 %v2088, %v3774
      %v3776 = vpop.f32.mrb[0].mxu0
      %3777 = vmatprep.mubr.f32.mxu0 0.0
      %3778 = vmatmul.mubr.f32.gmra.mrb[0].mxu0 %v3660
      %v3779 = vpop.f32.mrb[0].mxu0
      %v3780 = vadd.f32 %v2092, %v3779
      %v3781 = vpop.f32.mrb[0].mxu0
      %3782 = vmatprep.mubr.f32.mxu0 0.0
      %3783 = vmatmul.mubr.f32.gmra.mrb[0].mxu0 %v3663
      %v3784 = vpop.f32.mrb[0].mxu0
      %v3785 = vadd.f32 %v2096, %v3784
      %v3786 = vpop.f32.mrb[0].mxu0
      %3787 = vmatprep.mubr.f32.mxu0 0.0
      %3788 = vmatmul.mubr.f32.gmra.mrb[0].mxu0 %v3666
      %v3789 = vpop.f32.mrb[0].mxu0
      %v3790 = vadd.f32 %v2100, %v3789
      %v3791 = vpop.f32.mrb[0].mxu0
      %3792 = vmatprep.mubr.f32.mxu0 0.0
      %3793 = vmatmul.mubr.f32.gmra.mrb[0].mxu0 %v3669
      %v3794 = vpop.f32.mrb[0].mxu0
      %v3795 = vadd.f32 %v2104, %v3794
      %v3796 = vpop.f32.mrb[0].mxu0
      %3797 = vmatprep.mubr.f32.mxu0 0.0
      %3798 = vmatmul.mubr.f32.gmra.mrb[0].mxu0 %v3672
      %v3799 = vpop.f32.mrb[0].mxu0
      %v3800 = vadd.f32 %v2108, %v3799
      %v3801 = vpop.f32.mrb[0].mxu0
      %3802 = vmatprep.mubr.f32.mxu0 0.0
      %3803 = vmatmul.mubr.f32.gmra.mrb[0].mxu0 %v3675
      %v3804 = vpop.f32.mrb[0].mxu0
      %v3805 = vadd.f32 %v3609, %v3804
      %v3806 = vpop.f32.mrb[0].mxu0
      %3807 = vmatprep.mubr.f32.mxu0 0.0
      %3808 = vmatmul.mubr.f32.gmra.mrb[0].mxu0 %v3678
      %v3809 = vpop.f32.mrb[0].mxu0
      %v3810 = vadd.f32 %v3613, %v3809
      %v3811 = vpop.f32.mrb[0].mxu0
      %3812 = vmatprep.mubr.f32.mxu0 0.0
      %3813 = vmatmul.mubr.f32.gmra.mrb[0].mxu0 %v3681
      %v3814 = vpop.f32.mrb[0].mxu0
      %v3815 = vadd.f32 %v3617, %v3814
      %v3816 = vpop.f32.mrb[0].mxu0
      %3817 = vmatprep.mubr.f32.mxu0 0.0
      %3818 = vmatmul.mubr.f32.gmra.mrb[0].mxu0 %v3684
      %v3819 = vpop.f32.mrb[0].mxu0
      %v3820 = vadd.f32 %v3621, %v3819
      %v3821 = vpop.f32.mrb[0].mxu0
      %3822 = vmatprep.mubr.f32.mxu0 0.0
      %3823 = vmatmul.mubr.f32.gmra.mrb[0].mxu0 %v3687
      %v3824 = vpop.f32.mrb[0].mxu0
      %v3825 = vadd.f32 %v3625, %v3824
      %v3826 = vpop.f32.mrb[0].mxu0
      %3827 = vmatprep.mubr.f32.mxu0 0.0
      %3828 = vmatmul.mubr.f32.gmra.mrb[0].mxu0 %v3690
      %v3829 = vpop.f32.mrb[0].mxu0
      %v3830 = vadd.f32 %v3629, %v3829
      %v3831 = vpop.f32.mrb[0].mxu0
      %3832 = vmatprep.mubr.f32.mxu0 0.0
      %3833 = vmatmul.mubr.f32.gmra.mrb[0].mxu0 %v3693
      %v3834 = vpop.f32.mrb[0].mxu0
      %v3835 = vadd.f32 %v3633, %v3834
      %v3836 = vpop.f32.mrb[0].mxu0
      %3837 = vmatprep.mubr.f32.mxu0 0.0
      %3838 = vmatmul.mubr.f32.gmra.mrb[0].mxu0 %v3696
      %v3839 = vpop.f32.mrb[0].mxu0
      %v3840 = vadd.f32 %v3637, %v3839
      %v3841 = vpop.f32.mrb[0].mxu0
      %3842 = vdwg.mxu0
      %v3843 = vtanh.pop %v3765
      %v3844 = vtanh.pop %v3770
      %v3845 = vtanh.pop %v3775
      %v3846 = vtanh.pop %v3780
      %v3847 = vtanh.pop %v3785
      %v3848 = vtanh.pop %v3790
      %v3849 = vtanh.pop %v3795
      %v3850 = vtanh.pop %v3800
      %v3851 = vtanh.pop %v3805
      %v3852 = vtanh.pop %v3810
      %v3853 = vtanh.pop %v3815
      %v3854 = vtanh.pop %v3820
      %v3855 = vtanh.pop %v3825
      %v3856 = vtanh.pop %v3830
      %v3857 = vtanh.pop %v3835
      %v3858 = vtanh.pop %v3840
      %v3859 = vld [vmem:[%s6] sm:$0xff]
      %v3860 = vld [vmem:[%s6 + $0x8] sm:$0xff]
      %v3861 = vld [vmem:[%s6 + $0x10] sm:$0xff]
      %v3862 = vld [vmem:[%s6 + $0x18] sm:$0xff]
      %3863 = vmatprep.subr.mxu0 0.0
      %3864 = vmatpush1.msra.mxu0 %v3859
      %3865 = vmatprep.subr.mxu0 0.0
      %3866 = vmatpush1.msra.mxu0 %v3860
      %3867 = vmatprep.subr.mxu0 0.0
      %3868 = vmatpush1.msra.mxu0 %v3861
      %3869 = vmatprep.subr.mxu0 0.0
      %3870 = vmatpush1.msra.mxu0 %v3862
      %3871 = vmatprep.subr.mxu0 0.0
      %3872 = vmatpush1.msra.mxu0 0.0
      %3873 = vmatprep.subr.mxu0 0.0
      %3874 = vmatpush1.msra.mxu0 0.0
      %3875 = vmatprep.subr.mxu0 0.0
      %3876 = vmatpush1.msra.mxu0 0.0
      %3877 = vmatprep.subr.mxu0 0.0
      %3878 = vmatpush1.msra.mxu0 0.0
      %3879 = vmatprep.subr.mxu0 0.0
      %3880 = vmatpush1.msra.mxu0 0.0
      %3881 = vmatprep.subr.mxu0 0.0
      %3882 = vmatpush1.msra.mxu0 0.0
      %3883 = vmatprep.subr.mxu0 0.0
      %3884 = vmatpush1.msra.mxu0 0.0
      %3885 = vmatprep.subr.mxu0 0.0
      %3886 = vmatpush1.msra.mxu0 0.0
      %3887 = vmatprep.subr.mxu0 0.0
      %3888 = vmatpush1.msra.mxu0 0.0
      %3889 = vmatprep.subr.mxu0 0.0
      %3890 = vmatpush1.msra.mxu0 0.0
      %3891 = vmatprep.subr.mxu0 0.0
      %3892 = vmatpush1.msra.mxu0 0.0
      %3893 = vmatprep.subr.mxu0 0.0
      %3894 = vmatpush1.msra.mxu0 0.0
      %3895 = vmatprep.subr.mxu0 0.0
      %3896 = vmatpush1.msra.mxu0 0.0
      %3897 = vmatprep.subr.mxu0 0.0
      %3898 = vmatpush1.msra.mxu0 0.0
      %3899 = vmatprep.subr.mxu0 0.0
      %3900 = vmatpush1.msra.mxu0 0.0
      %3901 = vmatprep.subr.mxu0 0.0
      %3902 = vmatpush1.msra.mxu0 0.0
      %3903 = vmatprep.subr.mxu0 0.0
      %3904 = vmatpush1.msra.mxu0 0.0
      %3905 = vmatprep.subr.mxu0 0.0
      %3906 = vmatpush1.msra.mxu0 0.0
      %3907 = vmatprep.subr.mxu0 0.0
      %3908 = vmatpush1.msra.mxu0 0.0
      %3909 = vmatprep.subr.mxu0 0.0
      %3910 = vmatpush1.msra.mxu0 0.0
      %3911 = vmatprep.subr.mxu0 0.0
      %3912 = vmatpush1.msra.mxu0 0.0
      %3913 = vmatprep.subr.mxu0 0.0
      %3914 = vmatpush1.msra.mxu0 0.0
      %3915 = vmatprep.subr.mxu0 0.0
      %3916 = vmatpush1.msra.mxu0 0.0
      %3917 = vmatprep.subr.mxu0 0.0
      %3918 = vmatpush1.msra.mxu0 0.0
      %3919 = vmatprep.subr.mxu0 0.0
      %3920 = vmatpush1.msra.mxu0 0.0
      %3921 = vmatprep.subr.mxu0 0.0
      %3922 = vmatpush1.msra.mxu0 0.0
      %3923 = vmatprep.subr.mxu0 0.0
      %3924 = vmatpush1.msra.mxu0 0.0
      %3925 = vmatprep.subr.mxu0 0.0
      %3926 = vmatpush1.msra.mxu0 0.0
      %3927 = vmatprep.mubr.f32.mxu0 0.0
      %3928 = vmatmul.mubr.f32.gmra.mrb[0].mxu0 %v3651
      %v3929 = vpop.f32.mrb[0].mxu0
      %v3930 = vadd.f32 %v582, %v3929
      %v3931 = vpop.f32.mrb[0].mxu0
      %3932 = vmatprep.mubr.f32.mxu0 0.0
      %3933 = vmatmul.mubr.f32.gmra.mrb[0].mxu0 %v3654
      %v3934 = vpop.f32.mrb[0].mxu0
      %v3935 = vadd.f32 %v582, %v3934
      %v3936 = vpop.f32.mrb[0].mxu0
      %3937 = vmatprep.mubr.f32.mxu0 0.0
      %3938 = vmatmul.mubr.f32.gmra.mrb[0].mxu0 %v3657
      %v3939 = vpop.f32.mrb[0].mxu0
      %v3940 = vadd.f32 %v582, %v3939
      %v3941 = vpop.f32.mrb[0].mxu0
      %3942 = vmatprep.mubr.f32.mxu0 0.0
      %3943 = vmatmul.mubr.f32.gmra.mrb[0].mxu0 %v3660
      %v3944 = vpop.f32.mrb[0].mxu0
      %v3945 = vadd.f32 %v582, %v3944
      %v3946 = vpop.f32.mrb[0].mxu0
      %3947 = vmatprep.mubr.f32.mxu0 0.0
      %3948 = vmatmul.mubr.f32.gmra.mrb[0].mxu0 %v3663
      %v3949 = vpop.f32.mrb[0].mxu0
      %v3950 = vadd.f32 %v582, %v3949
      %v3951 = vpop.f32.mrb[0].mxu0
      %3952 = vmatprep.mubr.f32.mxu0 0.0
      %3953 = vmatmul.mubr.f32.gmra.mrb[0].mxu0 %v3666
      %v3954 = vpop.f32.mrb[0].mxu0
      %v3955 = vadd.f32 %v582, %v3954
      %v3956 = vpop.f32.mrb[0].mxu0
      %3957 = vmatprep.mubr.f32.mxu0 0.0
      %3958 = vmatmul.mubr.f32.gmra.mrb[0].mxu0 %v3669
      %v3959 = vpop.f32.mrb[0].mxu0
      %v3960 = vadd.f32 %v582, %v3959
      %v3961 = vpop.f32.mrb[0].mxu0
      %3962 = vmatprep.mubr.f32.mxu0 0.0
      %3963 = vmatmul.mubr.f32.gmra.mrb[0].mxu0 %v3672
      %v3964 = vpop.f32.mrb[0].mxu0
      %v3965 = vadd.f32 %v582, %v3964
      %v3966 = vpop.f32.mrb[0].mxu0
      %3967 = vmatprep.mubr.f32.mxu0 0.0
      %3968 = vmatmul.mubr.f32.gmra.mrb[0].mxu0 %v3675
      %v3969 = vpop.f32.mrb[0].mxu0
      %v3970 = vadd.f32 %v587, %v3969
      %v3971 = vpop.f32.mrb[0].mxu0
      %3972 = vmatprep.mubr.f32.mxu0 0.0
      %3973 = vmatmul.mubr.f32.gmra.mrb[0].mxu0 %v3678
      %v3974 = vpop.f32.mrb[0].mxu0
      %v3975 = vadd.f32 %v587, %v3974
      %v3976 = vpop.f32.mrb[0].mxu0
      %3977 = vmatprep.mubr.f32.mxu0 0.0
      %3978 = vmatmul.mubr.f32.gmra.mrb[0].mxu0 %v3681
      %v3979 = vpop.f32.mrb[0].mxu0
      %v3980 = vadd.f32 %v587, %v3979
      %v3981 = vpop.f32.mrb[0].mxu0
      %3982 = vmatprep.mubr.f32.mxu0 0.0
      %3983 = vmatmul.mubr.f32.gmra.mrb[0].mxu0 %v3684
      %v3984 = vpop.f32.mrb[0].mxu0
      %v3985 = vadd.f32 %v587, %v3984
      %v3986 = vpop.f32.mrb[0].mxu0
      %3987 = vmatprep.mubr.f32.mxu0 0.0
      %3988 = vmatmul.mubr.f32.gmra.mrb[0].mxu0 %v3687
      %v3989 = vpop.f32.mrb[0].mxu0
      %v3990 = vadd.f32 %v587, %v3989
      %v3991 = vpop.f32.mrb[0].mxu0
      %3992 = vmatprep.mubr.f32.mxu0 0.0
      %3993 = vmatmul.mubr.f32.gmra.mrb[0].mxu0 %v3690
      %v3994 = vpop.f32.mrb[0].mxu0
      %v3995 = vadd.f32 %v587, %v3994
      %v3996 = vpop.f32.mrb[0].mxu0
      %3997 = vmatprep.mubr.f32.mxu0 0.0
      %3998 = vmatmul.mubr.f32.gmra.mrb[0].mxu0 %v3693
      %v3999 = vpop.f32.mrb[0].mxu0
      %v4000 = vadd.f32 %v587, %v3999
      %v4001 = vpop.f32.mrb[0].mxu0
      %4002 = vmatprep.mubr.f32.mxu0 0.0
      %4003 = vmatmul.mubr.f32.gmra.mrb[0].mxu0 %v3696
      %v4004 = vpop.f32.mrb[0].mxu0
      %v4005 = vadd.f32 %v587, %v4004
      %v4006 = vpop.f32.mrb[0].mxu0
      %4007 = vdwg.mxu0
      %v4008 = vtanh.pop %v3930
      %v4009 = vtanh.pop %v3935
      %v4010 = vtanh.pop %v3940
      %v4011 = vtanh.pop %v3945
      %v4012 = vtanh.pop %v3950
      %v4013 = vtanh.pop %v3955
      %v4014 = vtanh.pop %v3960
      %v4015 = vtanh.pop %v3965
      %v4016 = vtanh.pop %v3970
      %v4017 = vtanh.pop %v3975
      %v4018 = vtanh.pop %v3980
      %v4019 = vtanh.pop %v3985
      %v4020 = vtanh.pop %v3990
      %v4021 = vtanh.pop %v3995
      %v4022 = vtanh.pop %v4000
      %v4023 = vtanh.pop %v4005
      %v4024 = vld [vmem:[%s413] sm:$0xff]
      %v4025 = vld [vmem:[%s413 + $0x8] sm:$0xff]
      %v4026 = vld [vmem:[%s413 + $0x10] sm:$0xff]
      %v4027 = vld [vmem:[%s413 + $0x18] sm:$0xff]
      %v4028 = vld [vmem:[%s413 + $0x20] sm:$0xff]
      %v4029 = vld [vmem:[%s413 + $0x28] sm:$0xff]
      %v4030 = vld [vmem:[%s413 + $0x30] sm:$0xff]
      %v4031 = vld [vmem:[%s413 + $0x38] sm:$0xff]
      %v4032 = vld [vmem:[%s413 + $0x40] sm:$0xff]
      %v4033 = vld [vmem:[%s413 + $0x48] sm:$0xff]
      %v4034 = vld [vmem:[%s418] sm:$0xff]
      %v4035 = vld [vmem:[%s418 + $0x8] sm:$0xff]
      %v4036 = vld [vmem:[%s418 + $0x10] sm:$0xff]
      %v4037 = vld [vmem:[%s418 + $0x18] sm:$0xff]
      %v4038 = vld [vmem:[%s418 + $0x20] sm:$0xff]
      %v4039 = vld [vmem:[%s418 + $0x28] sm:$0xff]
      %v4040 = vld [vmem:[%s418 + $0x30] sm:$0xff]
      %v4041 = vld [vmem:[%s418 + $0x38] sm:$0xff]
      %v4042 = vld [vmem:[%s418 + $0x40] sm:$0xff]
      %v4043 = vld [vmem:[%s418 + $0x48] sm:$0xff]
      %v4045 = vsel %vm429, %v4034, 0
      %v4048 = vsel %vm429, %v4035, 0
      %v4051 = vsel %vm429, %v4036, 0
      %v4054 = vsel %vm429, %v4037, 0
      %v4057 = vsel %vm429, %v4038, 0
      %v4060 = vsel %vm429, %v4039, 0
      %v4063 = vsel %vm429, %v4040, 0
      %v4066 = vsel %vm429, %v4041, 0
      %v4069 = vsel %vm429, %v4042, 0
      %v4072 = vsel %vm429, %v4043, 0
      %v4075 = vsel %vm429, %v4008, 0
      %v4078 = vsel %vm429, %v4009, 0
      %v4081 = vsel %vm429, %v4010, 0
      %v4084 = vsel %vm429, %v4011, 0
      %v4087 = vsel %vm429, %v4012, 0
      %v4090 = vsel %vm429, %v4013, 0
      %v4093 = vsel %vm429, %v4014, 0
      %v4096 = vsel %vm429, %v4015, 0
      %v4099 = vsel %vm429, %v4016, 0
      %v4102 = vsel %vm429, %v4017, 0
      %v4105 = vsel %vm429, %v4018, 0
      %v4108 = vsel %vm429, %v4019, 0
      %v4111 = vsel %vm429, %v4020, 0
      %v4114 = vsel %vm429, %v4021, 0
      %v4117 = vsel %vm429, %v4022, 0
      %v4120 = vsel %vm429, %v4023, 0
      %4122 = vmatprep.subr.mxu0 0.0
      %4123 = vmatpush1.xpose.msra.mxu0 %v4075
      %4124 = vmatprep.subr.mxu0 0.0
      %4125 = vmatpush1.xpose.msra.mxu0 %v4078
      %4126 = vmatprep.subr.mxu0 0.0
      %4127 = vmatpush1.xpose.msra.mxu0 %v4081
      %4128 = vmatprep.subr.mxu0 0.0
      %4129 = vmatpush1.xpose.msra.mxu0 %v4084
      %4130 = vmatprep.subr.mxu0 0.0
      %4131 = vmatpush1.xpose.msra.mxu0 %v4087
      %4132 = vmatprep.subr.mxu0 0.0
      %4133 = vmatpush1.xpose.msra.mxu0 %v4090
      %4134 = vmatprep.subr.mxu0 0.0
      %4135 = vmatpush1.xpose.msra.mxu0 %v4093
      %4136 = vmatprep.subr.mxu0 0.0
      %4137 = vmatpush1.xpose.msra.mxu0 %v4096
      %4138 = vmatprep.subr.mxu0 0.0
      %4139 = vmatpush1.xpose.msra.mxu0 %v4099
      %4140 = vmatprep.subr.mxu0 0.0
      %4141 = vmatpush1.xpose.msra.mxu0 %v4102
      %4142 = vmatprep.subr.mxu0 0.0
      %4143 = vmatpush1.xpose.msra.mxu0 %v4105
      %4144 = vmatprep.subr.mxu0 0.0
      %4145 = vmatpush1.xpose.msra.mxu0 %v4108
      %4146 = vmatprep.subr.mxu0 0.0
      %4147 = vmatpush1.xpose.msra.mxu0 %v4111
      %4148 = vmatprep.subr.mxu0 0.0
      %4149 = vmatpush1.xpose.msra.mxu0 %v4114
      %4150 = vmatprep.subr.mxu0 0.0
      %4151 = vmatpush1.xpose.msra.mxu0 %v4117
      %4152 = vmatprep.subr.mxu0 0.0
      %4153 = vmatpush1.xpose.msra.mxu0 %v4120
      %4154 = vmatprep.subr.mxu0 0.0
      %4155 = vmatpush1.xpose.msra.mxu0 0.0
      %4156 = vmatprep.subr.mxu0 0.0
      %4157 = vmatpush1.xpose.msra.mxu0 0.0
      %4158 = vmatprep.subr.mxu0 0.0
      %4159 = vmatpush1.xpose.msra.mxu0 0.0
      %4160 = vmatprep.subr.mxu0 0.0
      %4161 = vmatpush1.xpose.msra.mxu0 0.0
      %4162 = vmatprep.subr.mxu0 0.0
      %4163 = vmatpush1.xpose.msra.mxu0 0.0
      %4164 = vmatprep.subr.mxu0 0.0
      %4165 = vmatpush1.xpose.msra.mxu0 0.0
      %4166 = vmatprep.subr.mxu0 0.0
      %4167 = vmatpush1.xpose.msra.mxu0 0.0
      %4168 = vmatprep.subr.mxu0 0.0
      %4169 = vmatpush1.xpose.msra.mxu0 0.0
      %4170 = vmatprep.subr.mxu0 0.0
      %4171 = vmatpush1.xpose.msra.mxu0 0.0
      %4172 = vmatprep.subr.mxu0 0.0
      %4173 = vmatpush1.xpose.msra.mxu0 0.0
      %4174 = vmatprep.subr.mxu0 0.0
      %4175 = vmatpush1.xpose.msra.mxu0 0.0
      %4176 = vmatprep.subr.mxu0 0.0
      %4177 = vmatpush1.xpose.msra.mxu0 0.0
      %4178 = vmatprep.subr.mxu0 0.0
      %4179 = vmatpush1.xpose.msra.mxu0 0.0
      %4180 = vmatprep.subr.mxu0 0.0
      %4181 = vmatpush1.xpose.msra.mxu0 0.0
      %4182 = vmatprep.subr.mxu0 0.0
      %4183 = vmatpush1.xpose.msra.mxu0 0.0
      %4184 = vmatprep.subr.mxu0 0.0
      %4185 = vmatpush1.xpose.msra.mxu0 0.0
      %4186 = vmatprep.mubr.f32.mxu0 0.0
      %4187 = vmatmul.mubr.f32.gmra.mrb[0].mxu0 %v4045
      %v4188 = vpop.f32.mrb[0].mxu0
      %v4189 = vadd.f32 0.0, %v4188
      %v4190 = vpop.f32.mrb[0].mxu0
      %4191 = vmatprep.mubr.f32.mxu0 0.0
      %4192 = vmatmul.mubr.f32.gmra.mrb[0].mxu0 %v4048
      %v4193 = vpop.f32.mrb[0].mxu0
      %v4194 = vadd.f32 0.0, %v4193
      %v4195 = vpop.f32.mrb[0].mxu0
      %4196 = vmatprep.mubr.f32.mxu0 0.0
      %4197 = vmatmul.mubr.f32.gmra.mrb[0].mxu0 %v4051
      %v4198 = vpop.f32.mrb[0].mxu0
      %v4199 = vadd.f32 0.0, %v4198
      %v4200 = vpop.f32.mrb[0].mxu0
      %4201 = vmatprep.mubr.f32.mxu0 0.0
      %4202 = vmatmul.mubr.f32.gmra.mrb[0].mxu0 %v4054
      %v4203 = vpop.f32.mrb[0].mxu0
      %v4204 = vadd.f32 0.0, %v4203
      %v4205 = vpop.f32.mrb[0].mxu0
      %4206 = vmatprep.mubr.f32.mxu0 0.0
      %4207 = vmatmul.mubr.f32.gmra.mrb[0].mxu0 %v4057
      %v4208 = vpop.f32.mrb[0].mxu0
      %v4209 = vadd.f32 0.0, %v4208
      %v4210 = vpop.f32.mrb[0].mxu0
      %4211 = vmatprep.mubr.f32.mxu0 0.0
      %4212 = vmatmul.mubr.f32.gmra.mrb[0].mxu0 %v4060
      %v4213 = vpop.f32.mrb[0].mxu0
      %v4214 = vadd.f32 0.0, %v4213
      %v4215 = vpop.f32.mrb[0].mxu0
      %4216 = vmatprep.mubr.f32.mxu0 0.0
      %4217 = vmatmul.mubr.f32.gmra.mrb[0].mxu0 %v4063
      %v4218 = vpop.f32.mrb[0].mxu0
      %v4219 = vadd.f32 0.0, %v4218
      %v4220 = vpop.f32.mrb[0].mxu0
      %4221 = vmatprep.mubr.f32.mxu0 0.0
      %4222 = vmatmul.mubr.f32.gmra.mrb[0].mxu0 %v4066
      %v4223 = vpop.f32.mrb[0].mxu0
      %v4224 = vadd.f32 0.0, %v4223
      %v4225 = vpop.f32.mrb[0].mxu0
      %4226 = vmatprep.mubr.f32.mxu0 0.0
      %4227 = vmatmul.mubr.f32.gmra.mrb[0].mxu0 %v4069
      %v4228 = vpop.f32.mrb[0].mxu0
      %v4229 = vadd.f32 0.0, %v4228
      %v4230 = vpop.f32.mrb[0].mxu0
      %4231 = vmatprep.mubr.f32.mxu0 0.0
      %4232 = vmatmul.mubr.f32.gmra.mrb[0].mxu0 %v4072
      %v4233 = vpop.f32.mrb[0].mxu0
      %v4234 = vadd.f32 0.0, %v4233
      %v4235 = vpop.f32.mrb[0].mxu0
      %4236 = vdwg.mxu0
      %v4238 = vsel %vm429, %v4024, 0
      %v4241 = vsel %vm429, %v4025, 0
      %v4244 = vsel %vm429, %v4026, 0
      %v4247 = vsel %vm429, %v4027, 0
      %v4250 = vsel %vm429, %v4028, 0
      %v4253 = vsel %vm429, %v4029, 0
      %v4256 = vsel %vm429, %v4030, 0
      %v4259 = vsel %vm429, %v4031, 0
      %v4262 = vsel %vm429, %v4032, 0
      %v4265 = vsel %vm429, %v4033, 0
      %v4268 = vsel %vm429, %v3843, 0
      %v4271 = vsel %vm429, %v3844, 0
      %v4274 = vsel %vm429, %v3845, 0
      %v4277 = vsel %vm429, %v3846, 0
      %v4280 = vsel %vm429, %v3847, 0
      %v4283 = vsel %vm429, %v3848, 0
      %v4286 = vsel %vm429, %v3849, 0
      %v4289 = vsel %vm429, %v3850, 0
      %v4292 = vsel %vm429, %v3851, 0
      %v4295 = vsel %vm429, %v3852, 0
      %v4298 = vsel %vm429, %v3853, 0
      %v4301 = vsel %vm429, %v3854, 0
      %v4304 = vsel %vm429, %v3855, 0
      %v4307 = vsel %vm429, %v3856, 0
      %v4310 = vsel %vm429, %v3857, 0
      %v4313 = vsel %vm429, %v3858, 0
      %4315 = vmatprep.subr.mxu0 0.0
      %4316 = vmatpush1.xpose.msra.mxu0 %v4268
      %4317 = vmatprep.subr.mxu0 0.0
      %4318 = vmatpush1.xpose.msra.mxu0 %v4271
      %4319 = vmatprep.subr.mxu0 0.0
      %4320 = vmatpush1.xpose.msra.mxu0 %v4274
      %4321 = vmatprep.subr.mxu0 0.0
      %4322 = vmatpush1.xpose.msra.mxu0 %v4277
      %4323 = vmatprep.subr.mxu0 0.0
      %4324 = vmatpush1.xpose.msra.mxu0 %v4280
      %4325 = vmatprep.subr.mxu0 0.0
      %4326 = vmatpush1.xpose.msra.mxu0 %v4283
      %4327 = vmatprep.subr.mxu0 0.0
      %4328 = vmatpush1.xpose.msra.mxu0 %v4286
      %4329 = vmatprep.subr.mxu0 0.0
      %4330 = vmatpush1.xpose.msra.mxu0 %v4289
      %4331 = vmatprep.subr.mxu0 0.0
      %4332 = vmatpush1.xpose.msra.mxu0 %v4292
      %4333 = vmatprep.subr.mxu0 0.0
      %4334 = vmatpush1.xpose.msra.mxu0 %v4295
      %4335 = vmatprep.subr.mxu0 0.0
      %4336 = vmatpush1.xpose.msra.mxu0 %v4298
      %4337 = vmatprep.subr.mxu0 0.0
      %4338 = vmatpush1.xpose.msra.mxu0 %v4301
      %4339 = vmatprep.subr.mxu0 0.0
      %4340 = vmatpush1.xpose.msra.mxu0 %v4304
      %4341 = vmatprep.subr.mxu0 0.0
      %4342 = vmatpush1.xpose.msra.mxu0 %v4307
      %4343 = vmatprep.subr.mxu0 0.0
      %4344 = vmatpush1.xpose.msra.mxu0 %v4310
      %4345 = vmatprep.subr.mxu0 0.0
      %4346 = vmatpush1.xpose.msra.mxu0 %v4313
      %4347 = vmatprep.subr.mxu0 0.0
      %4348 = vmatpush1.xpose.msra.mxu0 0.0
      %4349 = vmatprep.subr.mxu0 0.0
      %4350 = vmatpush1.xpose.msra.mxu0 0.0
      %4351 = vmatprep.subr.mxu0 0.0
      %4352 = vmatpush1.xpose.msra.mxu0 0.0
      %4353 = vmatprep.subr.mxu0 0.0
      %4354 = vmatpush1.xpose.msra.mxu0 0.0
      %4355 = vmatprep.subr.mxu0 0.0
      %4356 = vmatpush1.xpose.msra.mxu0 0.0
      %4357 = vmatprep.subr.mxu0 0.0
      %4358 = vmatpush1.xpose.msra.mxu0 0.0
      %4359 = vmatprep.subr.mxu0 0.0
      %4360 = vmatpush1.xpose.msra.mxu0 0.0
      %4361 = vmatprep.subr.mxu0 0.0
      %4362 = vmatpush1.xpose.msra.mxu0 0.0
      %4363 = vmatprep.subr.mxu0 0.0
      %4364 = vmatpush1.xpose.msra.mxu0 0.0
      %4365 = vmatprep.subr.mxu0 0.0
      %4366 = vmatpush1.xpose.msra.mxu0 0.0
      %4367 = vmatprep.subr.mxu0 0.0
      %4368 = vmatpush1.xpose.msra.mxu0 0.0
      %4369 = vmatprep.subr.mxu0 0.0
      %4370 = vmatpush1.xpose.msra.mxu0 0.0
      %4371 = vmatprep.subr.mxu0 0.0
      %4372 = vmatpush1.xpose.msra.mxu0 0.0
      %4373 = vmatprep.subr.mxu0 0.0
      %4374 = vmatpush1.xpose.msra.mxu0 0.0
      %4375 = vmatprep.subr.mxu0 0.0
      %4376 = vmatpush1.xpose.msra.mxu0 0.0
      %4377 = vmatprep.subr.mxu0 0.0
      %4378 = vmatpush1.xpose.msra.mxu0 0.0
      %4379 = vmatprep.mubr.f32.mxu0 0.0
      %4380 = vmatmul.mubr.f32.gmra.mrb[0].mxu0 %v4238
      %v4381 = vpop.f32.mrb[0].mxu0
      %v4382 = vadd.f32 %v4189, %v4381
      %v4383 = vpop.f32.mrb[0].mxu0
      %4384 = vmatprep.mubr.f32.mxu0 0.0
      %4385 = vmatmul.mubr.f32.gmra.mrb[0].mxu0 %v4241
      %v4386 = vpop.f32.mrb[0].mxu0
      %v4387 = vadd.f32 %v4194, %v4386
      %v4388 = vpop.f32.mrb[0].mxu0
      %4389 = vmatprep.mubr.f32.mxu0 0.0
      %4390 = vmatmul.mubr.f32.gmra.mrb[0].mxu0 %v4244
      %v4391 = vpop.f32.mrb[0].mxu0
      %v4392 = vadd.f32 %v4199, %v4391
      %v4393 = vpop.f32.mrb[0].mxu0
      %4394 = vmatprep.mubr.f32.mxu0 0.0
      %4395 = vmatmul.mubr.f32.gmra.mrb[0].mxu0 %v4247
      %v4396 = vpop.f32.mrb[0].mxu0
      %v4397 = vadd.f32 %v4204, %v4396
      %v4398 = vpop.f32.mrb[0].mxu0
      %4399 = vmatprep.mubr.f32.mxu0 0.0
      %4400 = vmatmul.mubr.f32.gmra.mrb[0].mxu0 %v4250
      %v4401 = vpop.f32.mrb[0].mxu0
      %v4402 = vadd.f32 %v4209, %v4401
      %v4403 = vpop.f32.mrb[0].mxu0
      %4404 = vmatprep.mubr.f32.mxu0 0.0
      %4405 = vmatmul.mubr.f32.gmra.mrb[0].mxu0 %v4253
      %v4406 = vpop.f32.mrb[0].mxu0
      %v4407 = vadd.f32 %v4214, %v4406
      %v4408 = vpop.f32.mrb[0].mxu0
      %4409 = vmatprep.mubr.f32.mxu0 0.0
      %4410 = vmatmul.mubr.f32.gmra.mrb[0].mxu0 %v4256
      %v4411 = vpop.f32.mrb[0].mxu0
      %v4412 = vadd.f32 %v4219, %v4411
      %v4413 = vpop.f32.mrb[0].mxu0
      %4414 = vmatprep.mubr.f32.mxu0 0.0
      %4415 = vmatmul.mubr.f32.gmra.mrb[0].mxu0 %v4259
      %v4416 = vpop.f32.mrb[0].mxu0
      %v4417 = vadd.f32 %v4224, %v4416
      %v4418 = vpop.f32.mrb[0].mxu0
      %4419 = vmatprep.mubr.f32.mxu0 0.0
      %4420 = vmatmul.mubr.f32.gmra.mrb[0].mxu0 %v4262
      %v4421 = vpop.f32.mrb[0].mxu0
      %v4422 = vadd.f32 %v4229, %v4421
      %v4423 = vpop.f32.mrb[0].mxu0
      %4424 = vmatprep.mubr.f32.mxu0 0.0
      %4425 = vmatmul.mubr.f32.gmra.mrb[0].mxu0 %v4265
      %v4426 = vpop.f32.mrb[0].mxu0
      %v4427 = vadd.f32 %v4234, %v4426
      %v4428 = vpop.f32.mrb[0].mxu0
      %4429 = vdwg.mxu0
      %v4430 = vmax.f32 %v4382, %v4387
      %v4431 = vrot.slane %v4430, 4
      %v4432 = vmax.f32 %v4430, %v4431
      %v4433 = vrot.slane %v4432, 2
      %v4434 = vmax.f32 %v4432, %v4433
      %v4435 = vrot.slane %v4434, 1
      %v4436 = vmax.f32 %v4434, %v4435
      %v4437 = vmax.f32 %v4392, %v4397
      %v4438 = vrot.slane %v4437, 4
      %v4439 = vmax.f32 %v4437, %v4438
      %v4440 = vrot.slane %v4439, 2
      %v4441 = vmax.f32 %v4439, %v4440
      %v4442 = vrot.slane %v4441, 1
      %v4443 = vmax.f32 %v4441, %v4442
      %v4444 = vmax.f32 %v4402, %v4407
      %v4445 = vrot.slane %v4444, 4
      %v4446 = vmax.f32 %v4444, %v4445
      %v4447 = vrot.slane %v4446, 2
      %v4448 = vmax.f32 %v4446, %v4447
      %v4449 = vrot.slane %v4448, 1
      %v4450 = vmax.f32 %v4448, %v4449
      %v4451 = vmax.f32 %v4412, %v4417
      %v4452 = vrot.slane %v4451, 4
      %v4453 = vmax.f32 %v4451, %v4452
      %v4454 = vrot.slane %v4453, 2
      %v4455 = vmax.f32 %v4453, %v4454
      %v4456 = vrot.slane %v4455, 1
      %v4457 = vmax.f32 %v4455, %v4456
      %v4458 = vmax.f32 %v4422, %v4427
      %v4459 = vrot.slane %v4458, 4
      %v4460 = vmax.f32 %v4458, %v4459
      %v4461 = vrot.slane %v4460, 2
      %v4462 = vmax.f32 %v4460, %v4461
      %v4463 = vrot.slane %v4462, 1
      %v4464 = vmax.f32 %v4462, %v4463
      %vm4470 = vcmask 1041409
      %v4471 = vsel %vm4470, %v4443, %v4436
      %vm4472 = vcmask 1042434
      %v4473 = vsel %vm4472, %v4450, %v4471
      %vm4474 = vcmask 1043459
      %v4475 = vsel %vm4474, %v4457, %v4473
      %vm4476 = vcmask 1044484
      %v4477 = vsel %vm4476, %v4464, %v4475
      %4479 = vst [vmem:[%s422] sm:$0x1f] %v4477
      %p4480 = scmp.lt.s32.totalorder %s20, 1
      %s4481 = scalar_select %p4480, %s20, 1
      %s4482 = smul.addr %s4481, 8
      %s4483 = scalar_lea.vmem %s9, %s4482
      // Predicated region
      $region57: #{tpu_custom_call.1} parent=55 // pred_check
        %p4484 = pneg %p252
      $region58: #{tpu_custom_call.1} parent=55 // pred_check_branch
        %4486 = sbr.rel (%p4484) target = $region60
      $region59: #{tpu_custom_call.1} parent=55 // pred_region
        _
      $region60: #{tpu_custom_call.1} parent=55 // pred_fallthru
        _
    $region56: #{tpu_custom_call.1} parent=5 // pred_fallthru
      _
    %p4487 = scmp.le.s32.totalorder 2, %s15
    // Predicated region
    $region61: #{tpu_custom_call.1} parent=5 // pred_check
      %p4488 = pneg %p4487
    $region62: #{tpu_custom_call.1} parent=5 // pred_check_branch
      %4490 = sbr.rel (%p4488) target = $region64
    $region63: #{tpu_custom_call.1} parent=5 // pred_region
      %s4491 = ssub.s32 %s15, 2
      // Predicated region
      $region65: #{tpu_custom_call.1} parent=63 // pred_check
        %p4492 = pneg %p258
      $region66: #{tpu_custom_call.1} parent=63 // pred_check_branch
        %4494 = sbr.rel (%p4492) target = $region68
      $region67: #{tpu_custom_call.1} parent=63 // pred_region
        %p4495 = scmp.lt.s32.totalorder %s21, 1
        %s4496 = scalar_select %p4495, %s21, 1
        %s4497 = smul.addr %s4496, 8
        %s4498 = scalar_lea.vmem %s9, %s4497
      $region68: #{tpu_custom_call.1} parent=63 // pred_fallthru
        _
    $region64: #{tpu_custom_call.1} parent=5 // pred_fallthru
      _
  $region6: #{tpu_custom_call.1} parent=0 // loop_footer
    %s19 = sadd.s32 1, %s15
  $region7: #{tpu_custom_call.1} parent=0 // loop_footer_branch
    %14 = sbr.rel target = $region3
  $region8: #{tpu_custom_call.1} parent=0 // loop_exit
    _

</llo_original>
